<compile_context>
chip_gen: v7x
topology: tpu7x:2x2x1
jax: 0.10.0
libtpu: 0.0.40
codegen_flags: <defaults>
</compile_context>

<pallas_src>
import math
import jax
import jax.numpy as jnp
from jax.experimental import pallas as pl
from jax.experimental.pallas import tpu as pltpu

D_MODEL = 32
NHEAD = 4
HEAD_DIM = D_MODEL // NHEAD
DIM_EXPAND = 4
HIDDEN = D_MODEL * DIM_EXPAND
EPS = 1e-5


# ---------------- in-kernel helpers ------------------------------------------
def _ln2d(x, w, b):
    """LayerNorm over the last dim of a 2-D [rows, E] activation."""
    mu = jnp.mean(x, axis=-1, keepdims=True)
    xc = x - mu
    var = jnp.mean(xc * xc, axis=-1, keepdims=True)
    return xc * jax.lax.rsqrt(var + EPS) * w + b


def _attn_core(q3, k3, v3, w_out_t):
    """q3: [B,Lq,E], k3/v3: [B,Lk,E] (already projected, biases included).

    Computes concat_heads(softmax(q k^T / sqrt(d)) v) @ W_out^T as [B*Lq, E].
    The per-head lane concat is folded into the output projection:
        concat_h(o_h) @ W_out^T == sum_h o_h @ W_out^T[h*d:(h+1)*d, :]
    so no lane-assembly (XLU concat) is ever emitted.
    """
    B, Lq, _ = q3.shape
    scale = 1.0 / math.sqrt(HEAD_DIM)
    out = None
    for h in range(NHEAD):
        sl = slice(h * HEAD_DIM, (h + 1) * HEAD_DIM)
        qh = q3[:, :, sl] * scale
        kh = k3[:, :, sl]
        vh = v3[:, :, sl]
        s = jnp.einsum('bld,bsd->bls', qh, kh,
                       preferred_element_type=jnp.float32)
        s = s - jnp.max(s, axis=-1, keepdims=True)
        p = jnp.exp(s)
        p = p * pl.reciprocal(jnp.sum(p, axis=-1, keepdims=True), approx=True)
        oh = jnp.einsum('bls,bsd->bld', p, vh,
                        preferred_element_type=jnp.float32)
        contrib = jnp.dot(oh.reshape(B * Lq, HEAD_DIM), w_out_t[sl, :],
                          preferred_element_type=jnp.float32)
        out = contrib if out is None else out + contrib
    return out


# ------------------------------- Pallas kernel --------------------------------
def decoder_layer_kernel(
    tgt_ref, mem_ref, qpos_ref, pos_ref,
    w_sa_qk_ref, w_sa_v_ref, w_sa_out_ref,
    w_ca_q_ref, w_ca_k_ref, w_ca_v_ref, w_ca_out_ref,
    w1_ref, w2_ref,
    b_sa_qk_ref, b1_ref, vecs_ref,
    out_ref,
):
    B, L, E = tgt_ref.shape
    _, S, _ = mem_ref.shape
    BL, BS = B * L, B * S

    tgt3 = tgt_ref[...]
    qpos3 = qpos_ref[...]
    mem3 = mem_ref[...]
    pos3 = pos_ref[...]

    # Packed E-sized vectors (see wrapper for the layout).
    vecs = vecs_ref[...]
    b_sa_v, b_sa_out = vecs[0], vecs[1]
    b_ca_q, b_ca_k, b_ca_v, b_ca_out = vecs[2], vecs[3], vecs[4], vecs[5]
    b_mlp2 = vecs[6]
    ln1_w, ln1_b = vecs[7], vecs[8]
    ln2_w, ln2_b = vecs[9], vecs[10]
    ln3_w, ln3_b = vecs[11], vecs[12]

    qpos2 = qpos3.reshape(BL, E)
    tgt2 = tgt3.reshape(BL, E)

    # --- self attention: q = k = tgt + query_pos, value = tgt ---
    x2 = tgt2 + qpos2
    qk = (jnp.dot(x2, w_sa_qk_ref[...], preferred_element_type=jnp.float32)
          + b_sa_qk_ref[0])                                    # [BL, 2E] fused q|k
    v = (jnp.dot(tgt2, w_sa_v_ref[...], preferred_element_type=jnp.float32)
         + b_sa_v)                                             # [BL, E]
    sa = _attn_core(qk[:, :E].reshape(B, L, E),
                    qk[:, E:].reshape(B, L, E),
                    v.reshape(B, L, E),
                    w_sa_out_ref[...]) + b_sa_out
    tgt2 = _ln2d(tgt2 + sa, ln1_w, ln1_b)

    # --- cross attention: q = tgt + query_pos, k = memory + pos, v = memory ---
    mem2 = mem3.reshape(BS, E)
    kin2 = mem2 + pos3.reshape(BS, E)
    q = (jnp.dot(tgt2 + qpos2, w_ca_q_ref[...],
                 preferred_element_type=jnp.float32) + b_ca_q)
    k = (jnp.dot(kin2, w_ca_k_ref[...],
                 preferred_element_type=jnp.float32) + b_ca_k)
    v = (jnp.dot(mem2, w_ca_v_ref[...],
                 preferred_element_type=jnp.float32) + b_ca_v)
    ca = _attn_core(q.reshape(B, L, E),
                    k.reshape(B, S, E),
                    v.reshape(B, S, E),
                    w_ca_out_ref[...]) + b_ca_out
    tgt2 = _ln2d(tgt2 + ca, ln2_w, ln2_b)

    # --- MLP (lane-dense hidden dim = 128) ---
    h = jnp.maximum(
        jnp.dot(tgt2, w1_ref[...], preferred_element_type=jnp.float32)
        + b1_ref[0], 0.0)
    m = jnp.dot(h, w2_ref[...], preferred_element_type=jnp.float32) + b_mlp2
    tgt2 = _ln2d(tgt2 + m, ln3_w, ln3_b)

    out_ref[...] = tgt2


# ------------------------------- wrapper ---------------------------------------
def decoder_layer(tgt, memory, query_pos, pos, params):
    B, L, E = tgt.shape
    _, S, _ = memory.shape
    assert E == D_MODEL

    # ---- wrapper-side weight layout work (free: plain XLA ops, done once) ----
    sa_in_w = params["sa_in_w"]                      # [3E, E] (PyTorch layout)
    sa_in_b = params["sa_in_b"].reshape(-1)          # [3E]
    ca_in_w = params["ca_in_w"]
    ca_in_b = params["ca_in_b"].reshape(-1)

    w_sa_qk = sa_in_w[: 2 * E].T                     # [E, 2E]  fused q|k proj
    b_sa_qk = sa_in_b[: 2 * E].reshape(1, 2 * E)     # [1, 2E]
    w_sa_v = sa_in_w[2 * E:].T                       # [E, E]
    w_sa_out = params["sa_out_w"].T                  # [E, E]

    w_ca_q = ca_in_w[:E].T                           # [E, E]
    w_ca_k = ca_in_w[E:2 * E].T
    w_ca_v = ca_in_w[2 * E:].T
    w_ca_out = params["ca_out_w"].T

    w1 = params["mlp_w1"].T                          # [E, H]
    b1 = params["mlp_b1"].reshape(1, -1)             # [1, H]
    w2 = params["mlp_w2"].T                          # [H, E]

    # All E-sized bias / LayerNorm vectors packed into a single [13, E] input.
    vecs = jnp.stack([
        sa_in_b[2 * E:],                   # 0: b_sa_v
        params["sa_out_b"].reshape(-1),    # 1: b_sa_out
        ca_in_b[:E],                       # 2: b_ca_q
        ca_in_b[E:2 * E],                  # 3: b_ca_k
        ca_in_b[2 * E:],                   # 4: b_ca_v
        params["ca_out_b"].reshape(-1),    # 5: b_ca_out
        params["mlp_b2"].reshape(-1),      # 6: b_mlp2
        params["ln1_w"].reshape(-1),       # 7
        params["ln1_b"].reshape(-1),       # 8
        params["ln2_w"].reshape(-1),       # 9
        params["ln2_b"].reshape(-1),       # 10
        params["ln3_w"].reshape(-1),       # 11
        params["ln3_b"].reshape(-1),       # 12
    ], axis=0).astype(jnp.float32)                    # [13, E]

    inputs = [tgt, memory, query_pos, pos,
              w_sa_qk, w_sa_v, w_sa_out,
              w_ca_q, w_ca_k, w_ca_v, w_ca_out,
              w1, w2, b_sa_qk, b1, vecs]

    # Single invocation (no grid): everything fits VMEM trivially; each input
    # is DMA'd exactly once and the batch is folded into matmul rows.
    out = pl.pallas_call(
        decoder_layer_kernel,
        out_shape=jax.ShapeDtypeStruct((B * L, E), jnp.float32),
        in_specs=[pl.BlockSpec(memory_space=pltpu.MemorySpace.VMEM)
                  for _ in inputs],
        out_specs=pl.BlockSpec(memory_space=pltpu.MemorySpace.VMEM),
    )(*inputs)
    return out.reshape(B, L, E)


# ------------------------------- pure-JAX reference ----------------------------
def _layer_norm(x, w, b):
    mu = jnp.mean(x, axis=-1, keepdims=True)
    var = jnp.mean((x - mu) ** 2, axis=-1, keepdims=True)
    return (x - mu) * jax.lax.rsqrt(var + EPS) * w + b


def _mha(q_in, k_in, v_in, in_w, in_b, out_w, out_b):
    """PyTorch-style nn.MultiheadAttention (single example, [L,E] inputs)."""
    E = D_MODEL
    wq, wk, wv = in_w[0:E], in_w[E:2 * E], in_w[2 * E:3 * E]
    bq, bk, bv = in_b[0, 0:E], in_b[0, E:2 * E], in_b[0, 2 * E:3 * E]
    q = jnp.dot(q_in, wq.T) + bq
    k = jnp.dot(k_in, wk.T) + bk
    v = jnp.dot(v_in, wv.T) + bv
    scale = 1.0 / math.sqrt(HEAD_DIM)
    head_outs = []
    for h in range(NHEAD):
        sl = slice(h * HEAD_DIM, (h + 1) * HEAD_DIM)
        s = jnp.dot(q[:, sl] * scale, k[:, sl].T)
        s = s - jnp.max(s, axis=-1, keepdims=True)
        p = jnp.exp(s)
        p = p / jnp.sum(p, axis=-1, keepdims=True)
        head_outs.append(jnp.dot(p, v[:, sl]))
    o = jnp.concatenate(head_outs, axis=-1)
    return jnp.dot(o, out_w.T) + out_b[0]


def reference(tgt, memory, query_pos, pos, p):
    def single(t, m, qp, ps):
        qk = t + qp
        t2 = _mha(qk, qk, t, p["sa_in_w"], p["sa_in_b"], p["sa_out_w"], p["sa_out_b"])
        t = _layer_norm(t + t2, p["ln1_w"][0], p["ln1_b"][0])
        t2 = _mha(t + qp, m + ps, m, p["ca_in_w"], p["ca_in_b"], p["ca_out_w"], p["ca_out_b"])
        t = _layer_norm(t + t2, p["ln2_w"][0], p["ln2_b"][0])
        h = jnp.maximum(t @ p["mlp_w1"].T + p["mlp_b1"][0], 0.0)
        t2 = h @ p["mlp_w2"].T + p["mlp_b2"][0]
        t = _layer_norm(t + t2, p["ln3_w"][0], p["ln3_b"][0])
        return t
    return jax.vmap(single)(tgt, memory, query_pos, pos)


# ------------------------------- main -------------------------------------------
def make_params(key):
    def nrm(k, shape, scale=0.05):
        return scale * jax.random.normal(k, shape, dtype=jnp.float32)

    ks = jax.random.split(key, 16)
    E, H = D_MODEL, HIDDEN
    return {
        "sa_in_w": nrm(ks[0], (3 * E, E)),
        "sa_in_b": nrm(ks[1], (1, 3 * E)),
        "sa_out_w": nrm(ks[2], (E, E)),
        "sa_out_b": nrm(ks[3], (1, E)),
        "ca_in_w": nrm(ks[4], (3 * E, E)),
        "ca_in_b": nrm(ks[5], (1, 3 * E)),
        "ca_out_w": nrm(ks[6], (E, E)),
        "ca_out_b": nrm(ks[7], (1, E)),
        "ln1_w": jnp.ones((1, E), jnp.float32),
        "ln1_b": jnp.zeros((1, E), jnp.float32),
        "ln2_w": jnp.ones((1, E), jnp.float32),
        "ln2_b": jnp.zeros((1, E), jnp.float32),
        "ln3_w": jnp.ones((1, E), jnp.float32),
        "ln3_b": jnp.zeros((1, E), jnp.float32),
        "mlp_w1": nrm(ks[8], (H, E)),
        "mlp_b1": nrm(ks[9], (1, H)),
        "mlp_w2": nrm(ks[10], (E, H)),
        "mlp_b2": nrm(ks[11], (1, E)),
    }


if __name__ == "__main__":
    B, L, S, E = 2, 8, 16, D_MODEL   # batch, num_query, height*width, d_model
    key = jax.random.PRNGKey(0)
    k_tgt, k_mem, k_qp, k_pos, k_par = jax.random.split(key, 5)

    tgt = jax.random.normal(k_tgt, (B, L, E), dtype=jnp.float32)
    memory = jax.random.normal(k_mem, (B, S, E), dtype=jnp.float32)
    query_pos = jax.random.normal(k_qp, (B, L, E), dtype=jnp.float32)
    pos = jax.random.normal(k_pos, (B, S, E), dtype=jnp.float32)
    params = make_params(k_par)

    out = decoder_layer(tgt, memory, query_pos, pos, params)
    out = jax.block_until_ready(out)

    ref = reference(tgt, memory, query_pos, pos, params)
    assert out.shape == (B, L, E)
    # Tolerance slightly relaxed vs. the f32 reference because the kernel uses
    # the approximate EUP reciprocal for the softmax normalization.
    assert jnp.allclose(out, ref, atol=5e-3, rtol=5e-3), "mismatch vs JAX reference"
    print("KERNEL_OK")
</pallas_src>

<mosaic_0001>
module attributes {stable_mosaic.version = 11 : i64} {
  func.func @decoder_layer_kernel(%arg0: memref<2x8x32xf32, #tpu.memory_space<vmem>>, %arg1: memref<2x16x32xf32, #tpu.memory_space<vmem>>, %arg2: memref<2x8x32xf32, #tpu.memory_space<vmem>>, %arg3: memref<2x16x32xf32, #tpu.memory_space<vmem>>, %arg4: memref<32x64xf32, #tpu.memory_space<vmem>>, %arg5: memref<32x32xf32, #tpu.memory_space<vmem>>, %arg6: memref<32x32xf32, #tpu.memory_space<vmem>>, %arg7: memref<32x32xf32, #tpu.memory_space<vmem>>, %arg8: memref<32x32xf32, #tpu.memory_space<vmem>>, %arg9: memref<32x32xf32, #tpu.memory_space<vmem>>, %arg10: memref<32x32xf32, #tpu.memory_space<vmem>>, %arg11: memref<32x128xf32, #tpu.memory_space<vmem>>, %arg12: memref<128x32xf32, #tpu.memory_space<vmem>>, %arg13: memref<1x64xf32, #tpu.memory_space<vmem>>, %arg14: memref<1x128xf32, #tpu.memory_space<vmem>>, %arg15: memref<13x32xf32, #tpu.memory_space<vmem>>, %arg16: memref<16x32xf32, #tpu.memory_space<vmem>>) attributes {dimension_semantics = [], scalar_prefetch = 0 : i64, scratch_operands = 0 : i64, tpu.core_type = #tpu.core_type<tc>} {
    %c0 = arith.constant 0 : index
    %c0_0 = arith.constant 0 : index
    %c0_1 = arith.constant 0 : index
    %0 = vector.load %arg0[%c0, %c0_0, %c0_1] : memref<2x8x32xf32, #tpu.memory_space<vmem>>, vector<2x8x32xf32>
    %c0_2 = arith.constant 0 : index
    %c0_3 = arith.constant 0 : index
    %c0_4 = arith.constant 0 : index
    %1 = vector.load %arg2[%c0_2, %c0_3, %c0_4] : memref<2x8x32xf32, #tpu.memory_space<vmem>>, vector<2x8x32xf32>
    %c0_5 = arith.constant 0 : index
    %c0_6 = arith.constant 0 : index
    %c0_7 = arith.constant 0 : index
    %2 = vector.load %arg1[%c0_5, %c0_6, %c0_7] : memref<2x16x32xf32, #tpu.memory_space<vmem>>, vector<2x16x32xf32>
    %c0_8 = arith.constant 0 : index
    %c0_9 = arith.constant 0 : index
    %c0_10 = arith.constant 0 : index
    %3 = vector.load %arg3[%c0_8, %c0_9, %c0_10] : memref<2x16x32xf32, #tpu.memory_space<vmem>>, vector<2x16x32xf32>
    %c0_11 = arith.constant 0 : index
    %c0_12 = arith.constant 0 : index
    %4 = vector.load %arg15[%c0_11, %c0_12] : memref<13x32xf32, #tpu.memory_space<vmem>>, vector<13x32xf32>
    %5 = vector.extract_strided_slice %4 {offsets = [0, 0], sizes = [1, 32], strides = [1, 1]} : vector<13x32xf32> to vector<1x32xf32>
    %6 = vector.shape_cast %5 : vector<1x32xf32> to vector<32xf32>
    %7 = vector.extract_strided_slice %4 {offsets = [1, 0], sizes = [1, 32], strides = [1, 1]} : vector<13x32xf32> to vector<1x32xf32>
    %8 = vector.shape_cast %7 : vector<1x32xf32> to vector<32xf32>
    %9 = vector.extract_strided_slice %4 {offsets = [2, 0], sizes = [1, 32], strides = [1, 1]} : vector<13x32xf32> to vector<1x32xf32>
    %10 = vector.shape_cast %9 : vector<1x32xf32> to vector<32xf32>
    %11 = vector.extract_strided_slice %4 {offsets = [3, 0], sizes = [1, 32], strides = [1, 1]} : vector<13x32xf32> to vector<1x32xf32>
    %12 = vector.shape_cast %11 : vector<1x32xf32> to vector<32xf32>
    %13 = vector.extract_strided_slice %4 {offsets = [4, 0], sizes = [1, 32], strides = [1, 1]} : vector<13x32xf32> to vector<1x32xf32>
    %14 = vector.shape_cast %13 : vector<1x32xf32> to vector<32xf32>
    %15 = vector.extract_strided_slice %4 {offsets = [5, 0], sizes = [1, 32], strides = [1, 1]} : vector<13x32xf32> to vector<1x32xf32>
    %16 = vector.shape_cast %15 : vector<1x32xf32> to vector<32xf32>
    %17 = vector.extract_strided_slice %4 {offsets = [6, 0], sizes = [1, 32], strides = [1, 1]} : vector<13x32xf32> to vector<1x32xf32>
    %18 = vector.shape_cast %17 : vector<1x32xf32> to vector<32xf32>
    %19 = vector.extract_strided_slice %4 {offsets = [7, 0], sizes = [1, 32], strides = [1, 1]} : vector<13x32xf32> to vector<1x32xf32>
    %20 = vector.shape_cast %19 : vector<1x32xf32> to vector<32xf32>
    %21 = vector.extract_strided_slice %4 {offsets = [8, 0], sizes = [1, 32], strides = [1, 1]} : vector<13x32xf32> to vector<1x32xf32>
    %22 = vector.shape_cast %21 : vector<1x32xf32> to vector<32xf32>
    %23 = vector.extract_strided_slice %4 {offsets = [9, 0], sizes = [1, 32], strides = [1, 1]} : vector<13x32xf32> to vector<1x32xf32>
    %24 = vector.shape_cast %23 : vector<1x32xf32> to vector<32xf32>
    %25 = vector.extract_strided_slice %4 {offsets = [10, 0], sizes = [1, 32], strides = [1, 1]} : vector<13x32xf32> to vector<1x32xf32>
    %26 = vector.shape_cast %25 : vector<1x32xf32> to vector<32xf32>
    %27 = vector.extract_strided_slice %4 {offsets = [11, 0], sizes = [1, 32], strides = [1, 1]} : vector<13x32xf32> to vector<1x32xf32>
    %28 = vector.shape_cast %27 : vector<1x32xf32> to vector<32xf32>
    %29 = vector.extract_strided_slice %4 {offsets = [12, 0], sizes = [1, 32], strides = [1, 1]} : vector<13x32xf32> to vector<1x32xf32>
    %30 = vector.shape_cast %29 : vector<1x32xf32> to vector<32xf32>
    %31 = vector.shape_cast %1 : vector<2x8x32xf32> to vector<16x32xf32>
    %32 = vector.shape_cast %0 : vector<2x8x32xf32> to vector<16x32xf32>
    %33 = arith.addf %32, %31 : vector<16x32xf32>
    %c0_13 = arith.constant 0 : index
    %c0_14 = arith.constant 0 : index
    %34 = vector.load %arg4[%c0_13, %c0_14] : memref<32x64xf32, #tpu.memory_space<vmem>>, vector<32x64xf32>
    %cst = arith.constant dense<0.000000e+00> : vector<16x64xf32>
    %35 = tpu.matmul %33, %34, %cst {dimension_numbers = #tpu.dot_dimension_numbers<[1], [0], [0], [1], [0, 0, 1, 1], [], []>} : vector<16x32xf32>, vector<32x64xf32>, vector<16x64xf32> -> vector<16x64xf32>
    %c0_15 = arith.constant 0 : index
    %c0_16 = arith.constant 0 : index
    %36 = vector.load %arg13[%c0_15, %c0_16] : memref<1x64xf32, #tpu.memory_space<vmem>>, vector<1x64xf32>
    %37 = vector.shape_cast %36 : vector<1x64xf32> to vector<64xf32>
    %38 = vector.shape_cast %37 : vector<64xf32> to vector<1x64xf32>
    %39 = vector.broadcast %38 : vector<1x64xf32> to vector<16x64xf32>
    %40 = arith.addf %35, %39 : vector<16x64xf32>
    %c0_17 = arith.constant 0 : index
    %c0_18 = arith.constant 0 : index
    %41 = vector.load %arg5[%c0_17, %c0_18] : memref<32x32xf32, #tpu.memory_space<vmem>>, vector<32x32xf32>
    %cst_19 = arith.constant dense<0.000000e+00> : vector<16x32xf32>
    %42 = tpu.matmul %32, %41, %cst_19 {dimension_numbers = #tpu.dot_dimension_numbers<[1], [0], [0], [1], [0, 0, 1, 1], [], []>} : vector<16x32xf32>, vector<32x32xf32>, vector<16x32xf32> -> vector<16x32xf32>
    %43 = vector.shape_cast %6 : vector<32xf32> to vector<1x32xf32>
    %44 = vector.broadcast %43 : vector<1x32xf32> to vector<16x32xf32>
    %45 = arith.addf %42, %44 : vector<16x32xf32>
    %46 = vector.extract_strided_slice %40 {offsets = [0, 0], sizes = [16, 32], strides = [1, 1]} : vector<16x64xf32> to vector<16x32xf32>
    %47 = vector.shape_cast %46 : vector<16x32xf32> to vector<2x8x32xf32>
    %48 = vector.extract_strided_slice %40 {offsets = [0, 32], sizes = [16, 32], strides = [1, 1]} : vector<16x64xf32> to vector<16x32xf32>
    %49 = vector.shape_cast %48 : vector<16x32xf32> to vector<2x8x32xf32>
    %50 = vector.shape_cast %45 : vector<16x32xf32> to vector<2x8x32xf32>
    %c0_20 = arith.constant 0 : index
    %c0_21 = arith.constant 0 : index
    %51 = vector.load %arg6[%c0_20, %c0_21] : memref<32x32xf32, #tpu.memory_space<vmem>>, vector<32x32xf32>
    %52 = vector.extract_strided_slice %47 {offsets = [0, 0, 0], sizes = [2, 8, 8], strides = [1, 1, 1]} : vector<2x8x32xf32> to vector<2x8x8xf32>
    %cst_22 = arith.constant 0.353553385 : f32
    %53 = vector.broadcast %cst_22 : f32 to vector<2x8x8xf32>
    %54 = arith.mulf %52, %53 : vector<2x8x8xf32>
    %55 = vector.extract_strided_slice %49 {offsets = [0, 0, 0], sizes = [2, 8, 8], strides = [1, 1, 1]} : vector<2x8x32xf32> to vector<2x8x8xf32>
    %56 = vector.extract_strided_slice %50 {offsets = [0, 0, 0], sizes = [2, 8, 8], strides = [1, 1, 1]} : vector<2x8x32xf32> to vector<2x8x8xf32>
    "tpu.trace_start"() <{level = 10 : i32, message = "bld,bsd->bls"}> : () -> ()
    %cst_23 = arith.constant dense<0.000000e+00> : vector<2x8x8xf32>
    %57 = tpu.matmul %54, %55, %cst_23 {dimension_numbers = #tpu.dot_dimension_numbers<[2], [2], [1], [1], [0, 0, 0, 1, 1, 1], [0], [0]>} : vector<2x8x8xf32>, vector<2x8x8xf32>, vector<2x8x8xf32> -> vector<2x8x8xf32>
    "tpu.trace_stop"() : () -> ()
    %cst_24 = arith.constant dense<0xFF800000> : vector<2x8xf32>
    %58 = vector.multi_reduction <maximumf>, %57, %cst_24 [2] : vector<2x8x8xf32> to vector<2x8xf32>
    %59 = vector.shape_cast %58 : vector<2x8xf32> to vector<2x8x1xf32>
    %60 = vector.broadcast %59 : vector<2x8x1xf32> to vector<2x8x8xf32>
    %61 = arith.subf %57, %60 : vector<2x8x8xf32>
    %62 = math.exp %61 : vector<2x8x8xf32>
    %cst_25 = arith.constant dense<0.000000e+00> : vector<2x8xf32>
    %63 = vector.multi_reduction <add>, %62, %cst_25 [2] : vector<2x8x8xf32> to vector<2x8xf32>
    %64 = vector.shape_cast %63 : vector<2x8xf32> to vector<2x8x1xf32>
    %65 = tpu.reciprocal %64 {approx = true} : vector<2x8x1xf32> -> vector<2x8x1xf32>
    %66 = vector.broadcast %65 : vector<2x8x1xf32> to vector<2x8x8xf32>
    %67 = arith.mulf %62, %66 : vector<2x8x8xf32>
    "tpu.trace_start"() <{level = 10 : i32, message = "bls,bsd->bld"}> : () -> ()
    %cst_26 = arith.constant dense<0.000000e+00> : vector<2x8x8xf32>
    %68 = tpu.matmul %67, %56, %cst_26 {dimension_numbers = #tpu.dot_dimension_numbers<[2], [1], [1], [2], [0, 0, 0, 1, 1, 2], [0], [0]>} : vector<2x8x8xf32>, vector<2x8x8xf32>, vector<2x8x8xf32> -> vector<2x8x8xf32>
    "tpu.trace_stop"() : () -> ()
    %69 = vector.shape_cast %68 : vector<2x8x8xf32> to vector<16x8xf32>
    %70 = vector.extract_strided_slice %51 {offsets = [0, 0], sizes = [8, 32], strides = [1, 1]} : vector<32x32xf32> to vector<8x32xf32>
    %cst_27 = arith.constant dense<0.000000e+00> : vector<16x32xf32>
    %71 = tpu.matmul %69, %70, %cst_27 {dimension_numbers = #tpu.dot_dimension_numbers<[1], [0], [0], [1], [0, 0, 1, 1], [], []>} : vector<16x8xf32>, vector<8x32xf32>, vector<16x32xf32> -> vector<16x32xf32>
    %72 = vector.extract_strided_slice %47 {offsets = [0, 0, 8], sizes = [2, 8, 8], strides = [1, 1, 1]} : vector<2x8x32xf32> to vector<2x8x8xf32>
    %cst_28 = arith.constant 0.353553385 : f32
    %73 = vector.broadcast %cst_28 : f32 to vector<2x8x8xf32>
    %74 = arith.mulf %72, %73 : vector<2x8x8xf32>
    %75 = vector.extract_strided_slice %49 {offsets = [0, 0, 8], sizes = [2, 8, 8], strides = [1, 1, 1]} : vector<2x8x32xf32> to vector<2x8x8xf32>
    %76 = vector.extract_strided_slice %50 {offsets = [0, 0, 8], sizes = [2, 8, 8], strides = [1, 1, 1]} : vector<2x8x32xf32> to vector<2x8x8xf32>
    "tpu.trace_start"() <{level = 10 : i32, message = "bld,bsd->bls"}> : () -> ()
    %cst_29 = arith.constant dense<0.000000e+00> : vector<2x8x8xf32>
    %77 = tpu.matmul %74, %75, %cst_29 {dimension_numbers = #tpu.dot_dimension_numbers<[2], [2], [1], [1], [0, 0, 0, 1, 1, 1], [0], [0]>} : vector<2x8x8xf32>, vector<2x8x8xf32>, vector<2x8x8xf32> -> vector<2x8x8xf32>
    "tpu.trace_stop"() : () -> ()
    %cst_30 = arith.constant dense<0xFF800000> : vector<2x8xf32>
    %78 = vector.multi_reduction <maximumf>, %77, %cst_30 [2] : vector<2x8x8xf32> to vector<2x8xf32>
    %79 = vector.shape_cast %78 : vector<2x8xf32> to vector<2x8x1xf32>
    %80 = vector.broadcast %79 : vector<2x8x1xf32> to vector<2x8x8xf32>
    %81 = arith.subf %77, %80 : vector<2x8x8xf32>
    %82 = math.exp %81 : vector<2x8x8xf32>
    %cst_31 = arith.constant dense<0.000000e+00> : vector<2x8xf32>
    %83 = vector.multi_reduction <add>, %82, %cst_31 [2] : vector<2x8x8xf32> to vector<2x8xf32>
    %84 = vector.shape_cast %83 : vector<2x8xf32> to vector<2x8x1xf32>
    %85 = tpu.reciprocal %84 {approx = true} : vector<2x8x1xf32> -> vector<2x8x1xf32>
    %86 = vector.broadcast %85 : vector<2x8x1xf32> to vector<2x8x8xf32>
    %87 = arith.mulf %82, %86 : vector<2x8x8xf32>
    "tpu.trace_start"() <{level = 10 : i32, message = "bls,bsd->bld"}> : () -> ()
    %cst_32 = arith.constant dense<0.000000e+00> : vector<2x8x8xf32>
    %88 = tpu.matmul %87, %76, %cst_32 {dimension_numbers = #tpu.dot_dimension_numbers<[2], [1], [1], [2], [0, 0, 0, 1, 1, 2], [0], [0]>} : vector<2x8x8xf32>, vector<2x8x8xf32>, vector<2x8x8xf32> -> vector<2x8x8xf32>
    "tpu.trace_stop"() : () -> ()
    %89 = vector.shape_cast %88 : vector<2x8x8xf32> to vector<16x8xf32>
    %90 = vector.extract_strided_slice %51 {offsets = [8, 0], sizes = [8, 32], strides = [1, 1]} : vector<32x32xf32> to vector<8x32xf32>
    %cst_33 = arith.constant dense<0.000000e+00> : vector<16x32xf32>
    %91 = tpu.matmul %89, %90, %cst_33 {dimension_numbers = #tpu.dot_dimension_numbers<[1], [0], [0], [1], [0, 0, 1, 1], [], []>} : vector<16x8xf32>, vector<8x32xf32>, vector<16x32xf32> -> vector<16x32xf32>
    %92 = arith.addf %71, %91 : vector<16x32xf32>
    %93 = vector.extract_strided_slice %47 {offsets = [0, 0, 16], sizes = [2, 8, 8], strides = [1, 1, 1]} : vector<2x8x32xf32> to vector<2x8x8xf32>
    %cst_34 = arith.constant 0.353553385 : f32
    %94 = vector.broadcast %cst_34 : f32 to vector<2x8x8xf32>
    %95 = arith.mulf %93, %94 : vector<2x8x8xf32>
    %96 = vector.extract_strided_slice %49 {offsets = [0, 0, 16], sizes = [2, 8, 8], strides = [1, 1, 1]} : vector<2x8x32xf32> to vector<2x8x8xf32>
    %97 = vector.extract_strided_slice %50 {offsets = [0, 0, 16], sizes = [2, 8, 8], strides = [1, 1, 1]} : vector<2x8x32xf32> to vector<2x8x8xf32>
    "tpu.trace_start"() <{level = 10 : i32, message = "bld,bsd->bls"}> : () -> ()
    %cst_35 = arith.constant dense<0.000000e+00> : vector<2x8x8xf32>
    %98 = tpu.matmul %95, %96, %cst_35 {dimension_numbers = #tpu.dot_dimension_numbers<[2], [2], [1], [1], [0, 0, 0, 1, 1, 1], [0], [0]>} : vector<2x8x8xf32>, vector<2x8x8xf32>, vector<2x8x8xf32> -> vector<2x8x8xf32>
    "tpu.trace_stop"() : () -> ()
    %cst_36 = arith.constant dense<0xFF800000> : vector<2x8xf32>
    %99 = vector.multi_reduction <maximumf>, %98, %cst_36 [2] : vector<2x8x8xf32> to vector<2x8xf32>
    %100 = vector.shape_cast %99 : vector<2x8xf32> to vector<2x8x1xf32>
    %101 = vector.broadcast %100 : vector<2x8x1xf32> to vector<2x8x8xf32>
    %102 = arith.subf %98, %101 : vector<2x8x8xf32>
    %103 = math.exp %102 : vector<2x8x8xf32>
    %cst_37 = arith.constant dense<0.000000e+00> : vector<2x8xf32>
    %104 = vector.multi_reduction <add>, %103, %cst_37 [2] : vector<2x8x8xf32> to vector<2x8xf32>
    %105 = vector.shape_cast %104 : vector<2x8xf32> to vector<2x8x1xf32>
    %106 = tpu.reciprocal %105 {approx = true} : vector<2x8x1xf32> -> vector<2x8x1xf32>
    %107 = vector.broadcast %106 : vector<2x8x1xf32> to vector<2x8x8xf32>
    %108 = arith.mulf %103, %107 : vector<2x8x8xf32>
    "tpu.trace_start"() <{level = 10 : i32, message = "bls,bsd->bld"}> : () -> ()
    %cst_38 = arith.constant dense<0.000000e+00> : vector<2x8x8xf32>
    %109 = tpu.matmul %108, %97, %cst_38 {dimension_numbers = #tpu.dot_dimension_numbers<[2], [1], [1], [2], [0, 0, 0, 1, 1, 2], [0], [0]>} : vector<2x8x8xf32>, vector<2x8x8xf32>, vector<2x8x8xf32> -> vector<2x8x8xf32>
    "tpu.trace_stop"() : () -> ()
    %110 = vector.shape_cast %109 : vector<2x8x8xf32> to vector<16x8xf32>
    %111 = vector.extract_strided_slice %51 {offsets = [16, 0], sizes = [8, 32], strides = [1, 1]} : vector<32x32xf32> to vector<8x32xf32>
    %cst_39 = arith.constant dense<0.000000e+00> : vector<16x32xf32>
    %112 = tpu.matmul %110, %111, %cst_39 {dimension_numbers = #tpu.dot_dimension_numbers<[1], [0], [0], [1], [0, 0, 1, 1], [], []>} : vector<16x8xf32>, vector<8x32xf32>, vector<16x32xf32> -> vector<16x32xf32>
    %113 = arith.addf %92, %112 : vector<16x32xf32>
    %114 = vector.extract_strided_slice %47 {offsets = [0, 0, 24], sizes = [2, 8, 8], strides = [1, 1, 1]} : vector<2x8x32xf32> to vector<2x8x8xf32>
    %cst_40 = arith.constant 0.353553385 : f32
    %115 = vector.broadcast %cst_40 : f32 to vector<2x8x8xf32>
    %116 = arith.mulf %114, %115 : vector<2x8x8xf32>
    %117 = vector.extract_strided_slice %49 {offsets = [0, 0, 24], sizes = [2, 8, 8], strides = [1, 1, 1]} : vector<2x8x32xf32> to vector<2x8x8xf32>
    %118 = vector.extract_strided_slice %50 {offsets = [0, 0, 24], sizes = [2, 8, 8], strides = [1, 1, 1]} : vector<2x8x32xf32> to vector<2x8x8xf32>
    "tpu.trace_start"() <{level = 10 : i32, message = "bld,bsd->bls"}> : () -> ()
    %cst_41 = arith.constant dense<0.000000e+00> : vector<2x8x8xf32>
    %119 = tpu.matmul %116, %117, %cst_41 {dimension_numbers = #tpu.dot_dimension_numbers<[2], [2], [1], [1], [0, 0, 0, 1, 1, 1], [0], [0]>} : vector<2x8x8xf32>, vector<2x8x8xf32>, vector<2x8x8xf32> -> vector<2x8x8xf32>
    "tpu.trace_stop"() : () -> ()
    %cst_42 = arith.constant dense<0xFF800000> : vector<2x8xf32>
    %120 = vector.multi_reduction <maximumf>, %119, %cst_42 [2] : vector<2x8x8xf32> to vector<2x8xf32>
    %121 = vector.shape_cast %120 : vector<2x8xf32> to vector<2x8x1xf32>
    %122 = vector.broadcast %121 : vector<2x8x1xf32> to vector<2x8x8xf32>
    %123 = arith.subf %119, %122 : vector<2x8x8xf32>
    %124 = math.exp %123 : vector<2x8x8xf32>
    %cst_43 = arith.constant dense<0.000000e+00> : vector<2x8xf32>
    %125 = vector.multi_reduction <add>, %124, %cst_43 [2] : vector<2x8x8xf32> to vector<2x8xf32>
    %126 = vector.shape_cast %125 : vector<2x8xf32> to vector<2x8x1xf32>
    %127 = tpu.reciprocal %126 {approx = true} : vector<2x8x1xf32> -> vector<2x8x1xf32>
    %128 = vector.broadcast %127 : vector<2x8x1xf32> to vector<2x8x8xf32>
    %129 = arith.mulf %124, %128 : vector<2x8x8xf32>
    "tpu.trace_start"() <{level = 10 : i32, message = "bls,bsd->bld"}> : () -> ()
    %cst_44 = arith.constant dense<0.000000e+00> : vector<2x8x8xf32>
    %130 = tpu.matmul %129, %118, %cst_44 {dimension_numbers = #tpu.dot_dimension_numbers<[2], [1], [1], [2], [0, 0, 0, 1, 1, 2], [0], [0]>} : vector<2x8x8xf32>, vector<2x8x8xf32>, vector<2x8x8xf32> -> vector<2x8x8xf32>
    "tpu.trace_stop"() : () -> ()
    %131 = vector.shape_cast %130 : vector<2x8x8xf32> to vector<16x8xf32>
    %132 = vector.extract_strided_slice %51 {offsets = [24, 0], sizes = [8, 32], strides = [1, 1]} : vector<32x32xf32> to vector<8x32xf32>
    %cst_45 = arith.constant dense<0.000000e+00> : vector<16x32xf32>
    %133 = tpu.matmul %131, %132, %cst_45 {dimension_numbers = #tpu.dot_dimension_numbers<[1], [0], [0], [1], [0, 0, 1, 1], [], []>} : vector<16x8xf32>, vector<8x32xf32>, vector<16x32xf32> -> vector<16x32xf32>
    %134 = arith.addf %113, %133 : vector<16x32xf32>
    %135 = vector.shape_cast %8 : vector<32xf32> to vector<1x32xf32>
    %136 = vector.broadcast %135 : vector<1x32xf32> to vector<16x32xf32>
    %137 = arith.addf %134, %136 : vector<16x32xf32>
    %138 = arith.addf %32, %137 : vector<16x32xf32>
    %cst_46 = arith.constant dense<0.000000e+00> : vector<16xf32>
    %139 = vector.multi_reduction <add>, %138, %cst_46 [1] : vector<16x32xf32> to vector<16xf32>
    %140 = vector.shape_cast %139 : vector<16xf32> to vector<16x1xf32>
    %cst_47 = arith.constant 3.200000e+01 : f32
    %141 = vector.broadcast %cst_47 : f32 to vector<16x1xf32>
    %142 = arith.divf %140, %141 : vector<16x1xf32>
    %143 = vector.broadcast %142 : vector<16x1xf32> to vector<16x32xf32>
    %144 = arith.subf %138, %143 : vector<16x32xf32>
    %145 = arith.mulf %144, %144 : vector<16x32xf32>
    %cst_48 = arith.constant dense<0.000000e+00> : vector<16xf32>
    %146 = vector.multi_reduction <add>, %145, %cst_48 [1] : vector<16x32xf32> to vector<16xf32>
    %147 = vector.shape_cast %146 : vector<16xf32> to vector<16x1xf32>
    %cst_49 = arith.constant 3.200000e+01 : f32
    %148 = vector.broadcast %cst_49 : f32 to vector<16x1xf32>
    %149 = arith.divf %147, %148 : vector<16x1xf32>
    %cst_50 = arith.constant 9.99999974E-6 : f32
    %150 = vector.broadcast %cst_50 : f32 to vector<16x1xf32>
    %151 = arith.addf %149, %150 : vector<16x1xf32>
    %152 = math.rsqrt %151 : vector<16x1xf32>
    %153 = vector.broadcast %152 : vector<16x1xf32> to vector<16x32xf32>
    %154 = arith.mulf %144, %153 : vector<16x32xf32>
    %155 = vector.shape_cast %20 : vector<32xf32> to vector<1x32xf32>
    %156 = vector.broadcast %155 : vector<1x32xf32> to vector<16x32xf32>
    %157 = arith.mulf %154, %156 : vector<16x32xf32>
    %158 = vector.shape_cast %22 : vector<32xf32> to vector<1x32xf32>
    %159 = vector.broadcast %158 : vector<1x32xf32> to vector<16x32xf32>
    %160 = arith.addf %157, %159 : vector<16x32xf32>
    %161 = vector.shape_cast %2 : vector<2x16x32xf32> to vector<32x32xf32>
    %162 = vector.shape_cast %3 : vector<2x16x32xf32> to vector<32x32xf32>
    %163 = arith.addf %161, %162 : vector<32x32xf32>
    %164 = arith.addf %160, %31 : vector<16x32xf32>
    %c0_51 = arith.constant 0 : index
    %c0_52 = arith.constant 0 : index
    %165 = vector.load %arg7[%c0_51, %c0_52] : memref<32x32xf32, #tpu.memory_space<vmem>>, vector<32x32xf32>
    %cst_53 = arith.constant dense<0.000000e+00> : vector<16x32xf32>
    %166 = tpu.matmul %164, %165, %cst_53 {dimension_numbers = #tpu.dot_dimension_numbers<[1], [0], [0], [1], [0, 0, 1, 1], [], []>} : vector<16x32xf32>, vector<32x32xf32>, vector<16x32xf32> -> vector<16x32xf32>
    %167 = vector.shape_cast %10 : vector<32xf32> to vector<1x32xf32>
    %168 = vector.broadcast %167 : vector<1x32xf32> to vector<16x32xf32>
    %169 = arith.addf %166, %168 : vector<16x32xf32>
    %c0_54 = arith.constant 0 : index
    %c0_55 = arith.constant 0 : index
    %170 = vector.load %arg8[%c0_54, %c0_55] : memref<32x32xf32, #tpu.memory_space<vmem>>, vector<32x32xf32>
    %cst_56 = arith.constant dense<0.000000e+00> : vector<32x32xf32>
    %171 = tpu.matmul %163, %170, %cst_56 {dimension_numbers = #tpu.dot_dimension_numbers<[1], [0], [0], [1], [0, 0, 1, 1], [], []>} : vector<32x32xf32>, vector<32x32xf32>, vector<32x32xf32> -> vector<32x32xf32>
    %172 = vector.shape_cast %12 : vector<32xf32> to vector<1x32xf32>
    %173 = vector.broadcast %172 : vector<1x32xf32> to vector<32x32xf32>
    %174 = arith.addf %171, %173 : vector<32x32xf32>
    %c0_57 = arith.constant 0 : index
    %c0_58 = arith.constant 0 : index
    %175 = vector.load %arg9[%c0_57, %c0_58] : memref<32x32xf32, #tpu.memory_space<vmem>>, vector<32x32xf32>
    %cst_59 = arith.constant dense<0.000000e+00> : vector<32x32xf32>
    %176 = tpu.matmul %161, %175, %cst_59 {dimension_numbers = #tpu.dot_dimension_numbers<[1], [0], [0], [1], [0, 0, 1, 1], [], []>} : vector<32x32xf32>, vector<32x32xf32>, vector<32x32xf32> -> vector<32x32xf32>
    %177 = vector.shape_cast %14 : vector<32xf32> to vector<1x32xf32>
    %178 = vector.broadcast %177 : vector<1x32xf32> to vector<32x32xf32>
    %179 = arith.addf %176, %178 : vector<32x32xf32>
    %180 = vector.shape_cast %169 : vector<16x32xf32> to vector<2x8x32xf32>
    %181 = vector.shape_cast %174 : vector<32x32xf32> to vector<2x16x32xf32>
    %182 = vector.shape_cast %179 : vector<32x32xf32> to vector<2x16x32xf32>
    %c0_60 = arith.constant 0 : index
    %c0_61 = arith.constant 0 : index
    %183 = vector.load %arg10[%c0_60, %c0_61] : memref<32x32xf32, #tpu.memory_space<vmem>>, vector<32x32xf32>
    %184 = vector.extract_strided_slice %180 {offsets = [0, 0, 0], sizes = [2, 8, 8], strides = [1, 1, 1]} : vector<2x8x32xf32> to vector<2x8x8xf32>
    %cst_62 = arith.constant 0.353553385 : f32
    %185 = vector.broadcast %cst_62 : f32 to vector<2x8x8xf32>
    %186 = arith.mulf %184, %185 : vector<2x8x8xf32>
    %187 = vector.extract_strided_slice %181 {offsets = [0, 0, 0], sizes = [2, 16, 8], strides = [1, 1, 1]} : vector<2x16x32xf32> to vector<2x16x8xf32>
    %188 = vector.extract_strided_slice %182 {offsets = [0, 0, 0], sizes = [2, 16, 8], strides = [1, 1, 1]} : vector<2x16x32xf32> to vector<2x16x8xf32>
    "tpu.trace_start"() <{level = 10 : i32, message = "bld,bsd->bls"}> : () -> ()
    %cst_63 = arith.constant dense<0.000000e+00> : vector<2x8x16xf32>
    %189 = tpu.matmul %186, %187, %cst_63 {dimension_numbers = #tpu.dot_dimension_numbers<[2], [2], [1], [1], [0, 0, 0, 1, 1, 1], [0], [0]>} : vector<2x8x8xf32>, vector<2x16x8xf32>, vector<2x8x16xf32> -> vector<2x8x16xf32>
    "tpu.trace_stop"() : () -> ()
    %cst_64 = arith.constant dense<0xFF800000> : vector<2x8xf32>
    %190 = vector.multi_reduction <maximumf>, %189, %cst_64 [2] : vector<2x8x16xf32> to vector<2x8xf32>
    %191 = vector.shape_cast %190 : vector<2x8xf32> to vector<2x8x1xf32>
    %192 = vector.broadcast %191 : vector<2x8x1xf32> to vector<2x8x16xf32>
    %193 = arith.subf %189, %192 : vector<2x8x16xf32>
    %194 = math.exp %193 : vector<2x8x16xf32>
    %cst_65 = arith.constant dense<0.000000e+00> : vector<2x8xf32>
    %195 = vector.multi_reduction <add>, %194, %cst_65 [2] : vector<2x8x16xf32> to vector<2x8xf32>
    %196 = vector.shape_cast %195 : vector<2x8xf32> to vector<2x8x1xf32>
    %197 = tpu.reciprocal %196 {approx = true} : vector<2x8x1xf32> -> vector<2x8x1xf32>
    %198 = vector.broadcast %197 : vector<2x8x1xf32> to vector<2x8x16xf32>
    %199 = arith.mulf %194, %198 : vector<2x8x16xf32>
    "tpu.trace_start"() <{level = 10 : i32, message = "bls,bsd->bld"}> : () -> ()
    %cst_66 = arith.constant dense<0.000000e+00> : vector<2x8x8xf32>
    %200 = tpu.matmul %199, %188, %cst_66 {dimension_numbers = #tpu.dot_dimension_numbers<[2], [1], [1], [2], [0, 0, 0, 1, 1, 2], [0], [0]>} : vector<2x8x16xf32>, vector<2x16x8xf32>, vector<2x8x8xf32> -> vector<2x8x8xf32>
    "tpu.trace_stop"() : () -> ()
    %201 = vector.shape_cast %200 : vector<2x8x8xf32> to vector<16x8xf32>
    %202 = vector.extract_strided_slice %183 {offsets = [0, 0], sizes = [8, 32], strides = [1, 1]} : vector<32x32xf32> to vector<8x32xf32>
    %cst_67 = arith.constant dense<0.000000e+00> : vector<16x32xf32>
    %203 = tpu.matmul %201, %202, %cst_67 {dimension_numbers = #tpu.dot_dimension_numbers<[1], [0], [0], [1], [0, 0, 1, 1], [], []>} : vector<16x8xf32>, vector<8x32xf32>, vector<16x32xf32> -> vector<16x32xf32>
    %204 = vector.extract_strided_slice %180 {offsets = [0, 0, 8], sizes = [2, 8, 8], strides = [1, 1, 1]} : vector<2x8x32xf32> to vector<2x8x8xf32>
    %cst_68 = arith.constant 0.353553385 : f32
    %205 = vector.broadcast %cst_68 : f32 to vector<2x8x8xf32>
    %206 = arith.mulf %204, %205 : vector<2x8x8xf32>
    %207 = vector.extract_strided_slice %181 {offsets = [0, 0, 8], sizes = [2, 16, 8], strides = [1, 1, 1]} : vector<2x16x32xf32> to vector<2x16x8xf32>
    %208 = vector.extract_strided_slice %182 {offsets = [0, 0, 8], sizes = [2, 16, 8], strides = [1, 1, 1]} : vector<2x16x32xf32> to vector<2x16x8xf32>
    "tpu.trace_start"() <{level = 10 : i32, message = "bld,bsd->bls"}> : () -> ()
    %cst_69 = arith.constant dense<0.000000e+00> : vector<2x8x16xf32>
    %209 = tpu.matmul %206, %207, %cst_69 {dimension_numbers = #tpu.dot_dimension_numbers<[2], [2], [1], [1], [0, 0, 0, 1, 1, 1], [0], [0]>} : vector<2x8x8xf32>, vector<2x16x8xf32>, vector<2x8x16xf32> -> vector<2x8x16xf32>
    "tpu.trace_stop"() : () -> ()
    %cst_70 = arith.constant dense<0xFF800000> : vector<2x8xf32>
    %210 = vector.multi_reduction <maximumf>, %209, %cst_70 [2] : vector<2x8x16xf32> to vector<2x8xf32>
    %211 = vector.shape_cast %210 : vector<2x8xf32> to vector<2x8x1xf32>
    %212 = vector.broadcast %211 : vector<2x8x1xf32> to vector<2x8x16xf32>
    %213 = arith.subf %209, %212 : vector<2x8x16xf32>
    %214 = math.exp %213 : vector<2x8x16xf32>
    %cst_71 = arith.constant dense<0.000000e+00> : vector<2x8xf32>
    %215 = vector.multi_reduction <add>, %214, %cst_71 [2] : vector<2x8x16xf32> to vector<2x8xf32>
    %216 = vector.shape_cast %215 : vector<2x8xf32> to vector<2x8x1xf32>
    %217 = tpu.reciprocal %216 {approx = true} : vector<2x8x1xf32> -> vector<2x8x1xf32>
    %218 = vector.broadcast %217 : vector<2x8x1xf32> to vector<2x8x16xf32>
    %219 = arith.mulf %214, %218 : vector<2x8x16xf32>
    "tpu.trace_start"() <{level = 10 : i32, message = "bls,bsd->bld"}> : () -> ()
    %cst_72 = arith.constant dense<0.000000e+00> : vector<2x8x8xf32>
    %220 = tpu.matmul %219, %208, %cst_72 {dimension_numbers = #tpu.dot_dimension_numbers<[2], [1], [1], [2], [0, 0, 0, 1, 1, 2], [0], [0]>} : vector<2x8x16xf32>, vector<2x16x8xf32>, vector<2x8x8xf32> -> vector<2x8x8xf32>
    "tpu.trace_stop"() : () -> ()
    %221 = vector.shape_cast %220 : vector<2x8x8xf32> to vector<16x8xf32>
    %222 = vector.extract_strided_slice %183 {offsets = [8, 0], sizes = [8, 32], strides = [1, 1]} : vector<32x32xf32> to vector<8x32xf32>
    %cst_73 = arith.constant dense<0.000000e+00> : vector<16x32xf32>
    %223 = tpu.matmul %221, %222, %cst_73 {dimension_numbers = #tpu.dot_dimension_numbers<[1], [0], [0], [1], [0, 0, 1, 1], [], []>} : vector<16x8xf32>, vector<8x32xf32>, vector<16x32xf32> -> vector<16x32xf32>
    %224 = arith.addf %203, %223 : vector<16x32xf32>
    %225 = vector.extract_strided_slice %180 {offsets = [0, 0, 16], sizes = [2, 8, 8], strides = [1, 1, 1]} : vector<2x8x32xf32> to vector<2x8x8xf32>
    %cst_74 = arith.constant 0.353553385 : f32
    %226 = vector.broadcast %cst_74 : f32 to vector<2x8x8xf32>
    %227 = arith.mulf %225, %226 : vector<2x8x8xf32>
    %228 = vector.extract_strided_slice %181 {offsets = [0, 0, 16], sizes = [2, 16, 8], strides = [1, 1, 1]} : vector<2x16x32xf32> to vector<2x16x8xf32>
    %229 = vector.extract_strided_slice %182 {offsets = [0, 0, 16], sizes = [2, 16, 8], strides = [1, 1, 1]} : vector<2x16x32xf32> to vector<2x16x8xf32>
    "tpu.trace_start"() <{level = 10 : i32, message = "bld,bsd->bls"}> : () -> ()
    %cst_75 = arith.constant dense<0.000000e+00> : vector<2x8x16xf32>
    %230 = tpu.matmul %227, %228, %cst_75 {dimension_numbers = #tpu.dot_dimension_numbers<[2], [2], [1], [1], [0, 0, 0, 1, 1, 1], [0], [0]>} : vector<2x8x8xf32>, vector<2x16x8xf32>, vector<2x8x16xf32> -> vector<2x8x16xf32>
    "tpu.trace_stop"() : () -> ()
    %cst_76 = arith.constant dense<0xFF800000> : vector<2x8xf32>
    %231 = vector.multi_reduction <maximumf>, %230, %cst_76 [2] : vector<2x8x16xf32> to vector<2x8xf32>
    %232 = vector.shape_cast %231 : vector<2x8xf32> to vector<2x8x1xf32>
    %233 = vector.broadcast %232 : vector<2x8x1xf32> to vector<2x8x16xf32>
    %234 = arith.subf %230, %233 : vector<2x8x16xf32>
    %235 = math.exp %234 : vector<2x8x16xf32>
    %cst_77 = arith.constant dense<0.000000e+00> : vector<2x8xf32>
    %236 = vector.multi_reduction <add>, %235, %cst_77 [2] : vector<2x8x16xf32> to vector<2x8xf32>
    %237 = vector.shape_cast %236 : vector<2x8xf32> to vector<2x8x1xf32>
    %238 = tpu.reciprocal %237 {approx = true} : vector<2x8x1xf32> -> vector<2x8x1xf32>
    %239 = vector.broadcast %238 : vector<2x8x1xf32> to vector<2x8x16xf32>
    %240 = arith.mulf %235, %239 : vector<2x8x16xf32>
    "tpu.trace_start"() <{level = 10 : i32, message = "bls,bsd->bld"}> : () -> ()
    %cst_78 = arith.constant dense<0.000000e+00> : vector<2x8x8xf32>
    %241 = tpu.matmul %240, %229, %cst_78 {dimension_numbers = #tpu.dot_dimension_numbers<[2], [1], [1], [2], [0, 0, 0, 1, 1, 2], [0], [0]>} : vector<2x8x16xf32>, vector<2x16x8xf32>, vector<2x8x8xf32> -> vector<2x8x8xf32>
    "tpu.trace_stop"() : () -> ()
    %242 = vector.shape_cast %241 : vector<2x8x8xf32> to vector<16x8xf32>
    %243 = vector.extract_strided_slice %183 {offsets = [16, 0], sizes = [8, 32], strides = [1, 1]} : vector<32x32xf32> to vector<8x32xf32>
    %cst_79 = arith.constant dense<0.000000e+00> : vector<16x32xf32>
    %244 = tpu.matmul %242, %243, %cst_79 {dimension_numbers = #tpu.dot_dimension_numbers<[1], [0], [0], [1], [0, 0, 1, 1], [], []>} : vector<16x8xf32>, vector<8x32xf32>, vector<16x32xf32> -> vector<16x32xf32>
    %245 = arith.addf %224, %244 : vector<16x32xf32>
    %246 = vector.extract_strided_slice %180 {offsets = [0, 0, 24], sizes = [2, 8, 8], strides = [1, 1, 1]} : vector<2x8x32xf32> to vector<2x8x8xf32>
    %cst_80 = arith.constant 0.353553385 : f32
    %247 = vector.broadcast %cst_80 : f32 to vector<2x8x8xf32>
    %248 = arith.mulf %246, %247 : vector<2x8x8xf32>
    %249 = vector.extract_strided_slice %181 {offsets = [0, 0, 24], sizes = [2, 16, 8], strides = [1, 1, 1]} : vector<2x16x32xf32> to vector<2x16x8xf32>
    %250 = vector.extract_strided_slice %182 {offsets = [0, 0, 24], sizes = [2, 16, 8], strides = [1, 1, 1]} : vector<2x16x32xf32> to vector<2x16x8xf32>
    "tpu.trace_start"() <{level = 10 : i32, message = "bld,bsd->bls"}> : () -> ()
    %cst_81 = arith.constant dense<0.000000e+00> : vector<2x8x16xf32>
    %251 = tpu.matmul %248, %249, %cst_81 {dimension_numbers = #tpu.dot_dimension_numbers<[2], [2], [1], [1], [0, 0, 0, 1, 1, 1], [0], [0]>} : vector<2x8x8xf32>, vector<2x16x8xf32>, vector<2x8x16xf32> -> vector<2x8x16xf32>
    "tpu.trace_stop"() : () -> ()
    %cst_82 = arith.constant dense<0xFF800000> : vector<2x8xf32>
    %252 = vector.multi_reduction <maximumf>, %251, %cst_82 [2] : vector<2x8x16xf32> to vector<2x8xf32>
    %253 = vector.shape_cast %252 : vector<2x8xf32> to vector<2x8x1xf32>
    %254 = vector.broadcast %253 : vector<2x8x1xf32> to vector<2x8x16xf32>
    %255 = arith.subf %251, %254 : vector<2x8x16xf32>
    %256 = math.exp %255 : vector<2x8x16xf32>
    %cst_83 = arith.constant dense<0.000000e+00> : vector<2x8xf32>
    %257 = vector.multi_reduction <add>, %256, %cst_83 [2] : vector<2x8x16xf32> to vector<2x8xf32>
    %258 = vector.shape_cast %257 : vector<2x8xf32> to vector<2x8x1xf32>
    %259 = tpu.reciprocal %258 {approx = true} : vector<2x8x1xf32> -> vector<2x8x1xf32>
    %260 = vector.broadcast %259 : vector<2x8x1xf32> to vector<2x8x16xf32>
    %261 = arith.mulf %256, %260 : vector<2x8x16xf32>
    "tpu.trace_start"() <{level = 10 : i32, message = "bls,bsd->bld"}> : () -> ()
    %cst_84 = arith.constant dense<0.000000e+00> : vector<2x8x8xf32>
    %262 = tpu.matmul %261, %250, %cst_84 {dimension_numbers = #tpu.dot_dimension_numbers<[2], [1], [1], [2], [0, 0, 0, 1, 1, 2], [0], [0]>} : vector<2x8x16xf32>, vector<2x16x8xf32>, vector<2x8x8xf32> -> vector<2x8x8xf32>
    "tpu.trace_stop"() : () -> ()
    %263 = vector.shape_cast %262 : vector<2x8x8xf32> to vector<16x8xf32>
    %264 = vector.extract_strided_slice %183 {offsets = [24, 0], sizes = [8, 32], strides = [1, 1]} : vector<32x32xf32> to vector<8x32xf32>
    %cst_85 = arith.constant dense<0.000000e+00> : vector<16x32xf32>
    %265 = tpu.matmul %263, %264, %cst_85 {dimension_numbers = #tpu.dot_dimension_numbers<[1], [0], [0], [1], [0, 0, 1, 1], [], []>} : vector<16x8xf32>, vector<8x32xf32>, vector<16x32xf32> -> vector<16x32xf32>
    %266 = arith.addf %245, %265 : vector<16x32xf32>
    %267 = vector.shape_cast %16 : vector<32xf32> to vector<1x32xf32>
    %268 = vector.broadcast %267 : vector<1x32xf32> to vector<16x32xf32>
    %269 = arith.addf %266, %268 : vector<16x32xf32>
    %270 = arith.addf %160, %269 : vector<16x32xf32>
    %cst_86 = arith.constant dense<0.000000e+00> : vector<16xf32>
    %271 = vector.multi_reduction <add>, %270, %cst_86 [1] : vector<16x32xf32> to vector<16xf32>
    %272 = vector.shape_cast %271 : vector<16xf32> to vector<16x1xf32>
    %cst_87 = arith.constant 3.200000e+01 : f32
    %273 = vector.broadcast %cst_87 : f32 to vector<16x1xf32>
    %274 = arith.divf %272, %273 : vector<16x1xf32>
    %275 = vector.broadcast %274 : vector<16x1xf32> to vector<16x32xf32>
    %276 = arith.subf %270, %275 : vector<16x32xf32>
    %277 = arith.mulf %276, %276 : vector<16x32xf32>
    %cst_88 = arith.constant dense<0.000000e+00> : vector<16xf32>
    %278 = vector.multi_reduction <add>, %277, %cst_88 [1] : vector<16x32xf32> to vector<16xf32>
    %279 = vector.shape_cast %278 : vector<16xf32> to vector<16x1xf32>
    %cst_89 = arith.constant 3.200000e+01 : f32
    %280 = vector.broadcast %cst_89 : f32 to vector<16x1xf32>
    %281 = arith.divf %279, %280 : vector<16x1xf32>
    %cst_90 = arith.constant 9.99999974E-6 : f32
    %282 = vector.broadcast %cst_90 : f32 to vector<16x1xf32>
    %283 = arith.addf %281, %282 : vector<16x1xf32>
    %284 = math.rsqrt %283 : vector<16x1xf32>
    %285 = vector.broadcast %284 : vector<16x1xf32> to vector<16x32xf32>
    %286 = arith.mulf %276, %285 : vector<16x32xf32>
    %287 = vector.shape_cast %24 : vector<32xf32> to vector<1x32xf32>
    %288 = vector.broadcast %287 : vector<1x32xf32> to vector<16x32xf32>
    %289 = arith.mulf %286, %288 : vector<16x32xf32>
    %290 = vector.shape_cast %26 : vector<32xf32> to vector<1x32xf32>
    %291 = vector.broadcast %290 : vector<1x32xf32> to vector<16x32xf32>
    %292 = arith.addf %289, %291 : vector<16x32xf32>
    %c0_91 = arith.constant 0 : index
    %c0_92 = arith.constant 0 : index
    %293 = vector.load %arg11[%c0_91, %c0_92] : memref<32x128xf32, #tpu.memory_space<vmem>>, vector<32x128xf32>
    %cst_93 = arith.constant dense<0.000000e+00> : vector<16x128xf32>
    %294 = tpu.matmul %292, %293, %cst_93 {dimension_numbers = #tpu.dot_dimension_numbers<[1], [0], [0], [1], [0, 0, 1, 1], [], []>} : vector<16x32xf32>, vector<32x128xf32>, vector<16x128xf32> -> vector<16x128xf32>
    %c0_94 = arith.constant 0 : index
    %c0_95 = arith.constant 0 : index
    %295 = vector.load %arg14[%c0_94, %c0_95] : memref<1x128xf32, #tpu.memory_space<vmem>>, vector<1x128xf32>
    %296 = vector.shape_cast %295 : vector<1x128xf32> to vector<128xf32>
    %297 = vector.shape_cast %296 : vector<128xf32> to vector<1x128xf32>
    %298 = vector.broadcast %297 : vector<1x128xf32> to vector<16x128xf32>
    %299 = arith.addf %294, %298 : vector<16x128xf32>
    %cst_96 = arith.constant 0.000000e+00 : f32
    %300 = vector.broadcast %cst_96 : f32 to vector<16x128xf32>
    %301 = arith.maximumf %299, %300 : vector<16x128xf32>
    %c0_97 = arith.constant 0 : index
    %c0_98 = arith.constant 0 : index
    %302 = vector.load %arg12[%c0_97, %c0_98] : memref<128x32xf32, #tpu.memory_space<vmem>>, vector<128x32xf32>
    %cst_99 = arith.constant dense<0.000000e+00> : vector<16x32xf32>
    %303 = tpu.matmul %301, %302, %cst_99 {dimension_numbers = #tpu.dot_dimension_numbers<[1], [0], [0], [1], [0, 0, 1, 1], [], []>} : vector<16x128xf32>, vector<128x32xf32>, vector<16x32xf32> -> vector<16x32xf32>
    %304 = vector.shape_cast %18 : vector<32xf32> to vector<1x32xf32>
    %305 = vector.broadcast %304 : vector<1x32xf32> to vector<16x32xf32>
    %306 = arith.addf %303, %305 : vector<16x32xf32>
    %307 = arith.addf %292, %306 : vector<16x32xf32>
    %cst_100 = arith.constant dense<0.000000e+00> : vector<16xf32>
    %308 = vector.multi_reduction <add>, %307, %cst_100 [1] : vector<16x32xf32> to vector<16xf32>
    %309 = vector.shape_cast %308 : vector<16xf32> to vector<16x1xf32>
    %cst_101 = arith.constant 3.200000e+01 : f32
    %310 = vector.broadcast %cst_101 : f32 to vector<16x1xf32>
    %311 = arith.divf %309, %310 : vector<16x1xf32>
    %312 = vector.broadcast %311 : vector<16x1xf32> to vector<16x32xf32>
    %313 = arith.subf %307, %312 : vector<16x32xf32>
    %314 = arith.mulf %313, %313 : vector<16x32xf32>
    %cst_102 = arith.constant dense<0.000000e+00> : vector<16xf32>
    %315 = vector.multi_reduction <add>, %314, %cst_102 [1] : vector<16x32xf32> to vector<16xf32>
    %316 = vector.shape_cast %315 : vector<16xf32> to vector<16x1xf32>
    %cst_103 = arith.constant 3.200000e+01 : f32
    %317 = vector.broadcast %cst_103 : f32 to vector<16x1xf32>
    %318 = arith.divf %316, %317 : vector<16x1xf32>
    %cst_104 = arith.constant 9.99999974E-6 : f32
    %319 = vector.broadcast %cst_104 : f32 to vector<16x1xf32>
    %320 = arith.addf %318, %319 : vector<16x1xf32>
    %321 = math.rsqrt %320 : vector<16x1xf32>
    %322 = vector.broadcast %321 : vector<16x1xf32> to vector<16x32xf32>
    %323 = arith.mulf %313, %322 : vector<16x32xf32>
    %324 = vector.shape_cast %28 : vector<32xf32> to vector<1x32xf32>
    %325 = vector.broadcast %324 : vector<1x32xf32> to vector<16x32xf32>
    %326 = arith.mulf %323, %325 : vector<16x32xf32>
    %327 = vector.shape_cast %30 : vector<32xf32> to vector<1x32xf32>
    %328 = vector.broadcast %327 : vector<1x32xf32> to vector<16x32xf32>
    %329 = arith.addf %326, %328 : vector<16x32xf32>
    %c0_105 = arith.constant 0 : index
    %c0_106 = arith.constant 0 : index
    %330 = vector.load %arg16[%c0_105, %c0_106] : memref<16x32xf32, #tpu.memory_space<vmem>>, vector<16x32xf32>
    tpu.vector_store %arg16[%c0_105, %c0_106], %329 {strides = array<i32>} : memref<16x32xf32, #tpu.memory_space<vmem>>, vector<16x32xf32>,
    return
  }
}

</mosaic_0001>

<llo_original>
// kernel: tpu_custom_call.1
$region0: #{tpu_custom_call.1}
  #allocation0 [shape = 'u32[]', space=smem, size = 0x4, offset = 0x4, fixed_abs, tag = 'smem constant byte address 0x4 - core index']
  #allocation1 [shape = 'u32[144,128]{1,0:T(1,128)}', space=vmem, size = 0x12000, scoped, tag = 'internal scratch']
  %s0 = inlined_call_operand.hbm [shape: f32[2,8,32], index: 0, kind: input, shape index: {}]
  %s1 = inlined_call_operand.vmem [shape: f32[2,16,32], index: 1, kind: input, shape index: {}]
  %s2 = inlined_call_operand.hbm [shape: f32[2,8,32], index: 2, kind: input, shape index: {}]
  %s3 = inlined_call_operand.vmem [shape: f32[2,16,32], index: 3, kind: input, shape index: {}]
  %s4 = inlined_call_operand.vmem [shape: f32[32,64], index: 4, kind: input, shape index: {}]
  %s5 = inlined_call_operand.vmem [shape: f32[32,32], index: 5, kind: input, shape index: {}]
  %s6 = inlined_call_operand.vmem [shape: f32[32,32], index: 6, kind: input, shape index: {}]
  %s7 = inlined_call_operand.hbm [shape: f32[32,32], index: 7, kind: input, shape index: {}]
  %s8 = inlined_call_operand.hbm [shape: f32[32,32], index: 8, kind: input, shape index: {}]
  %s9 = inlined_call_operand.hbm [shape: f32[32,32], index: 9, kind: input, shape index: {}]
  %s10 = inlined_call_operand.hbm [shape: f32[32,32], index: 10, kind: input, shape index: {}]
  %s11 = inlined_call_operand.hbm [shape: f32[32,128], index: 11, kind: input, shape index: {}]
  %s12 = inlined_call_operand.vmem [shape: f32[128,32], index: 12, kind: input, shape index: {}]
  %s13 = inlined_call_operand.vmem [shape: f32[1,64], index: 13, kind: input, shape index: {}]
  %s14 = inlined_call_operand.vmem [shape: f32[1,128], index: 14, kind: input, shape index: {}]
  %s15 = inlined_call_operand.vmem [shape: f32[13,32], index: 15, kind: input, shape index: {}]
  %s16 = inlined_call_operand.hbm [shape: f32[16,32], index: 16, kind: output, shape index: {}]
  %s17 = sld [smem:[#allocation0]]
  $region102: #{tpu_custom_call.1} parent=0
    _
  %s19 = ssub.s32 1, %s17
  %s20 = scalar_select 0, %s19, %s17
  $region1: #{tpu_custom_call.1} parent=0
    #allocation2 [shape = 'u8[8192]{0}', space=vmem, size = 0x2000, scoped, tag = 'input window, operand 0, single buffered']
    #allocation3 [shape = 's32[1]{0}', space=sflag, size = 0x4, scoped, tag = 'scoped memory for tpu_custom_call.1']
    #allocation4 [shape = 's32[1]{0}', space=sflag, size = 0x4, scoped, tag = 'scoped memory for tpu_custom_call.1']
    #allocation5 [shape = 'u8[8192]{0}', space=vmem, size = 0x2000, scoped, tag = 'input window, operand 2, single buffered']
    #allocation6 [shape = 's32[1]{0}', space=sflag, size = 0x4, scoped, tag = 'scoped memory for tpu_custom_call.1']
    #allocation7 [shape = 'u8[16384]{0}', space=vmem, size = 0x4000, scoped, tag = 'input window, operand 7, single buffered']
    #allocation8 [shape = 'u8[16384]{0}', space=vmem, size = 0x4000, scoped, tag = 'input window, operand 8, single buffered']
    #allocation9 [shape = 's32[1]{0}', space=sflag, size = 0x4, scoped, tag = 'scoped memory for tpu_custom_call.1']
    #allocation10 [shape = 'u8[16384]{0}', space=vmem, size = 0x4000, scoped, tag = 'input window, operand 9, single buffered']
    #allocation11 [shape = 'u8[16384]{0}', space=vmem, size = 0x4000, scoped, tag = 'input window, operand 10, single buffered']
    #allocation12 [shape = 's32[1]{0}', space=sflag, size = 0x4, scoped, tag = 'scoped memory for tpu_custom_call.1']
    #allocation13 [shape = 'u8[16384]{0}', space=vmem, size = 0x4000, scoped, tag = 'input window, operand 11, single buffered']
    #allocation14 [shape = 'u8[8192]{0}', space=vmem, size = 0x2000, scoped, tag = 'output window, operand 0, single buffered']
    %21 = vsyncpa [#allocation3], 0
    %22 = vsyncpa [#allocation6], 0
    %23 = vsyncpa [#allocation9], 0
    %24 = vsyncpa [#allocation12], 0
    %25 = vsyncpa [#allocation4], 0
    // Predicated region
    $region2: #{tpu_custom_call.1} parent=1 // pred_check
      _
    $region3: #{tpu_custom_call.1} parent=1 // pred_check_branch
      %27 = sbr.rel (0) target = $region5
    $region4: #{tpu_custom_call.1} parent=1 // pred_region
      %s29 = ssub.s32 256, 256
      %30 = vsyncadd [#allocation3], %s29
      %s31 = sshll.u32 [#allocation2], 4
      %s32 = int_to_ptr.vmem [resolvable:$true] %s31
      %37 = dma.hbm_to_vmem [thread:$0]  %s0, 256, %s32, [#allocation3], 128, 128, 8
    $region5: #{tpu_custom_call.1} parent=1 // pred_fallthru
      _
    // Predicated region
    $region6: #{tpu_custom_call.1} parent=1 // pred_check
      _
    $region7: #{tpu_custom_call.1} parent=1 // pred_check_branch
      %39 = sbr.rel (0) target = $region9
    $region8: #{tpu_custom_call.1} parent=1 // pred_region
      _
    $region9: #{tpu_custom_call.1} parent=1 // pred_fallthru
      _
    // Predicated region
    $region10: #{tpu_custom_call.1} parent=1 // pred_check
      _
    $region11: #{tpu_custom_call.1} parent=1 // pred_check_branch
      %41 = sbr.rel (0) target = $region13
    $region12: #{tpu_custom_call.1} parent=1 // pred_region
      %s43 = ssub.s32 256, 256
      %44 = vsyncadd [#allocation6], %s43
      %s45 = sshll.u32 [#allocation5], 4
      %s46 = int_to_ptr.vmem [resolvable:$true] %s45
      %51 = dma.hbm_to_vmem [thread:$0]  %s2, 256, %s46, [#allocation6], 128, 128, 8
    $region13: #{tpu_custom_call.1} parent=1 // pred_fallthru
      _
    // Predicated region
    $region14: #{tpu_custom_call.1} parent=1 // pred_check
      _
    $region15: #{tpu_custom_call.1} parent=1 // pred_check_branch
      %53 = sbr.rel (0) target = $region17
    $region16: #{tpu_custom_call.1} parent=1 // pred_region
      _
    $region17: #{tpu_custom_call.1} parent=1 // pred_fallthru
      _
    // Predicated region
    $region18: #{tpu_custom_call.1} parent=1 // pred_check
      _
    $region19: #{tpu_custom_call.1} parent=1 // pred_check_branch
      %55 = sbr.rel (0) target = $region21
    $region20: #{tpu_custom_call.1} parent=1 // pred_region
      _
    $region21: #{tpu_custom_call.1} parent=1 // pred_fallthru
      _
    // Predicated region
    $region22: #{tpu_custom_call.1} parent=1 // pred_check
      _
    $region23: #{tpu_custom_call.1} parent=1 // pred_check_branch
      %57 = sbr.rel (0) target = $region25
    $region24: #{tpu_custom_call.1} parent=1 // pred_region
      _
    $region25: #{tpu_custom_call.1} parent=1 // pred_fallthru
      _
    // Predicated region
    $region26: #{tpu_custom_call.1} parent=1 // pred_check
      _
    $region27: #{tpu_custom_call.1} parent=1 // pred_check_branch
      %59 = sbr.rel (0) target = $region29
    $region28: #{tpu_custom_call.1} parent=1 // pred_region
      _
    $region29: #{tpu_custom_call.1} parent=1 // pred_fallthru
      _
    // Predicated region
    $region30: #{tpu_custom_call.1} parent=1 // pred_check
      _
    $region31: #{tpu_custom_call.1} parent=1 // pred_check_branch
      %61 = sbr.rel (0) target = $region33
    $region32: #{tpu_custom_call.1} parent=1 // pred_region
      %s63 = ssub.s32 512, 512
      %64 = vsyncadd [#allocation6], %s63
      %s65 = sshll.u32 [#allocation7], 4
      %s66 = int_to_ptr.vmem [resolvable:$true] %s65
      %71 = dma.hbm_to_vmem [thread:$0]  %s7, 512, %s66, [#allocation6], 128, 128, 8
    $region33: #{tpu_custom_call.1} parent=1 // pred_fallthru
      _
    // Predicated region
    $region34: #{tpu_custom_call.1} parent=1 // pred_check
      _
    $region35: #{tpu_custom_call.1} parent=1 // pred_check_branch
      %73 = sbr.rel (0) target = $region37
    $region36: #{tpu_custom_call.1} parent=1 // pred_region
      %s75 = ssub.s32 512, 512
      %76 = vsyncadd [#allocation9], %s75
      %s77 = sshll.u32 [#allocation8], 4
      %s78 = int_to_ptr.vmem [resolvable:$true] %s77
      %83 = dma.hbm_to_vmem [thread:$0]  %s8, 512, %s78, [#allocation9], 128, 128, 8
    $region37: #{tpu_custom_call.1} parent=1 // pred_fallthru
      _
    // Predicated region
    $region38: #{tpu_custom_call.1} parent=1 // pred_check
      _
    $region39: #{tpu_custom_call.1} parent=1 // pred_check_branch
      %85 = sbr.rel (0) target = $region41
    $region40: #{tpu_custom_call.1} parent=1 // pred_region
      %s87 = ssub.s32 512, 512
      %88 = vsyncadd [#allocation9], %s87
      %s89 = sshll.u32 [#allocation10], 4
      %s90 = int_to_ptr.vmem [resolvable:$true] %s89
      %95 = dma.hbm_to_vmem [thread:$0]  %s9, 512, %s90, [#allocation9], 128, 128, 8
    $region41: #{tpu_custom_call.1} parent=1 // pred_fallthru
      _
    // Predicated region
    $region42: #{tpu_custom_call.1} parent=1 // pred_check
      _
    $region43: #{tpu_custom_call.1} parent=1 // pred_check_branch
      %97 = sbr.rel (0) target = $region45
    $region44: #{tpu_custom_call.1} parent=1 // pred_region
      %s99 = ssub.s32 512, 512
      %100 = vsyncadd [#allocation12], %s99
      %s101 = sshll.u32 [#allocation11], 4
      %s102 = int_to_ptr.vmem [resolvable:$true] %s101
      %107 = dma.hbm_to_vmem [thread:$0]  %s10, 512, %s102, [#allocation12], 128, 128, 8
    $region45: #{tpu_custom_call.1} parent=1 // pred_fallthru
      _
    // Predicated region
    $region46: #{tpu_custom_call.1} parent=1 // pred_check
      _
    $region47: #{tpu_custom_call.1} parent=1 // pred_check_branch
      %109 = sbr.rel (0) target = $region49
    $region48: #{tpu_custom_call.1} parent=1 // pred_region
      %s111 = ssub.s32 512, 512
      %112 = vsyncadd [#allocation12], %s111
      %s113 = sshll.u32 [#allocation13], 4
      %s114 = int_to_ptr.vmem [resolvable:$true] %s113
      %119 = dma.hbm_to_vmem [thread:$0]  %s11, 512, %s114, [#allocation12], 128, 128, 8
    $region49: #{tpu_custom_call.1} parent=1 // pred_fallthru
      _
    // Predicated region
    $region50: #{tpu_custom_call.1} parent=1 // pred_check
      _
    $region51: #{tpu_custom_call.1} parent=1 // pred_check_branch
      %121 = sbr.rel (0) target = $region53
    $region52: #{tpu_custom_call.1} parent=1 // pred_region
      _
    $region53: #{tpu_custom_call.1} parent=1 // pred_fallthru
      _
    // Predicated region
    $region54: #{tpu_custom_call.1} parent=1 // pred_check
      _
    $region55: #{tpu_custom_call.1} parent=1 // pred_check_branch
      %123 = sbr.rel (0) target = $region57
    $region56: #{tpu_custom_call.1} parent=1 // pred_region
      _
    $region57: #{tpu_custom_call.1} parent=1 // pred_fallthru
      _
    // Predicated region
    $region58: #{tpu_custom_call.1} parent=1 // pred_check
      _
    $region59: #{tpu_custom_call.1} parent=1 // pred_check_branch
      %125 = sbr.rel (0) target = $region61
    $region60: #{tpu_custom_call.1} parent=1 // pred_region
      _
    $region61: #{tpu_custom_call.1} parent=1 // pred_fallthru
      _
    // Predicated region
    $region62: #{tpu_custom_call.1} parent=1 // pred_check
      _
    $region63: #{tpu_custom_call.1} parent=1 // pred_check_branch
      %127 = sbr.rel (0) target = $region65
    $region64: #{tpu_custom_call.1} parent=1 // pred_region
      _
    $region65: #{tpu_custom_call.1} parent=1 // pred_fallthru
      _
    // Predicated region
    $region66: #{tpu_custom_call.1} parent=1 // pred_check
      _
    $region67: #{tpu_custom_call.1} parent=1 // pred_check_branch
      %129 = sbr.rel (0) target = $region69
    $region68: #{tpu_custom_call.1} parent=1 // pred_region
      %130 = dma.done [#allocation3], 256
    $region69: #{tpu_custom_call.1} parent=1 // pred_fallthru
      _
    // Predicated region
    $region70: #{tpu_custom_call.1} parent=1 // pred_check
      _
    $region71: #{tpu_custom_call.1} parent=1 // pred_check_branch
      %132 = sbr.rel (0) target = $region73
    $region72: #{tpu_custom_call.1} parent=1 // pred_region
      %133 = dma.done [#allocation6], 256
    $region73: #{tpu_custom_call.1} parent=1 // pred_fallthru
      _
    // Predicated region
    $region74: #{tpu_custom_call.1} parent=1 // pred_check
      _
    $region75: #{tpu_custom_call.1} parent=1 // pred_check_branch
      %135 = sbr.rel (0) target = $region77
    $region76: #{tpu_custom_call.1} parent=1 // pred_region
      %136 = dma.done [#allocation6], 512
    $region77: #{tpu_custom_call.1} parent=1 // pred_fallthru
      _
    // Predicated region
    $region78: #{tpu_custom_call.1} parent=1 // pred_check
      _
    $region79: #{tpu_custom_call.1} parent=1 // pred_check_branch
      %138 = sbr.rel (0) target = $region81
    $region80: #{tpu_custom_call.1} parent=1 // pred_region
      %139 = dma.done [#allocation9], 512
    $region81: #{tpu_custom_call.1} parent=1 // pred_fallthru
      _
    // Predicated region
    $region82: #{tpu_custom_call.1} parent=1 // pred_check
      _
    $region83: #{tpu_custom_call.1} parent=1 // pred_check_branch
      %141 = sbr.rel (0) target = $region85
    $region84: #{tpu_custom_call.1} parent=1 // pred_region
      %142 = dma.done [#allocation9], 512
    $region85: #{tpu_custom_call.1} parent=1 // pred_fallthru
      _
    // Predicated region
    $region86: #{tpu_custom_call.1} parent=1 // pred_check
      _
    $region87: #{tpu_custom_call.1} parent=1 // pred_check_branch
      %144 = sbr.rel (0) target = $region89
    $region88: #{tpu_custom_call.1} parent=1 // pred_region
      %145 = dma.done [#allocation12], 512
    $region89: #{tpu_custom_call.1} parent=1 // pred_fallthru
      _
    // Predicated region
    $region90: #{tpu_custom_call.1} parent=1 // pred_check
      _
    $region91: #{tpu_custom_call.1} parent=1 // pred_check_branch
      %147 = sbr.rel (0) target = $region93
    $region92: #{tpu_custom_call.1} parent=1 // pred_region
      %148 = dma.done [#allocation12], 512
    $region93: #{tpu_custom_call.1} parent=1 // pred_fallthru
      _
    %v149 = vld [vmem:[#allocation2] sm:$0xff]
    %v150 = vld [vmem:[#allocation2 + $0x8] sm:$0xff]
    %v151 = vld [vmem:[#allocation5] sm:$0xff]
    %v152 = vld [vmem:[#allocation5 + $0x8] sm:$0xff]
    %v153 = vld [vmem:[%s1] sm:$0xff]
    %v154 = vld [vmem:[%s1 + $0x8] sm:$0xff]
    %v155 = vld [vmem:[%s1 + $0x10] sm:$0xff]
    %v156 = vld [vmem:[%s1 + $0x18] sm:$0xff]
    %v157 = vld [vmem:[%s3] sm:$0xff]
    %v158 = vld [vmem:[%s3 + $0x8] sm:$0xff]
    %v159 = vld [vmem:[%s3 + $0x10] sm:$0xff]
    %v160 = vld [vmem:[%s3 + $0x18] sm:$0xff]
    %v161 = vld [vmem:[%s15] sm:$0xff]
    %v162 = vld [vmem:[%s15 + $0x8] sm:$0x1f]
    %v163 = vadd.f32 %v149, %v151
    %v164 = vadd.f32 %v150, %v152
    %v165 = vld [vmem:[%s4] sm:$0xff]
    %v166 = vld [vmem:[%s4 + $0x8] sm:$0xff]
    %v167 = vld [vmem:[%s4 + $0x10] sm:$0xff]
    %v168 = vld [vmem:[%s4 + $0x18] sm:$0xff]
    %v169 = vld [vmem:[%s13] sm:$0x1]
    %v171 = vlaneseq
    %v172 = vshrl.u32 %v171, 7
    %v173 = vsub.s32 0, %v172
    %v174 = vrot.slane %v169, %v173
    %vm176 = vcmask 261120
    %v178 = vsel %vm176, %v163, 0
    %v181 = vsel %vm176, %v164, 0
    %183 = vmatprep.subr.mxu0 0.0
    %184 = vmatpush1.msra.mxu0 %v165
    %185 = vmatprep.subr.mxu0 0.0
    %186 = vmatpush1.msra.mxu0 %v166
    %187 = vmatprep.subr.mxu0 0.0
    %188 = vmatpush1.msra.mxu0 %v167
    %189 = vmatprep.subr.mxu0 0.0
    %190 = vmatpush1.msra.mxu0 %v168
    %191 = vmatprep.subr.mxu0 0.0
    %192 = vmatpush1.msra.mxu0 0.0
    %193 = vmatprep.subr.mxu0 0.0
    %194 = vmatpush1.msra.mxu0 0.0
    %195 = vmatprep.subr.mxu0 0.0
    %196 = vmatpush1.msra.mxu0 0.0
    %197 = vmatprep.subr.mxu0 0.0
    %198 = vmatpush1.msra.mxu0 0.0
    %199 = vmatprep.subr.mxu0 0.0
    %200 = vmatpush1.msra.mxu0 0.0
    %201 = vmatprep.subr.mxu0 0.0
    %202 = vmatpush1.msra.mxu0 0.0
    %203 = vmatprep.subr.mxu0 0.0
    %204 = vmatpush1.msra.mxu0 0.0
    %205 = vmatprep.subr.mxu0 0.0
    %206 = vmatpush1.msra.mxu0 0.0
    %207 = vmatprep.subr.mxu0 0.0
    %208 = vmatpush1.msra.mxu0 0.0
    %209 = vmatprep.subr.mxu0 0.0
    %210 = vmatpush1.msra.mxu0 0.0
    %211 = vmatprep.subr.mxu0 0.0
    %212 = vmatpush1.msra.mxu0 0.0
    %213 = vmatprep.subr.mxu0 0.0
    %214 = vmatpush1.msra.mxu0 0.0
    %215 = vmatprep.subr.mxu0 0.0
    %216 = vmatpush1.msra.mxu0 0.0
    %217 = vmatprep.subr.mxu0 0.0
    %218 = vmatpush1.msra.mxu0 0.0
    %219 = vmatprep.subr.mxu0 0.0
    %220 = vmatpush1.msra.mxu0 0.0
    %221 = vmatprep.subr.mxu0 0.0
    %222 = vmatpush1.msra.mxu0 0.0
    %223 = vmatprep.subr.mxu0 0.0
    %224 = vmatpush1.msra.mxu0 0.0
    %225 = vmatprep.subr.mxu0 0.0
    %226 = vmatpush1.msra.mxu0 0.0
    %227 = vmatprep.subr.mxu0 0.0
    %228 = vmatpush1.msra.mxu0 0.0
    %229 = vmatprep.subr.mxu0 0.0
    %230 = vmatpush1.msra.mxu0 0.0
    %231 = vmatprep.subr.mxu0 0.0
    %232 = vmatpush1.msra.mxu0 0.0
    %233 = vmatprep.subr.mxu0 0.0
    %234 = vmatpush1.msra.mxu0 0.0
    %235 = vmatprep.subr.mxu0 0.0
    %236 = vmatpush1.msra.mxu0 0.0
    %237 = vmatprep.subr.mxu0 0.0
    %238 = vmatpush1.msra.mxu0 0.0
    %239 = vmatprep.subr.mxu0 0.0
    %240 = vmatpush1.msra.mxu0 0.0
    %241 = vmatprep.subr.mxu0 0.0
    %242 = vmatpush1.msra.mxu0 0.0
    %243 = vmatprep.subr.mxu0 0.0
    %244 = vmatpush1.msra.mxu0 0.0
    %245 = vmatprep.subr.mxu0 0.0
    %246 = vmatpush1.msra.mxu0 0.0
    %247 = vmatprep.mubr.f32.mxu0 0.0
    %248 = vmatmul.mubr.f32.gmra.mrb[0].mxu0 %v178
    %v249 = vpop.f32.mrb[0].mxu0
    %v250 = vadd.f32 %v174, %v249
    %v251 = vpop.f32.mrb[0].mxu0
    %252 = vmatprep.mubr.f32.mxu0 0.0
    %253 = vmatmul.mubr.f32.gmra.mrb[0].mxu0 %v181
    %v254 = vpop.f32.mrb[0].mxu0
    %v255 = vadd.f32 %v174, %v254
    %v256 = vpop.f32.mrb[0].mxu0
    %257 = vdwg.mxu0
    %v258 = vld [vmem:[%s5] sm:$0xff]
    %v259 = vld [vmem:[%s5 + $0x8] sm:$0xff]
    %v260 = vld [vmem:[%s5 + $0x10] sm:$0xff]
    %v261 = vld [vmem:[%s5 + $0x18] sm:$0xff]
    %v262 = vlaneseq
    %v263 = vshrl.u32 %v262, 7
    %v264 = vsub.s32 0, %v263
    %v265 = vrot.slane %v161, %v264
    %v267 = vsel %vm176, %v149, 0
    %v270 = vsel %vm176, %v150, 0
    %272 = vmatprep.subr.mxu0 0.0
    %273 = vmatpush1.msra.mxu0 %v258
    %274 = vmatprep.subr.mxu0 0.0
    %275 = vmatpush1.msra.mxu0 %v259
    %276 = vmatprep.subr.mxu0 0.0
    %277 = vmatpush1.msra.mxu0 %v260
    %278 = vmatprep.subr.mxu0 0.0
    %279 = vmatpush1.msra.mxu0 %v261
    %280 = vmatprep.subr.mxu0 0.0
    %281 = vmatpush1.msra.mxu0 0.0
    %282 = vmatprep.subr.mxu0 0.0
    %283 = vmatpush1.msra.mxu0 0.0
    %284 = vmatprep.subr.mxu0 0.0
    %285 = vmatpush1.msra.mxu0 0.0
    %286 = vmatprep.subr.mxu0 0.0
    %287 = vmatpush1.msra.mxu0 0.0
    %288 = vmatprep.subr.mxu0 0.0
    %289 = vmatpush1.msra.mxu0 0.0
    %290 = vmatprep.subr.mxu0 0.0
    %291 = vmatpush1.msra.mxu0 0.0
    %292 = vmatprep.subr.mxu0 0.0
    %293 = vmatpush1.msra.mxu0 0.0
    %294 = vmatprep.subr.mxu0 0.0
    %295 = vmatpush1.msra.mxu0 0.0
    %296 = vmatprep.subr.mxu0 0.0
    %297 = vmatpush1.msra.mxu0 0.0
    %298 = vmatprep.subr.mxu0 0.0
    %299 = vmatpush1.msra.mxu0 0.0
    %300 = vmatprep.subr.mxu0 0.0
    %301 = vmatpush1.msra.mxu0 0.0
    %302 = vmatprep.subr.mxu0 0.0
    %303 = vmatpush1.msra.mxu0 0.0
    %304 = vmatprep.subr.mxu0 0.0
    %305 = vmatpush1.msra.mxu0 0.0
    %306 = vmatprep.subr.mxu0 0.0
    %307 = vmatpush1.msra.mxu0 0.0
    %308 = vmatprep.subr.mxu0 0.0
    %309 = vmatpush1.msra.mxu0 0.0
    %310 = vmatprep.subr.mxu0 0.0
    %311 = vmatpush1.msra.mxu0 0.0
    %312 = vmatprep.subr.mxu0 0.0
    %313 = vmatpush1.msra.mxu0 0.0
    %314 = vmatprep.subr.mxu0 0.0
    %315 = vmatpush1.msra.mxu0 0.0
    %316 = vmatprep.subr.mxu0 0.0
    %317 = vmatpush1.msra.mxu0 0.0
    %318 = vmatprep.subr.mxu0 0.0
    %319 = vmatpush1.msra.mxu0 0.0
    %320 = vmatprep.subr.mxu0 0.0
    %321 = vmatpush1.msra.mxu0 0.0
    %322 = vmatprep.subr.mxu0 0.0
    %323 = vmatpush1.msra.mxu0 0.0
    %324 = vmatprep.subr.mxu0 0.0
    %325 = vmatpush1.msra.mxu0 0.0
    %326 = vmatprep.subr.mxu0 0.0
    %327 = vmatpush1.msra.mxu0 0.0
    %328 = vmatprep.subr.mxu0 0.0
    %329 = vmatpush1.msra.mxu0 0.0
    %330 = vmatprep.subr.mxu0 0.0
    %331 = vmatpush1.msra.mxu0 0.0
    %332 = vmatprep.subr.mxu0 0.0
    %333 = vmatpush1.msra.mxu0 0.0
    %334 = vmatprep.subr.mxu0 0.0
    %335 = vmatpush1.msra.mxu0 0.0
    %336 = vmatprep.mubr.f32.mxu0 0.0
    %337 = vmatmul.mubr.f32.gmra.mrb[0].mxu0 %v267
    %v338 = vpop.f32.mrb[0].mxu0
    %v339 = vadd.f32 %v265, %v338
    %v340 = vpop.f32.mrb[0].mxu0
    %341 = vmatprep.mubr.f32.mxu0 0.0
    %342 = vmatmul.mubr.f32.gmra.mrb[0].mxu0 %v270
    %v343 = vpop.f32.mrb[0].mxu0
    %v344 = vadd.f32 %v265, %v343
    %v345 = vpop.f32.mrb[0].mxu0
    %346 = vdwg.mxu0
    %v347 = vld [vmem:[%s6] sm:$0xff]
    %v348 = vld [vmem:[%s6 + $0x8] sm:$0xff]
    %v349 = vld [vmem:[%s6 + $0x10] sm:$0xff]
    %v350 = vld [vmem:[%s6 + $0x18] sm:$0xff]
    %v351 = vmul.f32 %v250, 0.35355338
    %v352 = vmul.f32 %v255, 0.35355338
    %354 = vrot.lane.b32.xlu0 %v250, 96
    %v355 = vpop.permute.xlu0 %354
    %vm356 = vcmask 64512
    %v358 = vsel %vm356, %v351, 0
    %v360 = vsel %vm356, %v355, 0
    %362 = vmatprep.subr.mxu0 0.0
    %363 = vmatpush1.xpose.msra.mxu0 %v360
    %364 = vmatprep.subr.mxu0 0.0
    %365 = vmatpush1.xpose.msra.mxu0 0.0
    %366 = vmatprep.subr.mxu0 0.0
    %367 = vmatpush1.xpose.msra.mxu0 0.0
    %368 = vmatprep.subr.mxu0 0.0
    %369 = vmatpush1.xpose.msra.mxu0 0.0
    %370 = vmatprep.subr.mxu0 0.0
    %371 = vmatpush1.xpose.msra.mxu0 0.0
    %372 = vmatprep.subr.mxu0 0.0
    %373 = vmatpush1.xpose.msra.mxu0 0.0
    %374 = vmatprep.subr.mxu0 0.0
    %375 = vmatpush1.xpose.msra.mxu0 0.0
    %376 = vmatprep.subr.mxu0 0.0
    %377 = vmatpush1.xpose.msra.mxu0 0.0
    %378 = vmatprep.subr.mxu0 0.0
    %379 = vmatpush1.xpose.msra.mxu0 0.0
    %380 = vmatprep.subr.mxu0 0.0
    %381 = vmatpush1.xpose.msra.mxu0 0.0
    %382 = vmatprep.subr.mxu0 0.0
    %383 = vmatpush1.xpose.msra.mxu0 0.0
    %384 = vmatprep.subr.mxu0 0.0
    %385 = vmatpush1.xpose.msra.mxu0 0.0
    %386 = vmatprep.subr.mxu0 0.0
    %387 = vmatpush1.xpose.msra.mxu0 0.0
    %388 = vmatprep.subr.mxu0 0.0
    %389 = vmatpush1.xpose.msra.mxu0 0.0
    %390 = vmatprep.subr.mxu0 0.0
    %391 = vmatpush1.xpose.msra.mxu0 0.0
    %392 = vmatprep.subr.mxu0 0.0
    %393 = vmatpush1.xpose.msra.mxu0 0.0
    %394 = vmatprep.subr.mxu0 0.0
    %395 = vmatpush1.xpose.msra.mxu0 0.0
    %396 = vmatprep.subr.mxu0 0.0
    %397 = vmatpush1.xpose.msra.mxu0 0.0
    %398 = vmatprep.subr.mxu0 0.0
    %399 = vmatpush1.xpose.msra.mxu0 0.0
    %400 = vmatprep.subr.mxu0 0.0
    %401 = vmatpush1.xpose.msra.mxu0 0.0
    %402 = vmatprep.subr.mxu0 0.0
    %403 = vmatpush1.xpose.msra.mxu0 0.0
    %404 = vmatprep.subr.mxu0 0.0
    %405 = vmatpush1.xpose.msra.mxu0 0.0
    %406 = vmatprep.subr.mxu0 0.0
    %407 = vmatpush1.xpose.msra.mxu0 0.0
    %408 = vmatprep.subr.mxu0 0.0
    %409 = vmatpush1.xpose.msra.mxu0 0.0
    %410 = vmatprep.subr.mxu0 0.0
    %411 = vmatpush1.xpose.msra.mxu0 0.0
    %412 = vmatprep.subr.mxu0 0.0
    %413 = vmatpush1.xpose.msra.mxu0 0.0
    %414 = vmatprep.subr.mxu0 0.0
    %415 = vmatpush1.xpose.msra.mxu0 0.0
    %416 = vmatprep.subr.mxu0 0.0
    %417 = vmatpush1.xpose.msra.mxu0 0.0
    %418 = vmatprep.subr.mxu0 0.0
    %419 = vmatpush1.xpose.msra.mxu0 0.0
    %420 = vmatprep.subr.mxu0 0.0
    %421 = vmatpush1.xpose.msra.mxu0 0.0
    %422 = vmatprep.subr.mxu0 0.0
    %423 = vmatpush1.xpose.msra.mxu0 0.0
    %424 = vmatprep.subr.mxu0 0.0
    %425 = vmatpush1.xpose.msra.mxu0 0.0
    %426 = vmatprep.mubr.f32.mxu0 0.0
    %427 = vmatmul.mubr.f32.gmra.mrb[0].mxu0 %v358
    %v428 = vpop.f32.mrb[0].mxu0
    %v429 = vadd.f32 0.0, %v428
    %v430 = vpop.f32.mrb[0].mxu0
    %431 = vdwg.mxu0
    %433 = vrot.lane.b32.xlu0 %v255, 96
    %v434 = vpop.permute.xlu0 %433
    %v436 = vsel %vm356, %v352, 0
    %v438 = vsel %vm356, %v434, 0
    %440 = vmatprep.subr.mxu0 0.0
    %441 = vmatpush1.xpose.msra.mxu0 %v438
    %442 = vmatprep.subr.mxu0 0.0
    %443 = vmatpush1.xpose.msra.mxu0 0.0
    %444 = vmatprep.subr.mxu0 0.0
    %445 = vmatpush1.xpose.msra.mxu0 0.0
    %446 = vmatprep.subr.mxu0 0.0
    %447 = vmatpush1.xpose.msra.mxu0 0.0
    %448 = vmatprep.subr.mxu0 0.0
    %449 = vmatpush1.xpose.msra.mxu0 0.0
    %450 = vmatprep.subr.mxu0 0.0
    %451 = vmatpush1.xpose.msra.mxu0 0.0
    %452 = vmatprep.subr.mxu0 0.0
    %453 = vmatpush1.xpose.msra.mxu0 0.0
    %454 = vmatprep.subr.mxu0 0.0
    %455 = vmatpush1.xpose.msra.mxu0 0.0
    %456 = vmatprep.subr.mxu0 0.0
    %457 = vmatpush1.xpose.msra.mxu0 0.0
    %458 = vmatprep.subr.mxu0 0.0
    %459 = vmatpush1.xpose.msra.mxu0 0.0
    %460 = vmatprep.subr.mxu0 0.0
    %461 = vmatpush1.xpose.msra.mxu0 0.0
    %462 = vmatprep.subr.mxu0 0.0
    %463 = vmatpush1.xpose.msra.mxu0 0.0
    %464 = vmatprep.subr.mxu0 0.0
    %465 = vmatpush1.xpose.msra.mxu0 0.0
    %466 = vmatprep.subr.mxu0 0.0
    %467 = vmatpush1.xpose.msra.mxu0 0.0
    %468 = vmatprep.subr.mxu0 0.0
    %469 = vmatpush1.xpose.msra.mxu0 0.0
    %470 = vmatprep.subr.mxu0 0.0
    %471 = vmatpush1.xpose.msra.mxu0 0.0
    %472 = vmatprep.subr.mxu0 0.0
    %473 = vmatpush1.xpose.msra.mxu0 0.0
    %474 = vmatprep.subr.mxu0 0.0
    %475 = vmatpush1.xpose.msra.mxu0 0.0
    %476 = vmatprep.subr.mxu0 0.0
    %477 = vmatpush1.xpose.msra.mxu0 0.0
    %478 = vmatprep.subr.mxu0 0.0
    %479 = vmatpush1.xpose.msra.mxu0 0.0
    %480 = vmatprep.subr.mxu0 0.0
    %481 = vmatpush1.xpose.msra.mxu0 0.0
    %482 = vmatprep.subr.mxu0 0.0
    %483 = vmatpush1.xpose.msra.mxu0 0.0
    %484 = vmatprep.subr.mxu0 0.0
    %485 = vmatpush1.xpose.msra.mxu0 0.0
    %486 = vmatprep.subr.mxu0 0.0
    %487 = vmatpush1.xpose.msra.mxu0 0.0
    %488 = vmatprep.subr.mxu0 0.0
    %489 = vmatpush1.xpose.msra.mxu0 0.0
    %490 = vmatprep.subr.mxu0 0.0
    %491 = vmatpush1.xpose.msra.mxu0 0.0
    %492 = vmatprep.subr.mxu0 0.0
    %493 = vmatpush1.xpose.msra.mxu0 0.0
    %494 = vmatprep.subr.mxu0 0.0
    %495 = vmatpush1.xpose.msra.mxu0 0.0
    %496 = vmatprep.subr.mxu0 0.0
    %497 = vmatpush1.xpose.msra.mxu0 0.0
    %498 = vmatprep.subr.mxu0 0.0
    %499 = vmatpush1.xpose.msra.mxu0 0.0
    %500 = vmatprep.subr.mxu0 0.0
    %501 = vmatpush1.xpose.msra.mxu0 0.0
    %502 = vmatprep.subr.mxu0 0.0
    %503 = vmatpush1.xpose.msra.mxu0 0.0
    %504 = vmatprep.mubr.f32.mxu0 0.0
    %505 = vmatmul.mubr.f32.gmra.mrb[0].mxu0 %v436
    %v506 = vpop.f32.mrb[0].mxu0
    %v507 = vadd.f32 0.0, %v506
    %v508 = vpop.f32.mrb[0].mxu0
    %509 = vdwg.mxu0
    %v510 = vsel %vm356, %v429, -inf
    %511 = vmax.xlane.f32.xlu0 %v510
    %v512 = vpop.xlane.xlu0 %511
    %v513 = vsel %vm356, %v507, -inf
    %514 = vmax.xlane.f32.xlu0 %v513
    %v515 = vpop.xlane.xlu0 %514
    %v516 = vsub.f32 %v429, %v512
    %v517 = vsub.f32 %v507, %v515
    %v518 = vmul.f32 %v516, 1.442695
    %v519 = vpow.pop %v518
    %v520 = vmul.f32 %v517, 1.442695
    %v521 = vpow.pop %v520
    %v522 = vsel %vm356, %v519, 0.0
    %523 = vadd.xlane.f32.xlu0 %v522
    %v524 = vpop.xlane.xlu0 %523
    %v525 = vsel %vm356, %v521, 0.0
    %526 = vadd.xlane.f32.xlu0 %v525
    %v527 = vpop.xlane.xlu0 %526
    %v528 = vrcp.pop %v524
    %v529 = vrcp.pop %v527
    %v530 = vmul.f32 %v519, %v528
    %v531 = vmul.f32 %v521, %v529
    %v533 = vsel %vm356, %v530, 0
    %535 = vmatprep.subr.mxu0 0.0
    %536 = vmatpush1.msra.mxu0 %v339
    %537 = vmatprep.subr.mxu0 0.0
    %538 = vmatpush1.msra.mxu0 0.0
    %539 = vmatprep.subr.mxu0 0.0
    %540 = vmatpush1.msra.mxu0 0.0
    %541 = vmatprep.subr.mxu0 0.0
    %542 = vmatpush1.msra.mxu0 0.0
    %543 = vmatprep.subr.mxu0 0.0
    %544 = vmatpush1.msra.mxu0 0.0
    %545 = vmatprep.subr.mxu0 0.0
    %546 = vmatpush1.msra.mxu0 0.0
    %547 = vmatprep.subr.mxu0 0.0
    %548 = vmatpush1.msra.mxu0 0.0
    %549 = vmatprep.subr.mxu0 0.0
    %550 = vmatpush1.msra.mxu0 0.0
    %551 = vmatprep.subr.mxu0 0.0
    %552 = vmatpush1.msra.mxu0 0.0
    %553 = vmatprep.subr.mxu0 0.0
    %554 = vmatpush1.msra.mxu0 0.0
    %555 = vmatprep.subr.mxu0 0.0
    %556 = vmatpush1.msra.mxu0 0.0
    %557 = vmatprep.subr.mxu0 0.0
    %558 = vmatpush1.msra.mxu0 0.0
    %559 = vmatprep.subr.mxu0 0.0
    %560 = vmatpush1.msra.mxu0 0.0
    %561 = vmatprep.subr.mxu0 0.0
    %562 = vmatpush1.msra.mxu0 0.0
    %563 = vmatprep.subr.mxu0 0.0
    %564 = vmatpush1.msra.mxu0 0.0
    %565 = vmatprep.subr.mxu0 0.0
    %566 = vmatpush1.msra.mxu0 0.0
    %567 = vmatprep.subr.mxu0 0.0
    %568 = vmatpush1.msra.mxu0 0.0
    %569 = vmatprep.subr.mxu0 0.0
    %570 = vmatpush1.msra.mxu0 0.0
    %571 = vmatprep.subr.mxu0 0.0
    %572 = vmatpush1.msra.mxu0 0.0
    %573 = vmatprep.subr.mxu0 0.0
    %574 = vmatpush1.msra.mxu0 0.0
    %575 = vmatprep.subr.mxu0 0.0
    %576 = vmatpush1.msra.mxu0 0.0
    %577 = vmatprep.subr.mxu0 0.0
    %578 = vmatpush1.msra.mxu0 0.0
    %579 = vmatprep.subr.mxu0 0.0
    %580 = vmatpush1.msra.mxu0 0.0
    %581 = vmatprep.subr.mxu0 0.0
    %582 = vmatpush1.msra.mxu0 0.0
    %583 = vmatprep.subr.mxu0 0.0
    %584 = vmatpush1.msra.mxu0 0.0
    %585 = vmatprep.subr.mxu0 0.0
    %586 = vmatpush1.msra.mxu0 0.0
    %587 = vmatprep.subr.mxu0 0.0
    %588 = vmatpush1.msra.mxu0 0.0
    %589 = vmatprep.subr.mxu0 0.0
    %590 = vmatpush1.msra.mxu0 0.0
    %591 = vmatprep.subr.mxu0 0.0
    %592 = vmatpush1.msra.mxu0 0.0
    %593 = vmatprep.subr.mxu0 0.0
    %594 = vmatpush1.msra.mxu0 0.0
    %595 = vmatprep.subr.mxu0 0.0
    %596 = vmatpush1.msra.mxu0 0.0
    %597 = vmatprep.subr.mxu0 0.0
    %598 = vmatpush1.msra.mxu0 0.0
    %599 = vmatprep.mubr.f32.mxu0 0.0
    %600 = vmatmul.mubr.f32.gmra.mrb[0].mxu0 %v533
    %v601 = vpop.f32.mrb[0].mxu0
    %v602 = vadd.f32 0.0, %v601
    %v603 = vpop.f32.mrb[0].mxu0
    %604 = vdwg.mxu0
    %v606 = vsel %vm356, %v531, 0
    %608 = vmatprep.subr.mxu0 0.0
    %609 = vmatpush1.msra.mxu0 %v344
    %610 = vmatprep.subr.mxu0 0.0
    %611 = vmatpush1.msra.mxu0 0.0
    %612 = vmatprep.subr.mxu0 0.0
    %613 = vmatpush1.msra.mxu0 0.0
    %614 = vmatprep.subr.mxu0 0.0
    %615 = vmatpush1.msra.mxu0 0.0
    %616 = vmatprep.subr.mxu0 0.0
    %617 = vmatpush1.msra.mxu0 0.0
    %618 = vmatprep.subr.mxu0 0.0
    %619 = vmatpush1.msra.mxu0 0.0
    %620 = vmatprep.subr.mxu0 0.0
    %621 = vmatpush1.msra.mxu0 0.0
    %622 = vmatprep.subr.mxu0 0.0
    %623 = vmatpush1.msra.mxu0 0.0
    %624 = vmatprep.subr.mxu0 0.0
    %625 = vmatpush1.msra.mxu0 0.0
    %626 = vmatprep.subr.mxu0 0.0
    %627 = vmatpush1.msra.mxu0 0.0
    %628 = vmatprep.subr.mxu0 0.0
    %629 = vmatpush1.msra.mxu0 0.0
    %630 = vmatprep.subr.mxu0 0.0
    %631 = vmatpush1.msra.mxu0 0.0
    %632 = vmatprep.subr.mxu0 0.0
    %633 = vmatpush1.msra.mxu0 0.0
    %634 = vmatprep.subr.mxu0 0.0
    %635 = vmatpush1.msra.mxu0 0.0
    %636 = vmatprep.subr.mxu0 0.0
    %637 = vmatpush1.msra.mxu0 0.0
    %638 = vmatprep.subr.mxu0 0.0
    %639 = vmatpush1.msra.mxu0 0.0
    %640 = vmatprep.subr.mxu0 0.0
    %641 = vmatpush1.msra.mxu0 0.0
    %642 = vmatprep.subr.mxu0 0.0
    %643 = vmatpush1.msra.mxu0 0.0
    %644 = vmatprep.subr.mxu0 0.0
    %645 = vmatpush1.msra.mxu0 0.0
    %646 = vmatprep.subr.mxu0 0.0
    %647 = vmatpush1.msra.mxu0 0.0
    %648 = vmatprep.subr.mxu0 0.0
    %649 = vmatpush1.msra.mxu0 0.0
    %650 = vmatprep.subr.mxu0 0.0
    %651 = vmatpush1.msra.mxu0 0.0
    %652 = vmatprep.subr.mxu0 0.0
    %653 = vmatpush1.msra.mxu0 0.0
    %654 = vmatprep.subr.mxu0 0.0
    %655 = vmatpush1.msra.mxu0 0.0
    %656 = vmatprep.subr.mxu0 0.0
    %657 = vmatpush1.msra.mxu0 0.0
    %658 = vmatprep.subr.mxu0 0.0
    %659 = vmatpush1.msra.mxu0 0.0
    %660 = vmatprep.subr.mxu0 0.0
    %661 = vmatpush1.msra.mxu0 0.0
    %662 = vmatprep.subr.mxu0 0.0
    %663 = vmatpush1.msra.mxu0 0.0
    %664 = vmatprep.subr.mxu0 0.0
    %665 = vmatpush1.msra.mxu0 0.0
    %666 = vmatprep.subr.mxu0 0.0
    %667 = vmatpush1.msra.mxu0 0.0
    %668 = vmatprep.subr.mxu0 0.0
    %669 = vmatpush1.msra.mxu0 0.0
    %670 = vmatprep.subr.mxu0 0.0
    %671 = vmatpush1.msra.mxu0 0.0
    %672 = vmatprep.mubr.f32.mxu0 0.0
    %673 = vmatmul.mubr.f32.gmra.mrb[0].mxu0 %v606
    %v674 = vpop.f32.mrb[0].mxu0
    %v675 = vadd.f32 0.0, %v674
    %v676 = vpop.f32.mrb[0].mxu0
    %677 = vdwg.mxu0
    %678 = vrot.lane.b32.xlu0 %v351, 120
    %v679 = vpop.permute.xlu0 %678
    %680 = vrot.lane.b32.xlu0 %v250, 88
    %v681 = vpop.permute.xlu0 %680
    %v682 = vsel %vm356, %v679, 0
    %v684 = vsel %vm356, %v681, 0
    %686 = vmatprep.subr.mxu0 0.0
    %687 = vmatpush1.xpose.msra.mxu0 %v684
    %688 = vmatprep.subr.mxu0 0.0
    %689 = vmatpush1.xpose.msra.mxu0 0.0
    %690 = vmatprep.subr.mxu0 0.0
    %691 = vmatpush1.xpose.msra.mxu0 0.0
    %692 = vmatprep.subr.mxu0 0.0
    %693 = vmatpush1.xpose.msra.mxu0 0.0
    %694 = vmatprep.subr.mxu0 0.0
    %695 = vmatpush1.xpose.msra.mxu0 0.0
    %696 = vmatprep.subr.mxu0 0.0
    %697 = vmatpush1.xpose.msra.mxu0 0.0
    %698 = vmatprep.subr.mxu0 0.0
    %699 = vmatpush1.xpose.msra.mxu0 0.0
    %700 = vmatprep.subr.mxu0 0.0
    %701 = vmatpush1.xpose.msra.mxu0 0.0
    %702 = vmatprep.subr.mxu0 0.0
    %703 = vmatpush1.xpose.msra.mxu0 0.0
    %704 = vmatprep.subr.mxu0 0.0
    %705 = vmatpush1.xpose.msra.mxu0 0.0
    %706 = vmatprep.subr.mxu0 0.0
    %707 = vmatpush1.xpose.msra.mxu0 0.0
    %708 = vmatprep.subr.mxu0 0.0
    %709 = vmatpush1.xpose.msra.mxu0 0.0
    %710 = vmatprep.subr.mxu0 0.0
    %711 = vmatpush1.xpose.msra.mxu0 0.0
    %712 = vmatprep.subr.mxu0 0.0
    %713 = vmatpush1.xpose.msra.mxu0 0.0
    %714 = vmatprep.subr.mxu0 0.0
    %715 = vmatpush1.xpose.msra.mxu0 0.0
    %716 = vmatprep.subr.mxu0 0.0
    %717 = vmatpush1.xpose.msra.mxu0 0.0
    %718 = vmatprep.subr.mxu0 0.0
    %719 = vmatpush1.xpose.msra.mxu0 0.0
    %720 = vmatprep.subr.mxu0 0.0
    %721 = vmatpush1.xpose.msra.mxu0 0.0
    %722 = vmatprep.subr.mxu0 0.0
    %723 = vmatpush1.xpose.msra.mxu0 0.0
    %724 = vmatprep.subr.mxu0 0.0
    %725 = vmatpush1.xpose.msra.mxu0 0.0
    %726 = vmatprep.subr.mxu0 0.0
    %727 = vmatpush1.xpose.msra.mxu0 0.0
    %728 = vmatprep.subr.mxu0 0.0
    %729 = vmatpush1.xpose.msra.mxu0 0.0
    %730 = vmatprep.subr.mxu0 0.0
    %731 = vmatpush1.xpose.msra.mxu0 0.0
    %732 = vmatprep.subr.mxu0 0.0
    %733 = vmatpush1.xpose.msra.mxu0 0.0
    %734 = vmatprep.subr.mxu0 0.0
    %735 = vmatpush1.xpose.msra.mxu0 0.0
    %736 = vmatprep.subr.mxu0 0.0
    %737 = vmatpush1.xpose.msra.mxu0 0.0
    %738 = vmatprep.subr.mxu0 0.0
    %739 = vmatpush1.xpose.msra.mxu0 0.0
    %740 = vmatprep.subr.mxu0 0.0
    %741 = vmatpush1.xpose.msra.mxu0 0.0
    %742 = vmatprep.subr.mxu0 0.0
    %743 = vmatpush1.xpose.msra.mxu0 0.0
    %744 = vmatprep.subr.mxu0 0.0
    %745 = vmatpush1.xpose.msra.mxu0 0.0
    %746 = vmatprep.subr.mxu0 0.0
    %747 = vmatpush1.xpose.msra.mxu0 0.0
    %748 = vmatprep.subr.mxu0 0.0
    %749 = vmatpush1.xpose.msra.mxu0 0.0
    %750 = vmatprep.mubr.f32.mxu0 0.0
    %751 = vmatmul.mubr.f32.gmra.mrb[0].mxu0 %v682
    %v752 = vpop.f32.mrb[0].mxu0
    %v753 = vadd.f32 0.0, %v752
    %v754 = vpop.f32.mrb[0].mxu0
    %755 = vdwg.mxu0
    %756 = vrot.lane.b32.xlu0 %v352, 120
    %v757 = vpop.permute.xlu0 %756
    %758 = vrot.lane.b32.xlu0 %v255, 88
    %v759 = vpop.permute.xlu0 %758
    %v760 = vsel %vm356, %v757, 0
    %v762 = vsel %vm356, %v759, 0
    %764 = vmatprep.subr.mxu0 0.0
    %765 = vmatpush1.xpose.msra.mxu0 %v762
    %766 = vmatprep.subr.mxu0 0.0
    %767 = vmatpush1.xpose.msra.mxu0 0.0
    %768 = vmatprep.subr.mxu0 0.0
    %769 = vmatpush1.xpose.msra.mxu0 0.0
    %770 = vmatprep.subr.mxu0 0.0
    %771 = vmatpush1.xpose.msra.mxu0 0.0
    %772 = vmatprep.subr.mxu0 0.0
    %773 = vmatpush1.xpose.msra.mxu0 0.0
    %774 = vmatprep.subr.mxu0 0.0
    %775 = vmatpush1.xpose.msra.mxu0 0.0
    %776 = vmatprep.subr.mxu0 0.0
    %777 = vmatpush1.xpose.msra.mxu0 0.0
    %778 = vmatprep.subr.mxu0 0.0
    %779 = vmatpush1.xpose.msra.mxu0 0.0
    %780 = vmatprep.subr.mxu0 0.0
    %781 = vmatpush1.xpose.msra.mxu0 0.0
    %782 = vmatprep.subr.mxu0 0.0
    %783 = vmatpush1.xpose.msra.mxu0 0.0
    %784 = vmatprep.subr.mxu0 0.0
    %785 = vmatpush1.xpose.msra.mxu0 0.0
    %786 = vmatprep.subr.mxu0 0.0
    %787 = vmatpush1.xpose.msra.mxu0 0.0
    %788 = vmatprep.subr.mxu0 0.0
    %789 = vmatpush1.xpose.msra.mxu0 0.0
    %790 = vmatprep.subr.mxu0 0.0
    %791 = vmatpush1.xpose.msra.mxu0 0.0
    %792 = vmatprep.subr.mxu0 0.0
    %793 = vmatpush1.xpose.msra.mxu0 0.0
    %794 = vmatprep.subr.mxu0 0.0
    %795 = vmatpush1.xpose.msra.mxu0 0.0
    %796 = vmatprep.subr.mxu0 0.0
    %797 = vmatpush1.xpose.msra.mxu0 0.0
    %798 = vmatprep.subr.mxu0 0.0
    %799 = vmatpush1.xpose.msra.mxu0 0.0
    %800 = vmatprep.subr.mxu0 0.0
    %801 = vmatpush1.xpose.msra.mxu0 0.0
    %802 = vmatprep.subr.mxu0 0.0
    %803 = vmatpush1.xpose.msra.mxu0 0.0
    %804 = vmatprep.subr.mxu0 0.0
    %805 = vmatpush1.xpose.msra.mxu0 0.0
    %806 = vmatprep.subr.mxu0 0.0
    %807 = vmatpush1.xpose.msra.mxu0 0.0
    %808 = vmatprep.subr.mxu0 0.0
    %809 = vmatpush1.xpose.msra.mxu0 0.0
    %810 = vmatprep.subr.mxu0 0.0
    %811 = vmatpush1.xpose.msra.mxu0 0.0
    %812 = vmatprep.subr.mxu0 0.0
    %813 = vmatpush1.xpose.msra.mxu0 0.0
    %814 = vmatprep.subr.mxu0 0.0
    %815 = vmatpush1.xpose.msra.mxu0 0.0
    %816 = vmatprep.subr.mxu0 0.0
    %817 = vmatpush1.xpose.msra.mxu0 0.0
    %818 = vmatprep.subr.mxu0 0.0
    %819 = vmatpush1.xpose.msra.mxu0 0.0
    %820 = vmatprep.subr.mxu0 0.0
    %821 = vmatpush1.xpose.msra.mxu0 0.0
    %822 = vmatprep.subr.mxu0 0.0
    %823 = vmatpush1.xpose.msra.mxu0 0.0
    %824 = vmatprep.subr.mxu0 0.0
    %825 = vmatpush1.xpose.msra.mxu0 0.0
    %826 = vmatprep.subr.mxu0 0.0
    %827 = vmatpush1.xpose.msra.mxu0 0.0
    %828 = vmatprep.mubr.f32.mxu0 0.0
    %829 = vmatmul.mubr.f32.gmra.mrb[0].mxu0 %v760
    %v830 = vpop.f32.mrb[0].mxu0
    %v831 = vadd.f32 0.0, %v830
    %v832 = vpop.f32.mrb[0].mxu0
    %833 = vdwg.mxu0
    %v834 = vsel %vm356, %v753, -inf
    %835 = vmax.xlane.f32.xlu0 %v834
    %v836 = vpop.xlane.xlu0 %835
    %v837 = vsel %vm356, %v831, -inf
    %838 = vmax.xlane.f32.xlu0 %v837
    %v839 = vpop.xlane.xlu0 %838
    %v840 = vsub.f32 %v753, %v836
    %v841 = vsub.f32 %v831, %v839
    %v842 = vmul.f32 %v840, 1.442695
    %v843 = vpow.pop %v842
    %v844 = vmul.f32 %v841, 1.442695
    %v845 = vpow.pop %v844
    %v846 = vsel %vm356, %v843, 0.0
    %847 = vadd.xlane.f32.xlu0 %v846
    %v848 = vpop.xlane.xlu0 %847
    %v849 = vsel %vm356, %v845, 0.0
    %850 = vadd.xlane.f32.xlu0 %v849
    %v851 = vpop.xlane.xlu0 %850
    %v852 = vrcp.pop %v848
    %v853 = vrcp.pop %v851
    %v854 = vmul.f32 %v843, %v852
    %v855 = vmul.f32 %v845, %v853
    %857 = vrot.lane.b32.xlu0 %v339, 120
    %v858 = vpop.permute.xlu0 %857
    %v861 = vsel %vm356, %v854, 0
    %863 = vmatprep.subr.mxu0 0.0
    %864 = vmatpush1.msra.mxu0 %v858
    %865 = vmatprep.subr.mxu0 0.0
    %866 = vmatpush1.msra.mxu0 0.0
    %867 = vmatprep.subr.mxu0 0.0
    %868 = vmatpush1.msra.mxu0 0.0
    %869 = vmatprep.subr.mxu0 0.0
    %870 = vmatpush1.msra.mxu0 0.0
    %871 = vmatprep.subr.mxu0 0.0
    %872 = vmatpush1.msra.mxu0 0.0
    %873 = vmatprep.subr.mxu0 0.0
    %874 = vmatpush1.msra.mxu0 0.0
    %875 = vmatprep.subr.mxu0 0.0
    %876 = vmatpush1.msra.mxu0 0.0
    %877 = vmatprep.subr.mxu0 0.0
    %878 = vmatpush1.msra.mxu0 0.0
    %879 = vmatprep.subr.mxu0 0.0
    %880 = vmatpush1.msra.mxu0 0.0
    %881 = vmatprep.subr.mxu0 0.0
    %882 = vmatpush1.msra.mxu0 0.0
    %883 = vmatprep.subr.mxu0 0.0
    %884 = vmatpush1.msra.mxu0 0.0
    %885 = vmatprep.subr.mxu0 0.0
    %886 = vmatpush1.msra.mxu0 0.0
    %887 = vmatprep.subr.mxu0 0.0
    %888 = vmatpush1.msra.mxu0 0.0
    %889 = vmatprep.subr.mxu0 0.0
    %890 = vmatpush1.msra.mxu0 0.0
    %891 = vmatprep.subr.mxu0 0.0
    %892 = vmatpush1.msra.mxu0 0.0
    %893 = vmatprep.subr.mxu0 0.0
    %894 = vmatpush1.msra.mxu0 0.0
    %895 = vmatprep.subr.mxu0 0.0
    %896 = vmatpush1.msra.mxu0 0.0
    %897 = vmatprep.subr.mxu0 0.0
    %898 = vmatpush1.msra.mxu0 0.0
    %899 = vmatprep.subr.mxu0 0.0
    %900 = vmatpush1.msra.mxu0 0.0
    %901 = vmatprep.subr.mxu0 0.0
    %902 = vmatpush1.msra.mxu0 0.0
    %903 = vmatprep.subr.mxu0 0.0
    %904 = vmatpush1.msra.mxu0 0.0
    %905 = vmatprep.subr.mxu0 0.0
    %906 = vmatpush1.msra.mxu0 0.0
    %907 = vmatprep.subr.mxu0 0.0
    %908 = vmatpush1.msra.mxu0 0.0
    %909 = vmatprep.subr.mxu0 0.0
    %910 = vmatpush1.msra.mxu0 0.0
    %911 = vmatprep.subr.mxu0 0.0
    %912 = vmatpush1.msra.mxu0 0.0
    %913 = vmatprep.subr.mxu0 0.0
    %914 = vmatpush1.msra.mxu0 0.0
    %915 = vmatprep.subr.mxu0 0.0
    %916 = vmatpush1.msra.mxu0 0.0
    %917 = vmatprep.subr.mxu0 0.0
    %918 = vmatpush1.msra.mxu0 0.0
    %919 = vmatprep.subr.mxu0 0.0
    %920 = vmatpush1.msra.mxu0 0.0
    %921 = vmatprep.subr.mxu0 0.0
    %922 = vmatpush1.msra.mxu0 0.0
    %923 = vmatprep.subr.mxu0 0.0
    %924 = vmatpush1.msra.mxu0 0.0
    %925 = vmatprep.subr.mxu0 0.0
    %926 = vmatpush1.msra.mxu0 0.0
    %927 = vmatprep.mubr.f32.mxu0 0.0
    %928 = vmatmul.mubr.f32.gmra.mrb[0].mxu0 %v861
    %v929 = vpop.f32.mrb[0].mxu0
    %v930 = vadd.f32 0.0, %v929
    %v931 = vpop.f32.mrb[0].mxu0
    %932 = vdwg.mxu0
    %934 = vrot.lane.b32.xlu0 %v344, 120
    %v935 = vpop.permute.xlu0 %934
    %v938 = vsel %vm356, %v855, 0
    %940 = vmatprep.subr.mxu0 0.0
    %941 = vmatpush1.msra.mxu0 %v935
    %942 = vmatprep.subr.mxu0 0.0
    %943 = vmatpush1.msra.mxu0 0.0
    %944 = vmatprep.subr.mxu0 0.0
    %945 = vmatpush1.msra.mxu0 0.0
    %946 = vmatprep.subr.mxu0 0.0
    %947 = vmatpush1.msra.mxu0 0.0
    %948 = vmatprep.subr.mxu0 0.0
    %949 = vmatpush1.msra.mxu0 0.0
    %950 = vmatprep.subr.mxu0 0.0
    %951 = vmatpush1.msra.mxu0 0.0
    %952 = vmatprep.subr.mxu0 0.0
    %953 = vmatpush1.msra.mxu0 0.0
    %954 = vmatprep.subr.mxu0 0.0
    %955 = vmatpush1.msra.mxu0 0.0
    %956 = vmatprep.subr.mxu0 0.0
    %957 = vmatpush1.msra.mxu0 0.0
    %958 = vmatprep.subr.mxu0 0.0
    %959 = vmatpush1.msra.mxu0 0.0
    %960 = vmatprep.subr.mxu0 0.0
    %961 = vmatpush1.msra.mxu0 0.0
    %962 = vmatprep.subr.mxu0 0.0
    %963 = vmatpush1.msra.mxu0 0.0
    %964 = vmatprep.subr.mxu0 0.0
    %965 = vmatpush1.msra.mxu0 0.0
    %966 = vmatprep.subr.mxu0 0.0
    %967 = vmatpush1.msra.mxu0 0.0
    %968 = vmatprep.subr.mxu0 0.0
    %969 = vmatpush1.msra.mxu0 0.0
    %970 = vmatprep.subr.mxu0 0.0
    %971 = vmatpush1.msra.mxu0 0.0
    %972 = vmatprep.subr.mxu0 0.0
    %973 = vmatpush1.msra.mxu0 0.0
    %974 = vmatprep.subr.mxu0 0.0
    %975 = vmatpush1.msra.mxu0 0.0
    %976 = vmatprep.subr.mxu0 0.0
    %977 = vmatpush1.msra.mxu0 0.0
    %978 = vmatprep.subr.mxu0 0.0
    %979 = vmatpush1.msra.mxu0 0.0
    %980 = vmatprep.subr.mxu0 0.0
    %981 = vmatpush1.msra.mxu0 0.0
    %982 = vmatprep.subr.mxu0 0.0
    %983 = vmatpush1.msra.mxu0 0.0
    %984 = vmatprep.subr.mxu0 0.0
    %985 = vmatpush1.msra.mxu0 0.0
    %986 = vmatprep.subr.mxu0 0.0
    %987 = vmatpush1.msra.mxu0 0.0
    %988 = vmatprep.subr.mxu0 0.0
    %989 = vmatpush1.msra.mxu0 0.0
    %990 = vmatprep.subr.mxu0 0.0
    %991 = vmatpush1.msra.mxu0 0.0
    %992 = vmatprep.subr.mxu0 0.0
    %993 = vmatpush1.msra.mxu0 0.0
    %994 = vmatprep.subr.mxu0 0.0
    %995 = vmatpush1.msra.mxu0 0.0
    %996 = vmatprep.subr.mxu0 0.0
    %997 = vmatpush1.msra.mxu0 0.0
    %998 = vmatprep.subr.mxu0 0.0
    %999 = vmatpush1.msra.mxu0 0.0
    %1000 = vmatprep.subr.mxu0 0.0
    %1001 = vmatpush1.msra.mxu0 0.0
    %1002 = vmatprep.subr.mxu0 0.0
    %1003 = vmatpush1.msra.mxu0 0.0
    %1004 = vmatprep.mubr.f32.mxu0 0.0
    %1005 = vmatmul.mubr.f32.gmra.mrb[0].mxu0 %v938
    %v1006 = vpop.f32.mrb[0].mxu0
    %v1007 = vadd.f32 0.0, %v1006
    %v1008 = vpop.f32.mrb[0].mxu0
    %1009 = vdwg.mxu0
    %v1011 = vsel %vm356, %v930, 0
    %v1014 = vsel %vm356, %v1007, 0
    %1016 = vmatprep.subr.mxu0 0.0
    %1017 = vmatpush1.msra.mxu0 %v348
    %1018 = vmatprep.subr.mxu0 0.0
    %1019 = vmatpush1.msra.mxu0 0.0
    %1020 = vmatprep.subr.mxu0 0.0
    %1021 = vmatpush1.msra.mxu0 0.0
    %1022 = vmatprep.subr.mxu0 0.0
    %1023 = vmatpush1.msra.mxu0 0.0
    %1024 = vmatprep.subr.mxu0 0.0
    %1025 = vmatpush1.msra.mxu0 0.0
    %1026 = vmatprep.subr.mxu0 0.0
    %1027 = vmatpush1.msra.mxu0 0.0
    %1028 = vmatprep.subr.mxu0 0.0
    %1029 = vmatpush1.msra.mxu0 0.0
    %1030 = vmatprep.subr.mxu0 0.0
    %1031 = vmatpush1.msra.mxu0 0.0
    %1032 = vmatprep.subr.mxu0 0.0
    %1033 = vmatpush1.msra.mxu0 0.0
    %1034 = vmatprep.subr.mxu0 0.0
    %1035 = vmatpush1.msra.mxu0 0.0
    %1036 = vmatprep.subr.mxu0 0.0
    %1037 = vmatpush1.msra.mxu0 0.0
    %1038 = vmatprep.subr.mxu0 0.0
    %1039 = vmatpush1.msra.mxu0 0.0
    %1040 = vmatprep.subr.mxu0 0.0
    %1041 = vmatpush1.msra.mxu0 0.0
    %1042 = vmatprep.subr.mxu0 0.0
    %1043 = vmatpush1.msra.mxu0 0.0
    %1044 = vmatprep.subr.mxu0 0.0
    %1045 = vmatpush1.msra.mxu0 0.0
    %1046 = vmatprep.subr.mxu0 0.0
    %1047 = vmatpush1.msra.mxu0 0.0
    %1048 = vmatprep.subr.mxu0 0.0
    %1049 = vmatpush1.msra.mxu0 0.0
    %1050 = vmatprep.subr.mxu0 0.0
    %1051 = vmatpush1.msra.mxu0 0.0
    %1052 = vmatprep.subr.mxu0 0.0
    %1053 = vmatpush1.msra.mxu0 0.0
    %1054 = vmatprep.subr.mxu0 0.0
    %1055 = vmatpush1.msra.mxu0 0.0
    %1056 = vmatprep.subr.mxu0 0.0
    %1057 = vmatpush1.msra.mxu0 0.0
    %1058 = vmatprep.subr.mxu0 0.0
    %1059 = vmatpush1.msra.mxu0 0.0
    %1060 = vmatprep.subr.mxu0 0.0
    %1061 = vmatpush1.msra.mxu0 0.0
    %1062 = vmatprep.subr.mxu0 0.0
    %1063 = vmatpush1.msra.mxu0 0.0
    %1064 = vmatprep.subr.mxu0 0.0
    %1065 = vmatpush1.msra.mxu0 0.0
    %1066 = vmatprep.subr.mxu0 0.0
    %1067 = vmatpush1.msra.mxu0 0.0
    %1068 = vmatprep.subr.mxu0 0.0
    %1069 = vmatpush1.msra.mxu0 0.0
    %1070 = vmatprep.subr.mxu0 0.0
    %1071 = vmatpush1.msra.mxu0 0.0
    %1072 = vmatprep.subr.mxu0 0.0
    %1073 = vmatpush1.msra.mxu0 0.0
    %1074 = vmatprep.subr.mxu0 0.0
    %1075 = vmatpush1.msra.mxu0 0.0
    %1076 = vmatprep.subr.mxu0 0.0
    %1077 = vmatpush1.msra.mxu0 0.0
    %1078 = vmatprep.subr.mxu0 0.0
    %1079 = vmatpush1.msra.mxu0 0.0
    %1080 = vmatprep.mubr.f32.mxu0 0.0
    %1081 = vmatmul.mubr.f32.gmra.mrb[0].mxu0 %v1011
    %v1082 = vpop.f32.mrb[0].mxu0
    %v1083 = vadd.f32 0.0, %v1082
    %v1084 = vpop.f32.mrb[0].mxu0
    %1085 = vmatprep.mubr.f32.mxu0 0.0
    %1086 = vmatmul.mubr.f32.gmra.mrb[0].mxu0 %v1014
    %v1087 = vpop.f32.mrb[0].mxu0
    %v1088 = vadd.f32 0.0, %v1087
    %v1089 = vpop.f32.mrb[0].mxu0
    %1090 = vdwg.mxu0
    %v1092 = vsel %vm356, %v602, 0
    %v1095 = vsel %vm356, %v675, 0
    %1097 = vmatprep.subr.mxu0 0.0
    %1098 = vmatpush1.msra.mxu0 %v347
    %1099 = vmatprep.subr.mxu0 0.0
    %1100 = vmatpush1.msra.mxu0 0.0
    %1101 = vmatprep.subr.mxu0 0.0
    %1102 = vmatpush1.msra.mxu0 0.0
    %1103 = vmatprep.subr.mxu0 0.0
    %1104 = vmatpush1.msra.mxu0 0.0
    %1105 = vmatprep.subr.mxu0 0.0
    %1106 = vmatpush1.msra.mxu0 0.0
    %1107 = vmatprep.subr.mxu0 0.0
    %1108 = vmatpush1.msra.mxu0 0.0
    %1109 = vmatprep.subr.mxu0 0.0
    %1110 = vmatpush1.msra.mxu0 0.0
    %1111 = vmatprep.subr.mxu0 0.0
    %1112 = vmatpush1.msra.mxu0 0.0
    %1113 = vmatprep.subr.mxu0 0.0
    %1114 = vmatpush1.msra.mxu0 0.0
    %1115 = vmatprep.subr.mxu0 0.0
    %1116 = vmatpush1.msra.mxu0 0.0
    %1117 = vmatprep.subr.mxu0 0.0
    %1118 = vmatpush1.msra.mxu0 0.0
    %1119 = vmatprep.subr.mxu0 0.0
    %1120 = vmatpush1.msra.mxu0 0.0
    %1121 = vmatprep.subr.mxu0 0.0
    %1122 = vmatpush1.msra.mxu0 0.0
    %1123 = vmatprep.subr.mxu0 0.0
    %1124 = vmatpush1.msra.mxu0 0.0
    %1125 = vmatprep.subr.mxu0 0.0
    %1126 = vmatpush1.msra.mxu0 0.0
    %1127 = vmatprep.subr.mxu0 0.0
    %1128 = vmatpush1.msra.mxu0 0.0
    %1129 = vmatprep.subr.mxu0 0.0
    %1130 = vmatpush1.msra.mxu0 0.0
    %1131 = vmatprep.subr.mxu0 0.0
    %1132 = vmatpush1.msra.mxu0 0.0
    %1133 = vmatprep.subr.mxu0 0.0
    %1134 = vmatpush1.msra.mxu0 0.0
    %1135 = vmatprep.subr.mxu0 0.0
    %1136 = vmatpush1.msra.mxu0 0.0
    %1137 = vmatprep.subr.mxu0 0.0
    %1138 = vmatpush1.msra.mxu0 0.0
    %1139 = vmatprep.subr.mxu0 0.0
    %1140 = vmatpush1.msra.mxu0 0.0
    %1141 = vmatprep.subr.mxu0 0.0
    %1142 = vmatpush1.msra.mxu0 0.0
    %1143 = vmatprep.subr.mxu0 0.0
    %1144 = vmatpush1.msra.mxu0 0.0
    %1145 = vmatprep.subr.mxu0 0.0
    %1146 = vmatpush1.msra.mxu0 0.0
    %1147 = vmatprep.subr.mxu0 0.0
    %1148 = vmatpush1.msra.mxu0 0.0
    %1149 = vmatprep.subr.mxu0 0.0
    %1150 = vmatpush1.msra.mxu0 0.0
    %1151 = vmatprep.subr.mxu0 0.0
    %1152 = vmatpush1.msra.mxu0 0.0
    %1153 = vmatprep.subr.mxu0 0.0
    %1154 = vmatpush1.msra.mxu0 0.0
    %1155 = vmatprep.subr.mxu0 0.0
    %1156 = vmatpush1.msra.mxu0 0.0
    %1157 = vmatprep.subr.mxu0 0.0
    %1158 = vmatpush1.msra.mxu0 0.0
    %1159 = vmatprep.subr.mxu0 0.0
    %1160 = vmatpush1.msra.mxu0 0.0
    %1161 = vmatprep.mubr.f32.mxu0 0.0
    %1162 = vmatmul.mubr.f32.gmra.mrb[0].mxu0 %v1092
    %v1163 = vpop.f32.mrb[0].mxu0
    %v1164 = vadd.f32 %v1083, %v1163
    %v1165 = vpop.f32.mrb[0].mxu0
    %1166 = vmatprep.mubr.f32.mxu0 0.0
    %1167 = vmatmul.mubr.f32.gmra.mrb[0].mxu0 %v1095
    %v1168 = vpop.f32.mrb[0].mxu0
    %v1169 = vadd.f32 %v1088, %v1168
    %v1170 = vpop.f32.mrb[0].mxu0
    %1171 = vdwg.mxu0
    %1172 = vrot.lane.b32.xlu0 %v351, 112
    %v1173 = vpop.permute.xlu0 %1172
    %1174 = vrot.lane.b32.xlu0 %v250, 80
    %v1175 = vpop.permute.xlu0 %1174
    %v1176 = vsel %vm356, %v1173, 0
    %v1178 = vsel %vm356, %v1175, 0
    %1180 = vmatprep.subr.mxu0 0.0
    %1181 = vmatpush1.xpose.msra.mxu0 %v1178
    %1182 = vmatprep.subr.mxu0 0.0
    %1183 = vmatpush1.xpose.msra.mxu0 0.0
    %1184 = vmatprep.subr.mxu0 0.0
    %1185 = vmatpush1.xpose.msra.mxu0 0.0
    %1186 = vmatprep.subr.mxu0 0.0
    %1187 = vmatpush1.xpose.msra.mxu0 0.0
    %1188 = vmatprep.subr.mxu0 0.0
    %1189 = vmatpush1.xpose.msra.mxu0 0.0
    %1190 = vmatprep.subr.mxu0 0.0
    %1191 = vmatpush1.xpose.msra.mxu0 0.0
    %1192 = vmatprep.subr.mxu0 0.0
    %1193 = vmatpush1.xpose.msra.mxu0 0.0
    %1194 = vmatprep.subr.mxu0 0.0
    %1195 = vmatpush1.xpose.msra.mxu0 0.0
    %1196 = vmatprep.subr.mxu0 0.0
    %1197 = vmatpush1.xpose.msra.mxu0 0.0
    %1198 = vmatprep.subr.mxu0 0.0
    %1199 = vmatpush1.xpose.msra.mxu0 0.0
    %1200 = vmatprep.subr.mxu0 0.0
    %1201 = vmatpush1.xpose.msra.mxu0 0.0
    %1202 = vmatprep.subr.mxu0 0.0
    %1203 = vmatpush1.xpose.msra.mxu0 0.0
    %1204 = vmatprep.subr.mxu0 0.0
    %1205 = vmatpush1.xpose.msra.mxu0 0.0
    %1206 = vmatprep.subr.mxu0 0.0
    %1207 = vmatpush1.xpose.msra.mxu0 0.0
    %1208 = vmatprep.subr.mxu0 0.0
    %1209 = vmatpush1.xpose.msra.mxu0 0.0
    %1210 = vmatprep.subr.mxu0 0.0
    %1211 = vmatpush1.xpose.msra.mxu0 0.0
    %1212 = vmatprep.subr.mxu0 0.0
    %1213 = vmatpush1.xpose.msra.mxu0 0.0
    %1214 = vmatprep.subr.mxu0 0.0
    %1215 = vmatpush1.xpose.msra.mxu0 0.0
    %1216 = vmatprep.subr.mxu0 0.0
    %1217 = vmatpush1.xpose.msra.mxu0 0.0
    %1218 = vmatprep.subr.mxu0 0.0
    %1219 = vmatpush1.xpose.msra.mxu0 0.0
    %1220 = vmatprep.subr.mxu0 0.0
    %1221 = vmatpush1.xpose.msra.mxu0 0.0
    %1222 = vmatprep.subr.mxu0 0.0
    %1223 = vmatpush1.xpose.msra.mxu0 0.0
    %1224 = vmatprep.subr.mxu0 0.0
    %1225 = vmatpush1.xpose.msra.mxu0 0.0
    %1226 = vmatprep.subr.mxu0 0.0
    %1227 = vmatpush1.xpose.msra.mxu0 0.0
    %1228 = vmatprep.subr.mxu0 0.0
    %1229 = vmatpush1.xpose.msra.mxu0 0.0
    %1230 = vmatprep.subr.mxu0 0.0
    %1231 = vmatpush1.xpose.msra.mxu0 0.0
    %1232 = vmatprep.subr.mxu0 0.0
    %1233 = vmatpush1.xpose.msra.mxu0 0.0
    %1234 = vmatprep.subr.mxu0 0.0
    %1235 = vmatpush1.xpose.msra.mxu0 0.0
    %1236 = vmatprep.subr.mxu0 0.0
    %1237 = vmatpush1.xpose.msra.mxu0 0.0
    %1238 = vmatprep.subr.mxu0 0.0
    %1239 = vmatpush1.xpose.msra.mxu0 0.0
    %1240 = vmatprep.subr.mxu0 0.0
    %1241 = vmatpush1.xpose.msra.mxu0 0.0
    %1242 = vmatprep.subr.mxu0 0.0
    %1243 = vmatpush1.xpose.msra.mxu0 0.0
    %1244 = vmatprep.mubr.f32.mxu0 0.0
    %1245 = vmatmul.mubr.f32.gmra.mrb[0].mxu0 %v1176
    %v1246 = vpop.f32.mrb[0].mxu0
    %v1247 = vadd.f32 0.0, %v1246
    %v1248 = vpop.f32.mrb[0].mxu0
    %1249 = vdwg.mxu0
    %1250 = vrot.lane.b32.xlu0 %v352, 112
    %v1251 = vpop.permute.xlu0 %1250
    %1252 = vrot.lane.b32.xlu0 %v255, 80
    %v1253 = vpop.permute.xlu0 %1252
    %v1254 = vsel %vm356, %v1251, 0
    %v1256 = vsel %vm356, %v1253, 0
    %1258 = vmatprep.subr.mxu0 0.0
    %1259 = vmatpush1.xpose.msra.mxu0 %v1256
    %1260 = vmatprep.subr.mxu0 0.0
    %1261 = vmatpush1.xpose.msra.mxu0 0.0
    %1262 = vmatprep.subr.mxu0 0.0
    %1263 = vmatpush1.xpose.msra.mxu0 0.0
    %1264 = vmatprep.subr.mxu0 0.0
    %1265 = vmatpush1.xpose.msra.mxu0 0.0
    %1266 = vmatprep.subr.mxu0 0.0
    %1267 = vmatpush1.xpose.msra.mxu0 0.0
    %1268 = vmatprep.subr.mxu0 0.0
    %1269 = vmatpush1.xpose.msra.mxu0 0.0
    %1270 = vmatprep.subr.mxu0 0.0
    %1271 = vmatpush1.xpose.msra.mxu0 0.0
    %1272 = vmatprep.subr.mxu0 0.0
    %1273 = vmatpush1.xpose.msra.mxu0 0.0
    %1274 = vmatprep.subr.mxu0 0.0
    %1275 = vmatpush1.xpose.msra.mxu0 0.0
    %1276 = vmatprep.subr.mxu0 0.0
    %1277 = vmatpush1.xpose.msra.mxu0 0.0
    %1278 = vmatprep.subr.mxu0 0.0
    %1279 = vmatpush1.xpose.msra.mxu0 0.0
    %1280 = vmatprep.subr.mxu0 0.0
    %1281 = vmatpush1.xpose.msra.mxu0 0.0
    %1282 = vmatprep.subr.mxu0 0.0
    %1283 = vmatpush1.xpose.msra.mxu0 0.0
    %1284 = vmatprep.subr.mxu0 0.0
    %1285 = vmatpush1.xpose.msra.mxu0 0.0
    %1286 = vmatprep.subr.mxu0 0.0
    %1287 = vmatpush1.xpose.msra.mxu0 0.0
    %1288 = vmatprep.subr.mxu0 0.0
    %1289 = vmatpush1.xpose.msra.mxu0 0.0
    %1290 = vmatprep.subr.mxu0 0.0
    %1291 = vmatpush1.xpose.msra.mxu0 0.0
    %1292 = vmatprep.subr.mxu0 0.0
    %1293 = vmatpush1.xpose.msra.mxu0 0.0
    %1294 = vmatprep.subr.mxu0 0.0
    %1295 = vmatpush1.xpose.msra.mxu0 0.0
    %1296 = vmatprep.subr.mxu0 0.0
    %1297 = vmatpush1.xpose.msra.mxu0 0.0
    %1298 = vmatprep.subr.mxu0 0.0
    %1299 = vmatpush1.xpose.msra.mxu0 0.0
    %1300 = vmatprep.subr.mxu0 0.0
    %1301 = vmatpush1.xpose.msra.mxu0 0.0
    %1302 = vmatprep.subr.mxu0 0.0
    %1303 = vmatpush1.xpose.msra.mxu0 0.0
    %1304 = vmatprep.subr.mxu0 0.0
    %1305 = vmatpush1.xpose.msra.mxu0 0.0
    %1306 = vmatprep.subr.mxu0 0.0
    %1307 = vmatpush1.xpose.msra.mxu0 0.0
    %1308 = vmatprep.subr.mxu0 0.0
    %1309 = vmatpush1.xpose.msra.mxu0 0.0
    %1310 = vmatprep.subr.mxu0 0.0
    %1311 = vmatpush1.xpose.msra.mxu0 0.0
    %1312 = vmatprep.subr.mxu0 0.0
    %1313 = vmatpush1.xpose.msra.mxu0 0.0
    %1314 = vmatprep.subr.mxu0 0.0
    %1315 = vmatpush1.xpose.msra.mxu0 0.0
    %1316 = vmatprep.subr.mxu0 0.0
    %1317 = vmatpush1.xpose.msra.mxu0 0.0
    %1318 = vmatprep.subr.mxu0 0.0
    %1319 = vmatpush1.xpose.msra.mxu0 0.0
    %1320 = vmatprep.subr.mxu0 0.0
    %1321 = vmatpush1.xpose.msra.mxu0 0.0
    %1322 = vmatprep.mubr.f32.mxu0 0.0
    %1323 = vmatmul.mubr.f32.gmra.mrb[0].mxu0 %v1254
    %v1324 = vpop.f32.mrb[0].mxu0
    %v1325 = vadd.f32 0.0, %v1324
    %v1326 = vpop.f32.mrb[0].mxu0
    %1327 = vdwg.mxu0
    %v1328 = vsel %vm356, %v1247, -inf
    %1329 = vmax.xlane.f32.xlu0 %v1328
    %v1330 = vpop.xlane.xlu0 %1329
    %v1331 = vsel %vm356, %v1325, -inf
    %1332 = vmax.xlane.f32.xlu0 %v1331
    %v1333 = vpop.xlane.xlu0 %1332
    %v1334 = vsub.f32 %v1247, %v1330
    %v1335 = vsub.f32 %v1325, %v1333
    %v1336 = vmul.f32 %v1334, 1.442695
    %v1337 = vpow.pop %v1336
    %v1338 = vmul.f32 %v1335, 1.442695
    %v1339 = vpow.pop %v1338
    %v1340 = vsel %vm356, %v1337, 0.0
    %1341 = vadd.xlane.f32.xlu0 %v1340
    %v1342 = vpop.xlane.xlu0 %1341
    %v1343 = vsel %vm356, %v1339, 0.0
    %1344 = vadd.xlane.f32.xlu0 %v1343
    %v1345 = vpop.xlane.xlu0 %1344
    %v1346 = vrcp.pop %v1342
    %v1347 = vrcp.pop %v1345
    %v1348 = vmul.f32 %v1337, %v1346
    %v1349 = vmul.f32 %v1339, %v1347
    %1350 = vrot.lane.b32.xlu0 %v339, 112
    %v1351 = vpop.permute.xlu0 %1350
    %v1354 = vsel %vm356, %v1348, 0
    %1356 = vmatprep.subr.mxu0 0.0
    %1357 = vmatpush1.msra.mxu0 %v1351
    %1358 = vmatprep.subr.mxu0 0.0
    %1359 = vmatpush1.msra.mxu0 0.0
    %1360 = vmatprep.subr.mxu0 0.0
    %1361 = vmatpush1.msra.mxu0 0.0
    %1362 = vmatprep.subr.mxu0 0.0
    %1363 = vmatpush1.msra.mxu0 0.0
    %1364 = vmatprep.subr.mxu0 0.0
    %1365 = vmatpush1.msra.mxu0 0.0
    %1366 = vmatprep.subr.mxu0 0.0
    %1367 = vmatpush1.msra.mxu0 0.0
    %1368 = vmatprep.subr.mxu0 0.0
    %1369 = vmatpush1.msra.mxu0 0.0
    %1370 = vmatprep.subr.mxu0 0.0
    %1371 = vmatpush1.msra.mxu0 0.0
    %1372 = vmatprep.subr.mxu0 0.0
    %1373 = vmatpush1.msra.mxu0 0.0
    %1374 = vmatprep.subr.mxu0 0.0
    %1375 = vmatpush1.msra.mxu0 0.0
    %1376 = vmatprep.subr.mxu0 0.0
    %1377 = vmatpush1.msra.mxu0 0.0
    %1378 = vmatprep.subr.mxu0 0.0
    %1379 = vmatpush1.msra.mxu0 0.0
    %1380 = vmatprep.subr.mxu0 0.0
    %1381 = vmatpush1.msra.mxu0 0.0
    %1382 = vmatprep.subr.mxu0 0.0
    %1383 = vmatpush1.msra.mxu0 0.0
    %1384 = vmatprep.subr.mxu0 0.0
    %1385 = vmatpush1.msra.mxu0 0.0
    %1386 = vmatprep.subr.mxu0 0.0
    %1387 = vmatpush1.msra.mxu0 0.0
    %1388 = vmatprep.subr.mxu0 0.0
    %1389 = vmatpush1.msra.mxu0 0.0
    %1390 = vmatprep.subr.mxu0 0.0
    %1391 = vmatpush1.msra.mxu0 0.0
    %1392 = vmatprep.subr.mxu0 0.0
    %1393 = vmatpush1.msra.mxu0 0.0
    %1394 = vmatprep.subr.mxu0 0.0
    %1395 = vmatpush1.msra.mxu0 0.0
    %1396 = vmatprep.subr.mxu0 0.0
    %1397 = vmatpush1.msra.mxu0 0.0
    %1398 = vmatprep.subr.mxu0 0.0
    %1399 = vmatpush1.msra.mxu0 0.0
    %1400 = vmatprep.subr.mxu0 0.0
    %1401 = vmatpush1.msra.mxu0 0.0
    %1402 = vmatprep.subr.mxu0 0.0
    %1403 = vmatpush1.msra.mxu0 0.0
    %1404 = vmatprep.subr.mxu0 0.0
    %1405 = vmatpush1.msra.mxu0 0.0
    %1406 = vmatprep.subr.mxu0 0.0
    %1407 = vmatpush1.msra.mxu0 0.0
    %1408 = vmatprep.subr.mxu0 0.0
    %1409 = vmatpush1.msra.mxu0 0.0
    %1410 = vmatprep.subr.mxu0 0.0
    %1411 = vmatpush1.msra.mxu0 0.0
    %1412 = vmatprep.subr.mxu0 0.0
    %1413 = vmatpush1.msra.mxu0 0.0
    %1414 = vmatprep.subr.mxu0 0.0
    %1415 = vmatpush1.msra.mxu0 0.0
    %1416 = vmatprep.subr.mxu0 0.0
    %1417 = vmatpush1.msra.mxu0 0.0
    %1418 = vmatprep.subr.mxu0 0.0
    %1419 = vmatpush1.msra.mxu0 0.0
    %1420 = vmatprep.mubr.f32.mxu0 0.0
    %1421 = vmatmul.mubr.f32.gmra.mrb[0].mxu0 %v1354
    %v1422 = vpop.f32.mrb[0].mxu0
    %v1423 = vadd.f32 0.0, %v1422
    %v1424 = vpop.f32.mrb[0].mxu0
    %1425 = vdwg.mxu0
    %1426 = vrot.lane.b32.xlu0 %v344, 112
    %v1427 = vpop.permute.xlu0 %1426
    %v1430 = vsel %vm356, %v1349, 0
    %1432 = vmatprep.subr.mxu0 0.0
    %1433 = vmatpush1.msra.mxu0 %v1427
    %1434 = vmatprep.subr.mxu0 0.0
    %1435 = vmatpush1.msra.mxu0 0.0
    %1436 = vmatprep.subr.mxu0 0.0
    %1437 = vmatpush1.msra.mxu0 0.0
    %1438 = vmatprep.subr.mxu0 0.0
    %1439 = vmatpush1.msra.mxu0 0.0
    %1440 = vmatprep.subr.mxu0 0.0
    %1441 = vmatpush1.msra.mxu0 0.0
    %1442 = vmatprep.subr.mxu0 0.0
    %1443 = vmatpush1.msra.mxu0 0.0
    %1444 = vmatprep.subr.mxu0 0.0
    %1445 = vmatpush1.msra.mxu0 0.0
    %1446 = vmatprep.subr.mxu0 0.0
    %1447 = vmatpush1.msra.mxu0 0.0
    %1448 = vmatprep.subr.mxu0 0.0
    %1449 = vmatpush1.msra.mxu0 0.0
    %1450 = vmatprep.subr.mxu0 0.0
    %1451 = vmatpush1.msra.mxu0 0.0
    %1452 = vmatprep.subr.mxu0 0.0
    %1453 = vmatpush1.msra.mxu0 0.0
    %1454 = vmatprep.subr.mxu0 0.0
    %1455 = vmatpush1.msra.mxu0 0.0
    %1456 = vmatprep.subr.mxu0 0.0
    %1457 = vmatpush1.msra.mxu0 0.0
    %1458 = vmatprep.subr.mxu0 0.0
    %1459 = vmatpush1.msra.mxu0 0.0
    %1460 = vmatprep.subr.mxu0 0.0
    %1461 = vmatpush1.msra.mxu0 0.0
    %1462 = vmatprep.subr.mxu0 0.0
    %1463 = vmatpush1.msra.mxu0 0.0
    %1464 = vmatprep.subr.mxu0 0.0
    %1465 = vmatpush1.msra.mxu0 0.0
    %1466 = vmatprep.subr.mxu0 0.0
    %1467 = vmatpush1.msra.mxu0 0.0
    %1468 = vmatprep.subr.mxu0 0.0
    %1469 = vmatpush1.msra.mxu0 0.0
    %1470 = vmatprep.subr.mxu0 0.0
    %1471 = vmatpush1.msra.mxu0 0.0
    %1472 = vmatprep.subr.mxu0 0.0
    %1473 = vmatpush1.msra.mxu0 0.0
    %1474 = vmatprep.subr.mxu0 0.0
    %1475 = vmatpush1.msra.mxu0 0.0
    %1476 = vmatprep.subr.mxu0 0.0
    %1477 = vmatpush1.msra.mxu0 0.0
    %1478 = vmatprep.subr.mxu0 0.0
    %1479 = vmatpush1.msra.mxu0 0.0
    %1480 = vmatprep.subr.mxu0 0.0
    %1481 = vmatpush1.msra.mxu0 0.0
    %1482 = vmatprep.subr.mxu0 0.0
    %1483 = vmatpush1.msra.mxu0 0.0
    %1484 = vmatprep.subr.mxu0 0.0
    %1485 = vmatpush1.msra.mxu0 0.0
    %1486 = vmatprep.subr.mxu0 0.0
    %1487 = vmatpush1.msra.mxu0 0.0
    %1488 = vmatprep.subr.mxu0 0.0
    %1489 = vmatpush1.msra.mxu0 0.0
    %1490 = vmatprep.subr.mxu0 0.0
    %1491 = vmatpush1.msra.mxu0 0.0
    %1492 = vmatprep.subr.mxu0 0.0
    %1493 = vmatpush1.msra.mxu0 0.0
    %1494 = vmatprep.subr.mxu0 0.0
    %1495 = vmatpush1.msra.mxu0 0.0
    %1496 = vmatprep.mubr.f32.mxu0 0.0
    %1497 = vmatmul.mubr.f32.gmra.mrb[0].mxu0 %v1430
    %v1498 = vpop.f32.mrb[0].mxu0
    %v1499 = vadd.f32 0.0, %v1498
    %v1500 = vpop.f32.mrb[0].mxu0
    %1501 = vdwg.mxu0
    %v1503 = vsel %vm356, %v1423, 0
    %v1506 = vsel %vm356, %v1499, 0
    %1508 = vmatprep.subr.mxu0 0.0
    %1509 = vmatpush1.msra.mxu0 %v349
    %1510 = vmatprep.subr.mxu0 0.0
    %1511 = vmatpush1.msra.mxu0 0.0
    %1512 = vmatprep.subr.mxu0 0.0
    %1513 = vmatpush1.msra.mxu0 0.0
    %1514 = vmatprep.subr.mxu0 0.0
    %1515 = vmatpush1.msra.mxu0 0.0
    %1516 = vmatprep.subr.mxu0 0.0
    %1517 = vmatpush1.msra.mxu0 0.0
    %1518 = vmatprep.subr.mxu0 0.0
    %1519 = vmatpush1.msra.mxu0 0.0
    %1520 = vmatprep.subr.mxu0 0.0
    %1521 = vmatpush1.msra.mxu0 0.0
    %1522 = vmatprep.subr.mxu0 0.0
    %1523 = vmatpush1.msra.mxu0 0.0
    %1524 = vmatprep.subr.mxu0 0.0
    %1525 = vmatpush1.msra.mxu0 0.0
    %1526 = vmatprep.subr.mxu0 0.0
    %1527 = vmatpush1.msra.mxu0 0.0
    %1528 = vmatprep.subr.mxu0 0.0
    %1529 = vmatpush1.msra.mxu0 0.0
    %1530 = vmatprep.subr.mxu0 0.0
    %1531 = vmatpush1.msra.mxu0 0.0
    %1532 = vmatprep.subr.mxu0 0.0
    %1533 = vmatpush1.msra.mxu0 0.0
    %1534 = vmatprep.subr.mxu0 0.0
    %1535 = vmatpush1.msra.mxu0 0.0
    %1536 = vmatprep.subr.mxu0 0.0
    %1537 = vmatpush1.msra.mxu0 0.0
    %1538 = vmatprep.subr.mxu0 0.0
    %1539 = vmatpush1.msra.mxu0 0.0
    %1540 = vmatprep.subr.mxu0 0.0
    %1541 = vmatpush1.msra.mxu0 0.0
    %1542 = vmatprep.subr.mxu0 0.0
    %1543 = vmatpush1.msra.mxu0 0.0
    %1544 = vmatprep.subr.mxu0 0.0
    %1545 = vmatpush1.msra.mxu0 0.0
    %1546 = vmatprep.subr.mxu0 0.0
    %1547 = vmatpush1.msra.mxu0 0.0
    %1548 = vmatprep.subr.mxu0 0.0
    %1549 = vmatpush1.msra.mxu0 0.0
    %1550 = vmatprep.subr.mxu0 0.0
    %1551 = vmatpush1.msra.mxu0 0.0
    %1552 = vmatprep.subr.mxu0 0.0
    %1553 = vmatpush1.msra.mxu0 0.0
    %1554 = vmatprep.subr.mxu0 0.0
    %1555 = vmatpush1.msra.mxu0 0.0
    %1556 = vmatprep.subr.mxu0 0.0
    %1557 = vmatpush1.msra.mxu0 0.0
    %1558 = vmatprep.subr.mxu0 0.0
    %1559 = vmatpush1.msra.mxu0 0.0
    %1560 = vmatprep.subr.mxu0 0.0
    %1561 = vmatpush1.msra.mxu0 0.0
    %1562 = vmatprep.subr.mxu0 0.0
    %1563 = vmatpush1.msra.mxu0 0.0
    %1564 = vmatprep.subr.mxu0 0.0
    %1565 = vmatpush1.msra.mxu0 0.0
    %1566 = vmatprep.subr.mxu0 0.0
    %1567 = vmatpush1.msra.mxu0 0.0
    %1568 = vmatprep.subr.mxu0 0.0
    %1569 = vmatpush1.msra.mxu0 0.0
    %1570 = vmatprep.subr.mxu0 0.0
    %1571 = vmatpush1.msra.mxu0 0.0
    %1572 = vmatprep.mubr.f32.mxu0 0.0
    %1573 = vmatmul.mubr.f32.gmra.mrb[0].mxu0 %v1503
    %v1574 = vpop.f32.mrb[0].mxu0
    %v1575 = vadd.f32 0.0, %v1574
    %v1576 = vpop.f32.mrb[0].mxu0
    %1577 = vmatprep.mubr.f32.mxu0 0.0
    %1578 = vmatmul.mubr.f32.gmra.mrb[0].mxu0 %v1506
    %v1579 = vpop.f32.mrb[0].mxu0
    %v1580 = vadd.f32 0.0, %v1579
    %v1581 = vpop.f32.mrb[0].mxu0
    %1582 = vdwg.mxu0
    %v1583 = vadd.f32 %v1164, %v1575
    %v1584 = vadd.f32 %v1169, %v1580
    %1585 = vrot.lane.b32.xlu0 %v351, 104
    %v1586 = vpop.permute.xlu0 %1585
    %1587 = vrot.lane.b32.xlu0 %v250, 72
    %v1588 = vpop.permute.xlu0 %1587
    %v1589 = vsel %vm356, %v1586, 0
    %v1591 = vsel %vm356, %v1588, 0
    %1593 = vmatprep.subr.mxu0 0.0
    %1594 = vmatpush1.xpose.msra.mxu0 %v1591
    %1595 = vmatprep.subr.mxu0 0.0
    %1596 = vmatpush1.xpose.msra.mxu0 0.0
    %1597 = vmatprep.subr.mxu0 0.0
    %1598 = vmatpush1.xpose.msra.mxu0 0.0
    %1599 = vmatprep.subr.mxu0 0.0
    %1600 = vmatpush1.xpose.msra.mxu0 0.0
    %1601 = vmatprep.subr.mxu0 0.0
    %1602 = vmatpush1.xpose.msra.mxu0 0.0
    %1603 = vmatprep.subr.mxu0 0.0
    %1604 = vmatpush1.xpose.msra.mxu0 0.0
    %1605 = vmatprep.subr.mxu0 0.0
    %1606 = vmatpush1.xpose.msra.mxu0 0.0
    %1607 = vmatprep.subr.mxu0 0.0
    %1608 = vmatpush1.xpose.msra.mxu0 0.0
    %1609 = vmatprep.subr.mxu0 0.0
    %1610 = vmatpush1.xpose.msra.mxu0 0.0
    %1611 = vmatprep.subr.mxu0 0.0
    %1612 = vmatpush1.xpose.msra.mxu0 0.0
    %1613 = vmatprep.subr.mxu0 0.0
    %1614 = vmatpush1.xpose.msra.mxu0 0.0
    %1615 = vmatprep.subr.mxu0 0.0
    %1616 = vmatpush1.xpose.msra.mxu0 0.0
    %1617 = vmatprep.subr.mxu0 0.0
    %1618 = vmatpush1.xpose.msra.mxu0 0.0
    %1619 = vmatprep.subr.mxu0 0.0
    %1620 = vmatpush1.xpose.msra.mxu0 0.0
    %1621 = vmatprep.subr.mxu0 0.0
    %1622 = vmatpush1.xpose.msra.mxu0 0.0
    %1623 = vmatprep.subr.mxu0 0.0
    %1624 = vmatpush1.xpose.msra.mxu0 0.0
    %1625 = vmatprep.subr.mxu0 0.0
    %1626 = vmatpush1.xpose.msra.mxu0 0.0
    %1627 = vmatprep.subr.mxu0 0.0
    %1628 = vmatpush1.xpose.msra.mxu0 0.0
    %1629 = vmatprep.subr.mxu0 0.0
    %1630 = vmatpush1.xpose.msra.mxu0 0.0
    %1631 = vmatprep.subr.mxu0 0.0
    %1632 = vmatpush1.xpose.msra.mxu0 0.0
    %1633 = vmatprep.subr.mxu0 0.0
    %1634 = vmatpush1.xpose.msra.mxu0 0.0
    %1635 = vmatprep.subr.mxu0 0.0
    %1636 = vmatpush1.xpose.msra.mxu0 0.0
    %1637 = vmatprep.subr.mxu0 0.0
    %1638 = vmatpush1.xpose.msra.mxu0 0.0
    %1639 = vmatprep.subr.mxu0 0.0
    %1640 = vmatpush1.xpose.msra.mxu0 0.0
    %1641 = vmatprep.subr.mxu0 0.0
    %1642 = vmatpush1.xpose.msra.mxu0 0.0
    %1643 = vmatprep.subr.mxu0 0.0
    %1644 = vmatpush1.xpose.msra.mxu0 0.0
    %1645 = vmatprep.subr.mxu0 0.0
    %1646 = vmatpush1.xpose.msra.mxu0 0.0
    %1647 = vmatprep.subr.mxu0 0.0
    %1648 = vmatpush1.xpose.msra.mxu0 0.0
    %1649 = vmatprep.subr.mxu0 0.0
    %1650 = vmatpush1.xpose.msra.mxu0 0.0
    %1651 = vmatprep.subr.mxu0 0.0
    %1652 = vmatpush1.xpose.msra.mxu0 0.0
    %1653 = vmatprep.subr.mxu0 0.0
    %1654 = vmatpush1.xpose.msra.mxu0 0.0
    %1655 = vmatprep.subr.mxu0 0.0
    %1656 = vmatpush1.xpose.msra.mxu0 0.0
    %1657 = vmatprep.mubr.f32.mxu0 0.0
    %1658 = vmatmul.mubr.f32.gmra.mrb[0].mxu0 %v1589
    %v1659 = vpop.f32.mrb[0].mxu0
    %v1660 = vadd.f32 0.0, %v1659
    %v1661 = vpop.f32.mrb[0].mxu0
    %1662 = vdwg.mxu0
    %1663 = vrot.lane.b32.xlu0 %v352, 104
    %v1664 = vpop.permute.xlu0 %1663
    %1665 = vrot.lane.b32.xlu0 %v255, 72
    %v1666 = vpop.permute.xlu0 %1665
    %v1667 = vsel %vm356, %v1664, 0
    %v1669 = vsel %vm356, %v1666, 0
    %1671 = vmatprep.subr.mxu0 0.0
    %1672 = vmatpush1.xpose.msra.mxu0 %v1669
    %1673 = vmatprep.subr.mxu0 0.0
    %1674 = vmatpush1.xpose.msra.mxu0 0.0
    %1675 = vmatprep.subr.mxu0 0.0
    %1676 = vmatpush1.xpose.msra.mxu0 0.0
    %1677 = vmatprep.subr.mxu0 0.0
    %1678 = vmatpush1.xpose.msra.mxu0 0.0
    %1679 = vmatprep.subr.mxu0 0.0
    %1680 = vmatpush1.xpose.msra.mxu0 0.0
    %1681 = vmatprep.subr.mxu0 0.0
    %1682 = vmatpush1.xpose.msra.mxu0 0.0
    %1683 = vmatprep.subr.mxu0 0.0
    %1684 = vmatpush1.xpose.msra.mxu0 0.0
    %1685 = vmatprep.subr.mxu0 0.0
    %1686 = vmatpush1.xpose.msra.mxu0 0.0
    %1687 = vmatprep.subr.mxu0 0.0
    %1688 = vmatpush1.xpose.msra.mxu0 0.0
    %1689 = vmatprep.subr.mxu0 0.0
    %1690 = vmatpush1.xpose.msra.mxu0 0.0
    %1691 = vmatprep.subr.mxu0 0.0
    %1692 = vmatpush1.xpose.msra.mxu0 0.0
    %1693 = vmatprep.subr.mxu0 0.0
    %1694 = vmatpush1.xpose.msra.mxu0 0.0
    %1695 = vmatprep.subr.mxu0 0.0
    %1696 = vmatpush1.xpose.msra.mxu0 0.0
    %1697 = vmatprep.subr.mxu0 0.0
    %1698 = vmatpush1.xpose.msra.mxu0 0.0
    %1699 = vmatprep.subr.mxu0 0.0
    %1700 = vmatpush1.xpose.msra.mxu0 0.0
    %1701 = vmatprep.subr.mxu0 0.0
    %1702 = vmatpush1.xpose.msra.mxu0 0.0
    %1703 = vmatprep.subr.mxu0 0.0
    %1704 = vmatpush1.xpose.msra.mxu0 0.0
    %1705 = vmatprep.subr.mxu0 0.0
    %1706 = vmatpush1.xpose.msra.mxu0 0.0
    %1707 = vmatprep.subr.mxu0 0.0
    %1708 = vmatpush1.xpose.msra.mxu0 0.0
    %1709 = vmatprep.subr.mxu0 0.0
    %1710 = vmatpush1.xpose.msra.mxu0 0.0
    %1711 = vmatprep.subr.mxu0 0.0
    %1712 = vmatpush1.xpose.msra.mxu0 0.0
    %1713 = vmatprep.subr.mxu0 0.0
    %1714 = vmatpush1.xpose.msra.mxu0 0.0
    %1715 = vmatprep.subr.mxu0 0.0
    %1716 = vmatpush1.xpose.msra.mxu0 0.0
    %1717 = vmatprep.subr.mxu0 0.0
    %1718 = vmatpush1.xpose.msra.mxu0 0.0
    %1719 = vmatprep.subr.mxu0 0.0
    %1720 = vmatpush1.xpose.msra.mxu0 0.0
    %1721 = vmatprep.subr.mxu0 0.0
    %1722 = vmatpush1.xpose.msra.mxu0 0.0
    %1723 = vmatprep.subr.mxu0 0.0
    %1724 = vmatpush1.xpose.msra.mxu0 0.0
    %1725 = vmatprep.subr.mxu0 0.0
    %1726 = vmatpush1.xpose.msra.mxu0 0.0
    %1727 = vmatprep.subr.mxu0 0.0
    %1728 = vmatpush1.xpose.msra.mxu0 0.0
    %1729 = vmatprep.subr.mxu0 0.0
    %1730 = vmatpush1.xpose.msra.mxu0 0.0
    %1731 = vmatprep.subr.mxu0 0.0
    %1732 = vmatpush1.xpose.msra.mxu0 0.0
    %1733 = vmatprep.subr.mxu0 0.0
    %1734 = vmatpush1.xpose.msra.mxu0 0.0
    %1735 = vmatprep.mubr.f32.mxu0 0.0
    %1736 = vmatmul.mubr.f32.gmra.mrb[0].mxu0 %v1667
    %v1737 = vpop.f32.mrb[0].mxu0
    %v1738 = vadd.f32 0.0, %v1737
    %v1739 = vpop.f32.mrb[0].mxu0
    %1740 = vdwg.mxu0
    %v1741 = vsel %vm356, %v1660, -inf
    %1742 = vmax.xlane.f32.xlu0 %v1741
    %v1743 = vpop.xlane.xlu0 %1742
    %v1744 = vsel %vm356, %v1738, -inf
    %1745 = vmax.xlane.f32.xlu0 %v1744
    %v1746 = vpop.xlane.xlu0 %1745
    %v1747 = vsub.f32 %v1660, %v1743
    %v1748 = vsub.f32 %v1738, %v1746
    %v1749 = vmul.f32 %v1747, 1.442695
    %v1750 = vpow.pop %v1749
    %v1751 = vmul.f32 %v1748, 1.442695
    %v1752 = vpow.pop %v1751
    %v1753 = vsel %vm356, %v1750, 0.0
    %1754 = vadd.xlane.f32.xlu0 %v1753
    %v1755 = vpop.xlane.xlu0 %1754
    %v1756 = vsel %vm356, %v1752, 0.0
    %1757 = vadd.xlane.f32.xlu0 %v1756
    %v1758 = vpop.xlane.xlu0 %1757
    %v1759 = vrcp.pop %v1755
    %v1760 = vrcp.pop %v1758
    %v1761 = vmul.f32 %v1750, %v1759
    %v1762 = vmul.f32 %v1752, %v1760
    %1763 = vrot.lane.b32.xlu0 %v339, 104
    %v1764 = vpop.permute.xlu0 %1763
    %v1767 = vsel %vm356, %v1761, 0
    %1769 = vmatprep.subr.mxu0 0.0
    %1770 = vmatpush1.msra.mxu0 %v1764
    %1771 = vmatprep.subr.mxu0 0.0
    %1772 = vmatpush1.msra.mxu0 0.0
    %1773 = vmatprep.subr.mxu0 0.0
    %1774 = vmatpush1.msra.mxu0 0.0
    %1775 = vmatprep.subr.mxu0 0.0
    %1776 = vmatpush1.msra.mxu0 0.0
    %1777 = vmatprep.subr.mxu0 0.0
    %1778 = vmatpush1.msra.mxu0 0.0
    %1779 = vmatprep.subr.mxu0 0.0
    %1780 = vmatpush1.msra.mxu0 0.0
    %1781 = vmatprep.subr.mxu0 0.0
    %1782 = vmatpush1.msra.mxu0 0.0
    %1783 = vmatprep.subr.mxu0 0.0
    %1784 = vmatpush1.msra.mxu0 0.0
    %1785 = vmatprep.subr.mxu0 0.0
    %1786 = vmatpush1.msra.mxu0 0.0
    %1787 = vmatprep.subr.mxu0 0.0
    %1788 = vmatpush1.msra.mxu0 0.0
    %1789 = vmatprep.subr.mxu0 0.0
    %1790 = vmatpush1.msra.mxu0 0.0
    %1791 = vmatprep.subr.mxu0 0.0
    %1792 = vmatpush1.msra.mxu0 0.0
    %1793 = vmatprep.subr.mxu0 0.0
    %1794 = vmatpush1.msra.mxu0 0.0
    %1795 = vmatprep.subr.mxu0 0.0
    %1796 = vmatpush1.msra.mxu0 0.0
    %1797 = vmatprep.subr.mxu0 0.0
    %1798 = vmatpush1.msra.mxu0 0.0
    %1799 = vmatprep.subr.mxu0 0.0
    %1800 = vmatpush1.msra.mxu0 0.0
    %1801 = vmatprep.subr.mxu0 0.0
    %1802 = vmatpush1.msra.mxu0 0.0
    %1803 = vmatprep.subr.mxu0 0.0
    %1804 = vmatpush1.msra.mxu0 0.0
    %1805 = vmatprep.subr.mxu0 0.0
    %1806 = vmatpush1.msra.mxu0 0.0
    %1807 = vmatprep.subr.mxu0 0.0
    %1808 = vmatpush1.msra.mxu0 0.0
    %1809 = vmatprep.subr.mxu0 0.0
    %1810 = vmatpush1.msra.mxu0 0.0
    %1811 = vmatprep.subr.mxu0 0.0
    %1812 = vmatpush1.msra.mxu0 0.0
    %1813 = vmatprep.subr.mxu0 0.0
    %1814 = vmatpush1.msra.mxu0 0.0
    %1815 = vmatprep.subr.mxu0 0.0
    %1816 = vmatpush1.msra.mxu0 0.0
    %1817 = vmatprep.subr.mxu0 0.0
    %1818 = vmatpush1.msra.mxu0 0.0
    %1819 = vmatprep.subr.mxu0 0.0
    %1820 = vmatpush1.msra.mxu0 0.0
    %1821 = vmatprep.subr.mxu0 0.0
    %1822 = vmatpush1.msra.mxu0 0.0
    %1823 = vmatprep.subr.mxu0 0.0
    %1824 = vmatpush1.msra.mxu0 0.0
    %1825 = vmatprep.subr.mxu0 0.0
    %1826 = vmatpush1.msra.mxu0 0.0
    %1827 = vmatprep.subr.mxu0 0.0
    %1828 = vmatpush1.msra.mxu0 0.0
    %1829 = vmatprep.subr.mxu0 0.0
    %1830 = vmatpush1.msra.mxu0 0.0
    %1831 = vmatprep.subr.mxu0 0.0
    %1832 = vmatpush1.msra.mxu0 0.0
    %1833 = vmatprep.mubr.f32.mxu0 0.0
    %1834 = vmatmul.mubr.f32.gmra.mrb[0].mxu0 %v1767
    %v1835 = vpop.f32.mrb[0].mxu0
    %v1836 = vadd.f32 0.0, %v1835
    %v1837 = vpop.f32.mrb[0].mxu0
    %1838 = vdwg.mxu0
    %1839 = vrot.lane.b32.xlu0 %v344, 104
    %v1840 = vpop.permute.xlu0 %1839
    %v1843 = vsel %vm356, %v1762, 0
    %1845 = vmatprep.subr.mxu0 0.0
    %1846 = vmatpush1.msra.mxu0 %v1840
    %1847 = vmatprep.subr.mxu0 0.0
    %1848 = vmatpush1.msra.mxu0 0.0
    %1849 = vmatprep.subr.mxu0 0.0
    %1850 = vmatpush1.msra.mxu0 0.0
    %1851 = vmatprep.subr.mxu0 0.0
    %1852 = vmatpush1.msra.mxu0 0.0
    %1853 = vmatprep.subr.mxu0 0.0
    %1854 = vmatpush1.msra.mxu0 0.0
    %1855 = vmatprep.subr.mxu0 0.0
    %1856 = vmatpush1.msra.mxu0 0.0
    %1857 = vmatprep.subr.mxu0 0.0
    %1858 = vmatpush1.msra.mxu0 0.0
    %1859 = vmatprep.subr.mxu0 0.0
    %1860 = vmatpush1.msra.mxu0 0.0
    %1861 = vmatprep.subr.mxu0 0.0
    %1862 = vmatpush1.msra.mxu0 0.0
    %1863 = vmatprep.subr.mxu0 0.0
    %1864 = vmatpush1.msra.mxu0 0.0
    %1865 = vmatprep.subr.mxu0 0.0
    %1866 = vmatpush1.msra.mxu0 0.0
    %1867 = vmatprep.subr.mxu0 0.0
    %1868 = vmatpush1.msra.mxu0 0.0
    %1869 = vmatprep.subr.mxu0 0.0
    %1870 = vmatpush1.msra.mxu0 0.0
    %1871 = vmatprep.subr.mxu0 0.0
    %1872 = vmatpush1.msra.mxu0 0.0
    %1873 = vmatprep.subr.mxu0 0.0
    %1874 = vmatpush1.msra.mxu0 0.0
    %1875 = vmatprep.subr.mxu0 0.0
    %1876 = vmatpush1.msra.mxu0 0.0
    %1877 = vmatprep.subr.mxu0 0.0
    %1878 = vmatpush1.msra.mxu0 0.0
    %1879 = vmatprep.subr.mxu0 0.0
    %1880 = vmatpush1.msra.mxu0 0.0
    %1881 = vmatprep.subr.mxu0 0.0
    %1882 = vmatpush1.msra.mxu0 0.0
    %1883 = vmatprep.subr.mxu0 0.0
    %1884 = vmatpush1.msra.mxu0 0.0
    %1885 = vmatprep.subr.mxu0 0.0
    %1886 = vmatpush1.msra.mxu0 0.0
    %1887 = vmatprep.subr.mxu0 0.0
    %1888 = vmatpush1.msra.mxu0 0.0
    %1889 = vmatprep.subr.mxu0 0.0
    %1890 = vmatpush1.msra.mxu0 0.0
    %1891 = vmatprep.subr.mxu0 0.0
    %1892 = vmatpush1.msra.mxu0 0.0
    %1893 = vmatprep.subr.mxu0 0.0
    %1894 = vmatpush1.msra.mxu0 0.0
    %1895 = vmatprep.subr.mxu0 0.0
    %1896 = vmatpush1.msra.mxu0 0.0
    %1897 = vmatprep.subr.mxu0 0.0
    %1898 = vmatpush1.msra.mxu0 0.0
    %1899 = vmatprep.subr.mxu0 0.0
    %1900 = vmatpush1.msra.mxu0 0.0
    %1901 = vmatprep.subr.mxu0 0.0
    %1902 = vmatpush1.msra.mxu0 0.0
    %1903 = vmatprep.subr.mxu0 0.0
    %1904 = vmatpush1.msra.mxu0 0.0
    %1905 = vmatprep.subr.mxu0 0.0
    %1906 = vmatpush1.msra.mxu0 0.0
    %1907 = vmatprep.subr.mxu0 0.0
    %1908 = vmatpush1.msra.mxu0 0.0
    %1909 = vmatprep.mubr.f32.mxu0 0.0
    %1910 = vmatmul.mubr.f32.gmra.mrb[0].mxu0 %v1843
    %v1911 = vpop.f32.mrb[0].mxu0
    %v1912 = vadd.f32 0.0, %v1911
    %v1913 = vpop.f32.mrb[0].mxu0
    %1914 = vdwg.mxu0
    %v1916 = vsel %vm356, %v1836, 0
    %v1919 = vsel %vm356, %v1912, 0
    %1921 = vmatprep.subr.mxu0 0.0
    %1922 = vmatpush1.msra.mxu0 %v350
    %1923 = vmatprep.subr.mxu0 0.0
    %1924 = vmatpush1.msra.mxu0 0.0
    %1925 = vmatprep.subr.mxu0 0.0
    %1926 = vmatpush1.msra.mxu0 0.0
    %1927 = vmatprep.subr.mxu0 0.0
    %1928 = vmatpush1.msra.mxu0 0.0
    %1929 = vmatprep.subr.mxu0 0.0
    %1930 = vmatpush1.msra.mxu0 0.0
    %1931 = vmatprep.subr.mxu0 0.0
    %1932 = vmatpush1.msra.mxu0 0.0
    %1933 = vmatprep.subr.mxu0 0.0
    %1934 = vmatpush1.msra.mxu0 0.0
    %1935 = vmatprep.subr.mxu0 0.0
    %1936 = vmatpush1.msra.mxu0 0.0
    %1937 = vmatprep.subr.mxu0 0.0
    %1938 = vmatpush1.msra.mxu0 0.0
    %1939 = vmatprep.subr.mxu0 0.0
    %1940 = vmatpush1.msra.mxu0 0.0
    %1941 = vmatprep.subr.mxu0 0.0
    %1942 = vmatpush1.msra.mxu0 0.0
    %1943 = vmatprep.subr.mxu0 0.0
    %1944 = vmatpush1.msra.mxu0 0.0
    %1945 = vmatprep.subr.mxu0 0.0
    %1946 = vmatpush1.msra.mxu0 0.0
    %1947 = vmatprep.subr.mxu0 0.0
    %1948 = vmatpush1.msra.mxu0 0.0
    %1949 = vmatprep.subr.mxu0 0.0
    %1950 = vmatpush1.msra.mxu0 0.0
    %1951 = vmatprep.subr.mxu0 0.0
    %1952 = vmatpush1.msra.mxu0 0.0
    %1953 = vmatprep.subr.mxu0 0.0
    %1954 = vmatpush1.msra.mxu0 0.0
    %1955 = vmatprep.subr.mxu0 0.0
    %1956 = vmatpush1.msra.mxu0 0.0
    %1957 = vmatprep.subr.mxu0 0.0
    %1958 = vmatpush1.msra.mxu0 0.0
    %1959 = vmatprep.subr.mxu0 0.0
    %1960 = vmatpush1.msra.mxu0 0.0
    %1961 = vmatprep.subr.mxu0 0.0
    %1962 = vmatpush1.msra.mxu0 0.0
    %1963 = vmatprep.subr.mxu0 0.0
    %1964 = vmatpush1.msra.mxu0 0.0
    %1965 = vmatprep.subr.mxu0 0.0
    %1966 = vmatpush1.msra.mxu0 0.0
    %1967 = vmatprep.subr.mxu0 0.0
    %1968 = vmatpush1.msra.mxu0 0.0
    %1969 = vmatprep.subr.mxu0 0.0
    %1970 = vmatpush1.msra.mxu0 0.0
    %1971 = vmatprep.subr.mxu0 0.0
    %1972 = vmatpush1.msra.mxu0 0.0
    %1973 = vmatprep.subr.mxu0 0.0
    %1974 = vmatpush1.msra.mxu0 0.0
    %1975 = vmatprep.subr.mxu0 0.0
    %1976 = vmatpush1.msra.mxu0 0.0
    %1977 = vmatprep.subr.mxu0 0.0
    %1978 = vmatpush1.msra.mxu0 0.0
    %1979 = vmatprep.subr.mxu0 0.0
    %1980 = vmatpush1.msra.mxu0 0.0
    %1981 = vmatprep.subr.mxu0 0.0
    %1982 = vmatpush1.msra.mxu0 0.0
    %1983 = vmatprep.subr.mxu0 0.0
    %1984 = vmatpush1.msra.mxu0 0.0
    %1985 = vmatprep.mubr.f32.mxu0 0.0
    %1986 = vmatmul.mubr.f32.gmra.mrb[0].mxu0 %v1916
    %v1987 = vpop.f32.mrb[0].mxu0
    %v1988 = vadd.f32 0.0, %v1987
    %v1989 = vpop.f32.mrb[0].mxu0
    %1990 = vmatprep.mubr.f32.mxu0 0.0
    %1991 = vmatmul.mubr.f32.gmra.mrb[0].mxu0 %v1919
    %v1992 = vpop.f32.mrb[0].mxu0
    %v1993 = vadd.f32 0.0, %v1992
    %v1994 = vpop.f32.mrb[0].mxu0
    %1995 = vdwg.mxu0
    %v1996 = vadd.f32 %v1583, %v1988
    %v1997 = vadd.f32 %v1584, %v1993
    %v1998 = vlaneseq
    %v1999 = vshrl.u32 %v1998, 7
    %v2000 = vsub.s32 1, %v1999
    %v2001 = vrot.slane %v161, %v2000
    %v2002 = vadd.f32 %v1996, %v2001
    %v2003 = vadd.f32 %v1997, %v2001
    %v2004 = vadd.f32 %v149, %v2002
    %v2005 = vadd.f32 %v150, %v2003
    %v2006 = vsel %vm176, %v2004, 0.0
    %2007 = vadd.xlane.f32.xlu0 %v2006
    %v2008 = vpop.xlane.xlu0 %2007
    %v2009 = vsel %vm176, %v2005, 0.0
    %2010 = vadd.xlane.f32.xlu0 %v2009
    %v2011 = vpop.xlane.xlu0 %2010
    %v2012 = vrcp.pop 32.0
    %v2013 = vmul.f32 %v2008, %v2012
    %v2014 = vmul.f32 %v2011, %v2012
    %v2015 = vsub.f32 %v2004, %v2013
    %v2016 = vsub.f32 %v2005, %v2014
    %v2017 = vmul.f32 %v2015, %v2015
    %v2018 = vmul.f32 %v2016, %v2016
    %v2019 = vsel %vm176, %v2017, 0.0
    %2020 = vadd.xlane.f32.xlu0 %v2019
    %v2021 = vpop.xlane.xlu0 %2020
    %v2022 = vsel %vm176, %v2018, 0.0
    %2023 = vadd.xlane.f32.xlu0 %v2022
    %v2024 = vpop.xlane.xlu0 %2023
    %v2025 = vmul.f32 %v2021, %v2012
    %v2026 = vmul.f32 %v2024, %v2012
    %v2027 = vadd.f32 %v2025, 1e-05
    %v2028 = vadd.f32 %v2026, 1e-05
    %v2029 = vrsqrt.pop %v2027
    %v2030 = vrsqrt.pop %v2028
    %v2031 = vmul.f32 %v2015, %v2029
    %v2032 = vmul.f32 %v2016, %v2030
    %v2033 = vlaneseq
    %v2034 = vshrl.u32 %v2033, 7
    %v2035 = vsub.s32 7, %v2034
    %v2036 = vrot.slane %v161, %v2035
    %v2037 = vmul.f32 %v2031, %v2036
    %v2038 = vmul.f32 %v2032, %v2036
    %v2039 = vlaneseq
    %v2040 = vshrl.u32 %v2039, 7
    %v2041 = vsub.s32 0, %v2040
    %v2042 = vrot.slane %v162, %v2041
    %v2043 = vadd.f32 %v2037, %v2042
    %v2044 = vadd.f32 %v2038, %v2042
    %v2045 = vadd.f32 %v153, %v157
    %v2046 = vadd.f32 %v154, %v158
    %v2047 = vadd.f32 %v155, %v159
    %v2048 = vadd.f32 %v156, %v160
    %v2049 = vadd.f32 %v2043, %v151
    %v2050 = vadd.f32 %v2044, %v152
    %v2051 = vld [vmem:[#allocation7] sm:$0xff]
    %v2052 = vld [vmem:[#allocation7 + $0x8] sm:$0xff]
    %v2053 = vld [vmem:[#allocation7 + $0x10] sm:$0xff]
    %v2054 = vld [vmem:[#allocation7 + $0x18] sm:$0xff]
    %v2055 = vlaneseq
    %v2056 = vshrl.u32 %v2055, 7
    %v2057 = vsub.s32 2, %v2056
    %v2058 = vrot.slane %v161, %v2057
    %v2060 = vsel %vm176, %v2049, 0
    %v2063 = vsel %vm176, %v2050, 0
    %2065 = vmatprep.subr.mxu0 0.0
    %2066 = vmatpush1.msra.mxu0 %v2051
    %2067 = vmatprep.subr.mxu0 0.0
    %2068 = vmatpush1.msra.mxu0 %v2052
    %2069 = vmatprep.subr.mxu0 0.0
    %2070 = vmatpush1.msra.mxu0 %v2053
    %2071 = vmatprep.subr.mxu0 0.0
    %2072 = vmatpush1.msra.mxu0 %v2054
    %2073 = vmatprep.subr.mxu0 0.0
    %2074 = vmatpush1.msra.mxu0 0.0
    %2075 = vmatprep.subr.mxu0 0.0
    %2076 = vmatpush1.msra.mxu0 0.0
    %2077 = vmatprep.subr.mxu0 0.0
    %2078 = vmatpush1.msra.mxu0 0.0
    %2079 = vmatprep.subr.mxu0 0.0
    %2080 = vmatpush1.msra.mxu0 0.0
    %2081 = vmatprep.subr.mxu0 0.0
    %2082 = vmatpush1.msra.mxu0 0.0
    %2083 = vmatprep.subr.mxu0 0.0
    %2084 = vmatpush1.msra.mxu0 0.0
    %2085 = vmatprep.subr.mxu0 0.0
    %2086 = vmatpush1.msra.mxu0 0.0
    %2087 = vmatprep.subr.mxu0 0.0
    %2088 = vmatpush1.msra.mxu0 0.0
    %2089 = vmatprep.subr.mxu0 0.0
    %2090 = vmatpush1.msra.mxu0 0.0
    %2091 = vmatprep.subr.mxu0 0.0
    %2092 = vmatpush1.msra.mxu0 0.0
    %2093 = vmatprep.subr.mxu0 0.0
    %2094 = vmatpush1.msra.mxu0 0.0
    %2095 = vmatprep.subr.mxu0 0.0
    %2096 = vmatpush1.msra.mxu0 0.0
    %2097 = vmatprep.subr.mxu0 0.0
    %2098 = vmatpush1.msra.mxu0 0.0
    %2099 = vmatprep.subr.mxu0 0.0
    %2100 = vmatpush1.msra.mxu0 0.0
    %2101 = vmatprep.subr.mxu0 0.0
    %2102 = vmatpush1.msra.mxu0 0.0
    %2103 = vmatprep.subr.mxu0 0.0
    %2104 = vmatpush1.msra.mxu0 0.0
    %2105 = vmatprep.subr.mxu0 0.0
    %2106 = vmatpush1.msra.mxu0 0.0
    %2107 = vmatprep.subr.mxu0 0.0
    %2108 = vmatpush1.msra.mxu0 0.0
    %2109 = vmatprep.subr.mxu0 0.0
    %2110 = vmatpush1.msra.mxu0 0.0
    %2111 = vmatprep.subr.mxu0 0.0
    %2112 = vmatpush1.msra.mxu0 0.0
    %2113 = vmatprep.subr.mxu0 0.0
    %2114 = vmatpush1.msra.mxu0 0.0
    %2115 = vmatprep.subr.mxu0 0.0
    %2116 = vmatpush1.msra.mxu0 0.0
    %2117 = vmatprep.subr.mxu0 0.0
    %2118 = vmatpush1.msra.mxu0 0.0
    %2119 = vmatprep.subr.mxu0 0.0
    %2120 = vmatpush1.msra.mxu0 0.0
    %2121 = vmatprep.subr.mxu0 0.0
    %2122 = vmatpush1.msra.mxu0 0.0
    %2123 = vmatprep.subr.mxu0 0.0
    %2124 = vmatpush1.msra.mxu0 0.0
    %2125 = vmatprep.subr.mxu0 0.0
    %2126 = vmatpush1.msra.mxu0 0.0
    %2127 = vmatprep.subr.mxu0 0.0
    %2128 = vmatpush1.msra.mxu0 0.0
    %2129 = vmatprep.mubr.f32.mxu0 0.0
    %2130 = vmatmul.mubr.f32.gmra.mrb[0].mxu0 %v2060
    %v2131 = vpop.f32.mrb[0].mxu0
    %v2132 = vadd.f32 %v2058, %v2131
    %v2133 = vpop.f32.mrb[0].mxu0
    %2134 = vmatprep.mubr.f32.mxu0 0.0
    %2135 = vmatmul.mubr.f32.gmra.mrb[0].mxu0 %v2063
    %v2136 = vpop.f32.mrb[0].mxu0
    %v2137 = vadd.f32 %v2058, %v2136
    %v2138 = vpop.f32.mrb[0].mxu0
    %2139 = vdwg.mxu0
    %v2140 = vld [vmem:[#allocation8] sm:$0xff]
    %v2141 = vld [vmem:[#allocation8 + $0x8] sm:$0xff]
    %v2142 = vld [vmem:[#allocation8 + $0x10] sm:$0xff]
    %v2143 = vld [vmem:[#allocation8 + $0x18] sm:$0xff]
    %v2144 = vlaneseq
    %v2145 = vshrl.u32 %v2144, 7
    %v2146 = vsub.s32 3, %v2145
    %v2147 = vrot.slane %v161, %v2146
    %v2149 = vsel %vm176, %v2045, 0
    %v2152 = vsel %vm176, %v2046, 0
    %v2155 = vsel %vm176, %v2047, 0
    %v2158 = vsel %vm176, %v2048, 0
    %2160 = vmatprep.subr.mxu0 0.0
    %2161 = vmatpush1.msra.mxu0 %v2140
    %2162 = vmatprep.subr.mxu0 0.0
    %2163 = vmatpush1.msra.mxu0 %v2141
    %2164 = vmatprep.subr.mxu0 0.0
    %2165 = vmatpush1.msra.mxu0 %v2142
    %2166 = vmatprep.subr.mxu0 0.0
    %2167 = vmatpush1.msra.mxu0 %v2143
    %2168 = vmatprep.subr.mxu0 0.0
    %2169 = vmatpush1.msra.mxu0 0.0
    %2170 = vmatprep.subr.mxu0 0.0
    %2171 = vmatpush1.msra.mxu0 0.0
    %2172 = vmatprep.subr.mxu0 0.0
    %2173 = vmatpush1.msra.mxu0 0.0
    %2174 = vmatprep.subr.mxu0 0.0
    %2175 = vmatpush1.msra.mxu0 0.0
    %2176 = vmatprep.subr.mxu0 0.0
    %2177 = vmatpush1.msra.mxu0 0.0
    %2178 = vmatprep.subr.mxu0 0.0
    %2179 = vmatpush1.msra.mxu0 0.0
    %2180 = vmatprep.subr.mxu0 0.0
    %2181 = vmatpush1.msra.mxu0 0.0
    %2182 = vmatprep.subr.mxu0 0.0
    %2183 = vmatpush1.msra.mxu0 0.0
    %2184 = vmatprep.subr.mxu0 0.0
    %2185 = vmatpush1.msra.mxu0 0.0
    %2186 = vmatprep.subr.mxu0 0.0
    %2187 = vmatpush1.msra.mxu0 0.0
    %2188 = vmatprep.subr.mxu0 0.0
    %2189 = vmatpush1.msra.mxu0 0.0
    %2190 = vmatprep.subr.mxu0 0.0
    %2191 = vmatpush1.msra.mxu0 0.0
    %2192 = vmatprep.subr.mxu0 0.0
    %2193 = vmatpush1.msra.mxu0 0.0
    %2194 = vmatprep.subr.mxu0 0.0
    %2195 = vmatpush1.msra.mxu0 0.0
    %2196 = vmatprep.subr.mxu0 0.0
    %2197 = vmatpush1.msra.mxu0 0.0
    %2198 = vmatprep.subr.mxu0 0.0
    %2199 = vmatpush1.msra.mxu0 0.0
    %2200 = vmatprep.subr.mxu0 0.0
    %2201 = vmatpush1.msra.mxu0 0.0
    %2202 = vmatprep.subr.mxu0 0.0
    %2203 = vmatpush1.msra.mxu0 0.0
    %2204 = vmatprep.subr.mxu0 0.0
    %2205 = vmatpush1.msra.mxu0 0.0
    %2206 = vmatprep.subr.mxu0 0.0
    %2207 = vmatpush1.msra.mxu0 0.0
    %2208 = vmatprep.subr.mxu0 0.0
    %2209 = vmatpush1.msra.mxu0 0.0
    %2210 = vmatprep.subr.mxu0 0.0
    %2211 = vmatpush1.msra.mxu0 0.0
    %2212 = vmatprep.subr.mxu0 0.0
    %2213 = vmatpush1.msra.mxu0 0.0
    %2214 = vmatprep.subr.mxu0 0.0
    %2215 = vmatpush1.msra.mxu0 0.0
    %2216 = vmatprep.subr.mxu0 0.0
    %2217 = vmatpush1.msra.mxu0 0.0
    %2218 = vmatprep.subr.mxu0 0.0
    %2219 = vmatpush1.msra.mxu0 0.0
    %2220 = vmatprep.subr.mxu0 0.0
    %2221 = vmatpush1.msra.mxu0 0.0
    %2222 = vmatprep.subr.mxu0 0.0
    %2223 = vmatpush1.msra.mxu0 0.0
    %2224 = vmatprep.mubr.f32.mxu0 0.0
    %2225 = vmatmul.mubr.f32.gmra.mrb[0].mxu0 %v2149
    %v2226 = vpop.f32.mrb[0].mxu0
    %v2227 = vadd.f32 %v2147, %v2226
    %v2228 = vpop.f32.mrb[0].mxu0
    %2229 = vmatprep.mubr.f32.mxu0 0.0
    %2230 = vmatmul.mubr.f32.gmra.mrb[0].mxu0 %v2152
    %v2231 = vpop.f32.mrb[0].mxu0
    %v2232 = vadd.f32 %v2147, %v2231
    %v2233 = vpop.f32.mrb[0].mxu0
    %2234 = vmatprep.mubr.f32.mxu0 0.0
    %2235 = vmatmul.mubr.f32.gmra.mrb[0].mxu0 %v2155
    %v2236 = vpop.f32.mrb[0].mxu0
    %v2237 = vadd.f32 %v2147, %v2236
    %v2238 = vpop.f32.mrb[0].mxu0
    %2239 = vmatprep.mubr.f32.mxu0 0.0
    %2240 = vmatmul.mubr.f32.gmra.mrb[0].mxu0 %v2158
    %v2241 = vpop.f32.mrb[0].mxu0
    %v2242 = vadd.f32 %v2147, %v2241
    %v2243 = vpop.f32.mrb[0].mxu0
    %2244 = vdwg.mxu0
    %v2245 = vld [vmem:[#allocation10] sm:$0xff]
    %v2246 = vld [vmem:[#allocation10 + $0x8] sm:$0xff]
    %v2247 = vld [vmem:[#allocation10 + $0x10] sm:$0xff]
    %v2248 = vld [vmem:[#allocation10 + $0x18] sm:$0xff]
    %v2249 = vlaneseq
    %v2250 = vshrl.u32 %v2249, 7
    %v2251 = vsub.s32 4, %v2250
    %v2252 = vrot.slane %v161, %v2251
    %v2254 = vsel %vm176, %v153, 0
    %v2257 = vsel %vm176, %v154, 0
    %v2260 = vsel %vm176, %v155, 0
    %v2263 = vsel %vm176, %v156, 0
    %2265 = vmatprep.subr.mxu0 0.0
    %2266 = vmatpush1.msra.mxu0 %v2245
    %2267 = vmatprep.subr.mxu0 0.0
    %2268 = vmatpush1.msra.mxu0 %v2246
    %2269 = vmatprep.subr.mxu0 0.0
    %2270 = vmatpush1.msra.mxu0 %v2247
    %2271 = vmatprep.subr.mxu0 0.0
    %2272 = vmatpush1.msra.mxu0 %v2248
    %2273 = vmatprep.subr.mxu0 0.0
    %2274 = vmatpush1.msra.mxu0 0.0
    %2275 = vmatprep.subr.mxu0 0.0
    %2276 = vmatpush1.msra.mxu0 0.0
    %2277 = vmatprep.subr.mxu0 0.0
    %2278 = vmatpush1.msra.mxu0 0.0
    %2279 = vmatprep.subr.mxu0 0.0
    %2280 = vmatpush1.msra.mxu0 0.0
    %2281 = vmatprep.subr.mxu0 0.0
    %2282 = vmatpush1.msra.mxu0 0.0
    %2283 = vmatprep.subr.mxu0 0.0
    %2284 = vmatpush1.msra.mxu0 0.0
    %2285 = vmatprep.subr.mxu0 0.0
    %2286 = vmatpush1.msra.mxu0 0.0
    %2287 = vmatprep.subr.mxu0 0.0
    %2288 = vmatpush1.msra.mxu0 0.0
    %2289 = vmatprep.subr.mxu0 0.0
    %2290 = vmatpush1.msra.mxu0 0.0
    %2291 = vmatprep.subr.mxu0 0.0
    %2292 = vmatpush1.msra.mxu0 0.0
    %2293 = vmatprep.subr.mxu0 0.0
    %2294 = vmatpush1.msra.mxu0 0.0
    %2295 = vmatprep.subr.mxu0 0.0
    %2296 = vmatpush1.msra.mxu0 0.0
    %2297 = vmatprep.subr.mxu0 0.0
    %2298 = vmatpush1.msra.mxu0 0.0
    %2299 = vmatprep.subr.mxu0 0.0
    %2300 = vmatpush1.msra.mxu0 0.0
    %2301 = vmatprep.subr.mxu0 0.0
    %2302 = vmatpush1.msra.mxu0 0.0
    %2303 = vmatprep.subr.mxu0 0.0
    %2304 = vmatpush1.msra.mxu0 0.0
    %2305 = vmatprep.subr.mxu0 0.0
    %2306 = vmatpush1.msra.mxu0 0.0
    %2307 = vmatprep.subr.mxu0 0.0
    %2308 = vmatpush1.msra.mxu0 0.0
    %2309 = vmatprep.subr.mxu0 0.0
    %2310 = vmatpush1.msra.mxu0 0.0
    %2311 = vmatprep.subr.mxu0 0.0
    %2312 = vmatpush1.msra.mxu0 0.0
    %2313 = vmatprep.subr.mxu0 0.0
    %2314 = vmatpush1.msra.mxu0 0.0
    %2315 = vmatprep.subr.mxu0 0.0
    %2316 = vmatpush1.msra.mxu0 0.0
    %2317 = vmatprep.subr.mxu0 0.0
    %2318 = vmatpush1.msra.mxu0 0.0
    %2319 = vmatprep.subr.mxu0 0.0
    %2320 = vmatpush1.msra.mxu0 0.0
    %2321 = vmatprep.subr.mxu0 0.0
    %2322 = vmatpush1.msra.mxu0 0.0
    %2323 = vmatprep.subr.mxu0 0.0
    %2324 = vmatpush1.msra.mxu0 0.0
    %2325 = vmatprep.subr.mxu0 0.0
    %2326 = vmatpush1.msra.mxu0 0.0
    %2327 = vmatprep.subr.mxu0 0.0
    %2328 = vmatpush1.msra.mxu0 0.0
    %2329 = vmatprep.mubr.f32.mxu0 0.0
    %2330 = vmatmul.mubr.f32.gmra.mrb[0].mxu0 %v2254
    %v2331 = vpop.f32.mrb[0].mxu0
    %v2332 = vadd.f32 %v2252, %v2331
    %v2333 = vpop.f32.mrb[0].mxu0
    %2334 = vmatprep.mubr.f32.mxu0 0.0
    %2335 = vmatmul.mubr.f32.gmra.mrb[0].mxu0 %v2257
    %v2336 = vpop.f32.mrb[0].mxu0
    %v2337 = vadd.f32 %v2252, %v2336
    %v2338 = vpop.f32.mrb[0].mxu0
    %2339 = vmatprep.mubr.f32.mxu0 0.0
    %2340 = vmatmul.mubr.f32.gmra.mrb[0].mxu0 %v2260
    %v2341 = vpop.f32.mrb[0].mxu0
    %v2342 = vadd.f32 %v2252, %v2341
    %v2343 = vpop.f32.mrb[0].mxu0
    %2344 = vmatprep.mubr.f32.mxu0 0.0
    %2345 = vmatmul.mubr.f32.gmra.mrb[0].mxu0 %v2263
    %v2346 = vpop.f32.mrb[0].mxu0
    %v2347 = vadd.f32 %v2252, %v2346
    %v2348 = vpop.f32.mrb[0].mxu0
    %2349 = vdwg.mxu0
    %v2350 = vld [vmem:[#allocation11] sm:$0xff]
    %v2351 = vld [vmem:[#allocation11 + $0x8] sm:$0xff]
    %v2352 = vld [vmem:[#allocation11 + $0x10] sm:$0xff]
    %v2353 = vld [vmem:[#allocation11 + $0x18] sm:$0xff]
    %v2354 = vmul.f32 %v2132, 0.35355338
    %v2355 = vmul.f32 %v2137, 0.35355338
    %v2357 = vsel %vm356, %v2354, 0
    %v2360 = vsel %vm356, %v2227, 0
    %v2363 = vsel %vm356, %v2232, 0
    %2365 = vmatprep.subr.mxu0 0.0
    %2366 = vmatpush1.xpose.msra.mxu0 %v2360
    %2367 = vmatprep.subr.mxu0 0.0
    %2368 = vmatpush1.xpose.msra.mxu0 %v2363
    %2369 = vmatprep.subr.mxu0 0.0
    %2370 = vmatpush1.xpose.msra.mxu0 0.0
    %2371 = vmatprep.subr.mxu0 0.0
    %2372 = vmatpush1.xpose.msra.mxu0 0.0
    %2373 = vmatprep.subr.mxu0 0.0
    %2374 = vmatpush1.xpose.msra.mxu0 0.0
    %2375 = vmatprep.subr.mxu0 0.0
    %2376 = vmatpush1.xpose.msra.mxu0 0.0
    %2377 = vmatprep.subr.mxu0 0.0
    %2378 = vmatpush1.xpose.msra.mxu0 0.0
    %2379 = vmatprep.subr.mxu0 0.0
    %2380 = vmatpush1.xpose.msra.mxu0 0.0
    %2381 = vmatprep.subr.mxu0 0.0
    %2382 = vmatpush1.xpose.msra.mxu0 0.0
    %2383 = vmatprep.subr.mxu0 0.0
    %2384 = vmatpush1.xpose.msra.mxu0 0.0
    %2385 = vmatprep.subr.mxu0 0.0
    %2386 = vmatpush1.xpose.msra.mxu0 0.0
    %2387 = vmatprep.subr.mxu0 0.0
    %2388 = vmatpush1.xpose.msra.mxu0 0.0
    %2389 = vmatprep.subr.mxu0 0.0
    %2390 = vmatpush1.xpose.msra.mxu0 0.0
    %2391 = vmatprep.subr.mxu0 0.0
    %2392 = vmatpush1.xpose.msra.mxu0 0.0
    %2393 = vmatprep.subr.mxu0 0.0
    %2394 = vmatpush1.xpose.msra.mxu0 0.0
    %2395 = vmatprep.subr.mxu0 0.0
    %2396 = vmatpush1.xpose.msra.mxu0 0.0
    %2397 = vmatprep.subr.mxu0 0.0
    %2398 = vmatpush1.xpose.msra.mxu0 0.0
    %2399 = vmatprep.subr.mxu0 0.0
    %2400 = vmatpush1.xpose.msra.mxu0 0.0
    %2401 = vmatprep.subr.mxu0 0.0
    %2402 = vmatpush1.xpose.msra.mxu0 0.0
    %2403 = vmatprep.subr.mxu0 0.0
    %2404 = vmatpush1.xpose.msra.mxu0 0.0
    %2405 = vmatprep.subr.mxu0 0.0
    %2406 = vmatpush1.xpose.msra.mxu0 0.0
    %2407 = vmatprep.subr.mxu0 0.0
    %2408 = vmatpush1.xpose.msra.mxu0 0.0
    %2409 = vmatprep.subr.mxu0 0.0
    %2410 = vmatpush1.xpose.msra.mxu0 0.0
    %2411 = vmatprep.subr.mxu0 0.0
    %2412 = vmatpush1.xpose.msra.mxu0 0.0
    %2413 = vmatprep.subr.mxu0 0.0
    %2414 = vmatpush1.xpose.msra.mxu0 0.0
    %2415 = vmatprep.subr.mxu0 0.0
    %2416 = vmatpush1.xpose.msra.mxu0 0.0
    %2417 = vmatprep.subr.mxu0 0.0
    %2418 = vmatpush1.xpose.msra.mxu0 0.0
    %2419 = vmatprep.subr.mxu0 0.0
    %2420 = vmatpush1.xpose.msra.mxu0 0.0
    %2421 = vmatprep.subr.mxu0 0.0
    %2422 = vmatpush1.xpose.msra.mxu0 0.0
    %2423 = vmatprep.subr.mxu0 0.0
    %2424 = vmatpush1.xpose.msra.mxu0 0.0
    %2425 = vmatprep.subr.mxu0 0.0
    %2426 = vmatpush1.xpose.msra.mxu0 0.0
    %2427 = vmatprep.subr.mxu0 0.0
    %2428 = vmatpush1.xpose.msra.mxu0 0.0
    %2429 = vmatprep.mubr.f32.mxu0 0.0
    %2430 = vmatmul.mubr.f32.gmra.mrb[0].mxu0 %v2357
    %v2431 = vpop.f32.mrb[0].mxu0
    %v2432 = vadd.f32 0.0, %v2431
    %v2433 = vpop.f32.mrb[0].mxu0
    %2434 = vdwg.mxu0
    %v2436 = vsel %vm356, %v2355, 0
    %v2439 = vsel %vm356, %v2237, 0
    %v2442 = vsel %vm356, %v2242, 0
    %2444 = vmatprep.subr.mxu0 0.0
    %2445 = vmatpush1.xpose.msra.mxu0 %v2439
    %2446 = vmatprep.subr.mxu0 0.0
    %2447 = vmatpush1.xpose.msra.mxu0 %v2442
    %2448 = vmatprep.subr.mxu0 0.0
    %2449 = vmatpush1.xpose.msra.mxu0 0.0
    %2450 = vmatprep.subr.mxu0 0.0
    %2451 = vmatpush1.xpose.msra.mxu0 0.0
    %2452 = vmatprep.subr.mxu0 0.0
    %2453 = vmatpush1.xpose.msra.mxu0 0.0
    %2454 = vmatprep.subr.mxu0 0.0
    %2455 = vmatpush1.xpose.msra.mxu0 0.0
    %2456 = vmatprep.subr.mxu0 0.0
    %2457 = vmatpush1.xpose.msra.mxu0 0.0
    %2458 = vmatprep.subr.mxu0 0.0
    %2459 = vmatpush1.xpose.msra.mxu0 0.0
    %2460 = vmatprep.subr.mxu0 0.0
    %2461 = vmatpush1.xpose.msra.mxu0 0.0
    %2462 = vmatprep.subr.mxu0 0.0
    %2463 = vmatpush1.xpose.msra.mxu0 0.0
    %2464 = vmatprep.subr.mxu0 0.0
    %2465 = vmatpush1.xpose.msra.mxu0 0.0
    %2466 = vmatprep.subr.mxu0 0.0
    %2467 = vmatpush1.xpose.msra.mxu0 0.0
    %2468 = vmatprep.subr.mxu0 0.0
    %2469 = vmatpush1.xpose.msra.mxu0 0.0
    %2470 = vmatprep.subr.mxu0 0.0
    %2471 = vmatpush1.xpose.msra.mxu0 0.0
    %2472 = vmatprep.subr.mxu0 0.0
    %2473 = vmatpush1.xpose.msra.mxu0 0.0
    %2474 = vmatprep.subr.mxu0 0.0
    %2475 = vmatpush1.xpose.msra.mxu0 0.0
    %2476 = vmatprep.subr.mxu0 0.0
    %2477 = vmatpush1.xpose.msra.mxu0 0.0
    %2478 = vmatprep.subr.mxu0 0.0
    %2479 = vmatpush1.xpose.msra.mxu0 0.0
    %2480 = vmatprep.subr.mxu0 0.0
    %2481 = vmatpush1.xpose.msra.mxu0 0.0
    %2482 = vmatprep.subr.mxu0 0.0
    %2483 = vmatpush1.xpose.msra.mxu0 0.0
    %2484 = vmatprep.subr.mxu0 0.0
    %2485 = vmatpush1.xpose.msra.mxu0 0.0
    %2486 = vmatprep.subr.mxu0 0.0
    %2487 = vmatpush1.xpose.msra.mxu0 0.0
    %2488 = vmatprep.subr.mxu0 0.0
    %2489 = vmatpush1.xpose.msra.mxu0 0.0
    %2490 = vmatprep.subr.mxu0 0.0
    %2491 = vmatpush1.xpose.msra.mxu0 0.0
    %2492 = vmatprep.subr.mxu0 0.0
    %2493 = vmatpush1.xpose.msra.mxu0 0.0
    %2494 = vmatprep.subr.mxu0 0.0
    %2495 = vmatpush1.xpose.msra.mxu0 0.0
    %2496 = vmatprep.subr.mxu0 0.0
    %2497 = vmatpush1.xpose.msra.mxu0 0.0
    %2498 = vmatprep.subr.mxu0 0.0
    %2499 = vmatpush1.xpose.msra.mxu0 0.0
    %2500 = vmatprep.subr.mxu0 0.0
    %2501 = vmatpush1.xpose.msra.mxu0 0.0
    %2502 = vmatprep.subr.mxu0 0.0
    %2503 = vmatpush1.xpose.msra.mxu0 0.0
    %2504 = vmatprep.subr.mxu0 0.0
    %2505 = vmatpush1.xpose.msra.mxu0 0.0
    %2506 = vmatprep.subr.mxu0 0.0
    %2507 = vmatpush1.xpose.msra.mxu0 0.0
    %2508 = vmatprep.mubr.f32.mxu0 0.0
    %2509 = vmatmul.mubr.f32.gmra.mrb[0].mxu0 %v2436
    %v2510 = vpop.f32.mrb[0].mxu0
    %v2511 = vadd.f32 0.0, %v2510
    %v2512 = vpop.f32.mrb[0].mxu0
    %2513 = vdwg.mxu0
    %vm2514 = vcmask 130048
    %v2515 = vsel %vm2514, %v2432, -inf
    %2516 = vmax.xlane.f32.xlu0 %v2515
    %v2517 = vpop.xlane.xlu0 %2516
    %v2518 = vsel %vm2514, %v2511, -inf
    %2519 = vmax.xlane.f32.xlu0 %v2518
    %v2520 = vpop.xlane.xlu0 %2519
    %v2521 = vsub.f32 %v2432, %v2517
    %v2522 = vsub.f32 %v2511, %v2520
    %v2523 = vmul.f32 %v2521, 1.442695
    %v2524 = vpow.pop %v2523
    %v2525 = vmul.f32 %v2522, 1.442695
    %v2526 = vpow.pop %v2525
    %v2527 = vsel %vm2514, %v2524, 0.0
    %2528 = vadd.xlane.f32.xlu0 %v2527
    %v2529 = vpop.xlane.xlu0 %2528
    %v2530 = vsel %vm2514, %v2526, 0.0
    %2531 = vadd.xlane.f32.xlu0 %v2530
    %v2532 = vpop.xlane.xlu0 %2531
    %v2533 = vrcp.pop %v2529
    %v2534 = vrcp.pop %v2532
    %v2535 = vmul.f32 %v2524, %v2533
    %v2536 = vmul.f32 %v2526, %v2534
    %v2538 = vsel %vm2514, %v2535, 0
    %2540 = vmatprep.subr.mxu0 0.0
    %2541 = vmatpush1.msra.mxu0 %v2332
    %2542 = vmatprep.subr.mxu0 0.0
    %2543 = vmatpush1.msra.mxu0 %v2337
    %2544 = vmatprep.subr.mxu0 0.0
    %2545 = vmatpush1.msra.mxu0 0.0
    %2546 = vmatprep.subr.mxu0 0.0
    %2547 = vmatpush1.msra.mxu0 0.0
    %2548 = vmatprep.subr.mxu0 0.0
    %2549 = vmatpush1.msra.mxu0 0.0
    %2550 = vmatprep.subr.mxu0 0.0
    %2551 = vmatpush1.msra.mxu0 0.0
    %2552 = vmatprep.subr.mxu0 0.0
    %2553 = vmatpush1.msra.mxu0 0.0
    %2554 = vmatprep.subr.mxu0 0.0
    %2555 = vmatpush1.msra.mxu0 0.0
    %2556 = vmatprep.subr.mxu0 0.0
    %2557 = vmatpush1.msra.mxu0 0.0
    %2558 = vmatprep.subr.mxu0 0.0
    %2559 = vmatpush1.msra.mxu0 0.0
    %2560 = vmatprep.subr.mxu0 0.0
    %2561 = vmatpush1.msra.mxu0 0.0
    %2562 = vmatprep.subr.mxu0 0.0
    %2563 = vmatpush1.msra.mxu0 0.0
    %2564 = vmatprep.subr.mxu0 0.0
    %2565 = vmatpush1.msra.mxu0 0.0
    %2566 = vmatprep.subr.mxu0 0.0
    %2567 = vmatpush1.msra.mxu0 0.0
    %2568 = vmatprep.subr.mxu0 0.0
    %2569 = vmatpush1.msra.mxu0 0.0
    %2570 = vmatprep.subr.mxu0 0.0
    %2571 = vmatpush1.msra.mxu0 0.0
    %2572 = vmatprep.subr.mxu0 0.0
    %2573 = vmatpush1.msra.mxu0 0.0
    %2574 = vmatprep.subr.mxu0 0.0
    %2575 = vmatpush1.msra.mxu0 0.0
    %2576 = vmatprep.subr.mxu0 0.0
    %2577 = vmatpush1.msra.mxu0 0.0
    %2578 = vmatprep.subr.mxu0 0.0
    %2579 = vmatpush1.msra.mxu0 0.0
    %2580 = vmatprep.subr.mxu0 0.0
    %2581 = vmatpush1.msra.mxu0 0.0
    %2582 = vmatprep.subr.mxu0 0.0
    %2583 = vmatpush1.msra.mxu0 0.0
    %2584 = vmatprep.subr.mxu0 0.0
    %2585 = vmatpush1.msra.mxu0 0.0
    %2586 = vmatprep.subr.mxu0 0.0
    %2587 = vmatpush1.msra.mxu0 0.0
    %2588 = vmatprep.subr.mxu0 0.0
    %2589 = vmatpush1.msra.mxu0 0.0
    %2590 = vmatprep.subr.mxu0 0.0
    %2591 = vmatpush1.msra.mxu0 0.0
    %2592 = vmatprep.subr.mxu0 0.0
    %2593 = vmatpush1.msra.mxu0 0.0
    %2594 = vmatprep.subr.mxu0 0.0
    %2595 = vmatpush1.msra.mxu0 0.0
    %2596 = vmatprep.subr.mxu0 0.0
    %2597 = vmatpush1.msra.mxu0 0.0
    %2598 = vmatprep.subr.mxu0 0.0
    %2599 = vmatpush1.msra.mxu0 0.0
    %2600 = vmatprep.subr.mxu0 0.0
    %2601 = vmatpush1.msra.mxu0 0.0
    %2602 = vmatprep.subr.mxu0 0.0
    %2603 = vmatpush1.msra.mxu0 0.0
    %2604 = vmatprep.mubr.f32.mxu0 0.0
    %2605 = vmatmul.mubr.f32.gmra.mrb[0].mxu0 %v2538
    %v2606 = vpop.f32.mrb[0].mxu0
    %v2607 = vadd.f32 0.0, %v2606
    %v2608 = vpop.f32.mrb[0].mxu0
    %2609 = vdwg.mxu0
    %v2611 = vsel %vm2514, %v2536, 0
    %2613 = vmatprep.subr.mxu0 0.0
    %2614 = vmatpush1.msra.mxu0 %v2342
    %2615 = vmatprep.subr.mxu0 0.0
    %2616 = vmatpush1.msra.mxu0 %v2347
    %2617 = vmatprep.subr.mxu0 0.0
    %2618 = vmatpush1.msra.mxu0 0.0
    %2619 = vmatprep.subr.mxu0 0.0
    %2620 = vmatpush1.msra.mxu0 0.0
    %2621 = vmatprep.subr.mxu0 0.0
    %2622 = vmatpush1.msra.mxu0 0.0
    %2623 = vmatprep.subr.mxu0 0.0
    %2624 = vmatpush1.msra.mxu0 0.0
    %2625 = vmatprep.subr.mxu0 0.0
    %2626 = vmatpush1.msra.mxu0 0.0
    %2627 = vmatprep.subr.mxu0 0.0
    %2628 = vmatpush1.msra.mxu0 0.0
    %2629 = vmatprep.subr.mxu0 0.0
    %2630 = vmatpush1.msra.mxu0 0.0
    %2631 = vmatprep.subr.mxu0 0.0
    %2632 = vmatpush1.msra.mxu0 0.0
    %2633 = vmatprep.subr.mxu0 0.0
    %2634 = vmatpush1.msra.mxu0 0.0
    %2635 = vmatprep.subr.mxu0 0.0
    %2636 = vmatpush1.msra.mxu0 0.0
    %2637 = vmatprep.subr.mxu0 0.0
    %2638 = vmatpush1.msra.mxu0 0.0
    %2639 = vmatprep.subr.mxu0 0.0
    %2640 = vmatpush1.msra.mxu0 0.0
    %2641 = vmatprep.subr.mxu0 0.0
    %2642 = vmatpush1.msra.mxu0 0.0
    %2643 = vmatprep.subr.mxu0 0.0
    %2644 = vmatpush1.msra.mxu0 0.0
    %2645 = vmatprep.subr.mxu0 0.0
    %2646 = vmatpush1.msra.mxu0 0.0
    %2647 = vmatprep.subr.mxu0 0.0
    %2648 = vmatpush1.msra.mxu0 0.0
    %2649 = vmatprep.subr.mxu0 0.0
    %2650 = vmatpush1.msra.mxu0 0.0
    %2651 = vmatprep.subr.mxu0 0.0
    %2652 = vmatpush1.msra.mxu0 0.0
    %2653 = vmatprep.subr.mxu0 0.0
    %2654 = vmatpush1.msra.mxu0 0.0
    %2655 = vmatprep.subr.mxu0 0.0
    %2656 = vmatpush1.msra.mxu0 0.0
    %2657 = vmatprep.subr.mxu0 0.0
    %2658 = vmatpush1.msra.mxu0 0.0
    %2659 = vmatprep.subr.mxu0 0.0
    %2660 = vmatpush1.msra.mxu0 0.0
    %2661 = vmatprep.subr.mxu0 0.0
    %2662 = vmatpush1.msra.mxu0 0.0
    %2663 = vmatprep.subr.mxu0 0.0
    %2664 = vmatpush1.msra.mxu0 0.0
    %2665 = vmatprep.subr.mxu0 0.0
    %2666 = vmatpush1.msra.mxu0 0.0
    %2667 = vmatprep.subr.mxu0 0.0
    %2668 = vmatpush1.msra.mxu0 0.0
    %2669 = vmatprep.subr.mxu0 0.0
    %2670 = vmatpush1.msra.mxu0 0.0
    %2671 = vmatprep.subr.mxu0 0.0
    %2672 = vmatpush1.msra.mxu0 0.0
    %2673 = vmatprep.subr.mxu0 0.0
    %2674 = vmatpush1.msra.mxu0 0.0
    %2675 = vmatprep.subr.mxu0 0.0
    %2676 = vmatpush1.msra.mxu0 0.0
    %2677 = vmatprep.mubr.f32.mxu0 0.0
    %2678 = vmatmul.mubr.f32.gmra.mrb[0].mxu0 %v2611
    %v2679 = vpop.f32.mrb[0].mxu0
    %v2680 = vadd.f32 0.0, %v2679
    %v2681 = vpop.f32.mrb[0].mxu0
    %2682 = vdwg.mxu0
    %2683 = vrot.lane.b32.xlu0 %v2354, 120
    %v2684 = vpop.permute.xlu0 %2683
    %2685 = vrot.lane.b32.xlu0 %v2227, 120
    %v2686 = vpop.permute.xlu0 %2685
    %2687 = vrot.lane.b32.xlu0 %v2232, 120
    %v2688 = vpop.permute.xlu0 %2687
    %v2689 = vsel %vm356, %v2684, 0
    %v2691 = vsel %vm356, %v2686, 0
    %v2693 = vsel %vm356, %v2688, 0
    %2695 = vmatprep.subr.mxu0 0.0
    %2696 = vmatpush1.xpose.msra.mxu0 %v2691
    %2697 = vmatprep.subr.mxu0 0.0
    %2698 = vmatpush1.xpose.msra.mxu0 %v2693
    %2699 = vmatprep.subr.mxu0 0.0
    %2700 = vmatpush1.xpose.msra.mxu0 0.0
    %2701 = vmatprep.subr.mxu0 0.0
    %2702 = vmatpush1.xpose.msra.mxu0 0.0
    %2703 = vmatprep.subr.mxu0 0.0
    %2704 = vmatpush1.xpose.msra.mxu0 0.0
    %2705 = vmatprep.subr.mxu0 0.0
    %2706 = vmatpush1.xpose.msra.mxu0 0.0
    %2707 = vmatprep.subr.mxu0 0.0
    %2708 = vmatpush1.xpose.msra.mxu0 0.0
    %2709 = vmatprep.subr.mxu0 0.0
    %2710 = vmatpush1.xpose.msra.mxu0 0.0
    %2711 = vmatprep.subr.mxu0 0.0
    %2712 = vmatpush1.xpose.msra.mxu0 0.0
    %2713 = vmatprep.subr.mxu0 0.0
    %2714 = vmatpush1.xpose.msra.mxu0 0.0
    %2715 = vmatprep.subr.mxu0 0.0
    %2716 = vmatpush1.xpose.msra.mxu0 0.0
    %2717 = vmatprep.subr.mxu0 0.0
    %2718 = vmatpush1.xpose.msra.mxu0 0.0
    %2719 = vmatprep.subr.mxu0 0.0
    %2720 = vmatpush1.xpose.msra.mxu0 0.0
    %2721 = vmatprep.subr.mxu0 0.0
    %2722 = vmatpush1.xpose.msra.mxu0 0.0
    %2723 = vmatprep.subr.mxu0 0.0
    %2724 = vmatpush1.xpose.msra.mxu0 0.0
    %2725 = vmatprep.subr.mxu0 0.0
    %2726 = vmatpush1.xpose.msra.mxu0 0.0
    %2727 = vmatprep.subr.mxu0 0.0
    %2728 = vmatpush1.xpose.msra.mxu0 0.0
    %2729 = vmatprep.subr.mxu0 0.0
    %2730 = vmatpush1.xpose.msra.mxu0 0.0
    %2731 = vmatprep.subr.mxu0 0.0
    %2732 = vmatpush1.xpose.msra.mxu0 0.0
    %2733 = vmatprep.subr.mxu0 0.0
    %2734 = vmatpush1.xpose.msra.mxu0 0.0
    %2735 = vmatprep.subr.mxu0 0.0
    %2736 = vmatpush1.xpose.msra.mxu0 0.0
    %2737 = vmatprep.subr.mxu0 0.0
    %2738 = vmatpush1.xpose.msra.mxu0 0.0
    %2739 = vmatprep.subr.mxu0 0.0
    %2740 = vmatpush1.xpose.msra.mxu0 0.0
    %2741 = vmatprep.subr.mxu0 0.0
    %2742 = vmatpush1.xpose.msra.mxu0 0.0
    %2743 = vmatprep.subr.mxu0 0.0
    %2744 = vmatpush1.xpose.msra.mxu0 0.0
    %2745 = vmatprep.subr.mxu0 0.0
    %2746 = vmatpush1.xpose.msra.mxu0 0.0
    %2747 = vmatprep.subr.mxu0 0.0
    %2748 = vmatpush1.xpose.msra.mxu0 0.0
    %2749 = vmatprep.subr.mxu0 0.0
    %2750 = vmatpush1.xpose.msra.mxu0 0.0
    %2751 = vmatprep.subr.mxu0 0.0
    %2752 = vmatpush1.xpose.msra.mxu0 0.0
    %2753 = vmatprep.subr.mxu0 0.0
    %2754 = vmatpush1.xpose.msra.mxu0 0.0
    %2755 = vmatprep.subr.mxu0 0.0
    %2756 = vmatpush1.xpose.msra.mxu0 0.0
    %2757 = vmatprep.subr.mxu0 0.0
    %2758 = vmatpush1.xpose.msra.mxu0 0.0
    %2759 = vmatprep.mubr.f32.mxu0 0.0
    %2760 = vmatmul.mubr.f32.gmra.mrb[0].mxu0 %v2689
    %v2761 = vpop.f32.mrb[0].mxu0
    %v2762 = vadd.f32 0.0, %v2761
    %v2763 = vpop.f32.mrb[0].mxu0
    %2764 = vdwg.mxu0
    %2765 = vrot.lane.b32.xlu0 %v2355, 120
    %v2766 = vpop.permute.xlu0 %2765
    %2767 = vrot.lane.b32.xlu0 %v2237, 120
    %v2768 = vpop.permute.xlu0 %2767
    %2769 = vrot.lane.b32.xlu0 %v2242, 120
    %v2770 = vpop.permute.xlu0 %2769
    %v2771 = vsel %vm356, %v2766, 0
    %v2773 = vsel %vm356, %v2768, 0
    %v2775 = vsel %vm356, %v2770, 0
    %2777 = vmatprep.subr.mxu0 0.0
    %2778 = vmatpush1.xpose.msra.mxu0 %v2773
    %2779 = vmatprep.subr.mxu0 0.0
    %2780 = vmatpush1.xpose.msra.mxu0 %v2775
    %2781 = vmatprep.subr.mxu0 0.0
    %2782 = vmatpush1.xpose.msra.mxu0 0.0
    %2783 = vmatprep.subr.mxu0 0.0
    %2784 = vmatpush1.xpose.msra.mxu0 0.0
    %2785 = vmatprep.subr.mxu0 0.0
    %2786 = vmatpush1.xpose.msra.mxu0 0.0
    %2787 = vmatprep.subr.mxu0 0.0
    %2788 = vmatpush1.xpose.msra.mxu0 0.0
    %2789 = vmatprep.subr.mxu0 0.0
    %2790 = vmatpush1.xpose.msra.mxu0 0.0
    %2791 = vmatprep.subr.mxu0 0.0
    %2792 = vmatpush1.xpose.msra.mxu0 0.0
    %2793 = vmatprep.subr.mxu0 0.0
    %2794 = vmatpush1.xpose.msra.mxu0 0.0
    %2795 = vmatprep.subr.mxu0 0.0
    %2796 = vmatpush1.xpose.msra.mxu0 0.0
    %2797 = vmatprep.subr.mxu0 0.0
    %2798 = vmatpush1.xpose.msra.mxu0 0.0
    %2799 = vmatprep.subr.mxu0 0.0
    %2800 = vmatpush1.xpose.msra.mxu0 0.0
    %2801 = vmatprep.subr.mxu0 0.0
    %2802 = vmatpush1.xpose.msra.mxu0 0.0
    %2803 = vmatprep.subr.mxu0 0.0
    %2804 = vmatpush1.xpose.msra.mxu0 0.0
    %2805 = vmatprep.subr.mxu0 0.0
    %2806 = vmatpush1.xpose.msra.mxu0 0.0
    %2807 = vmatprep.subr.mxu0 0.0
    %2808 = vmatpush1.xpose.msra.mxu0 0.0
    %2809 = vmatprep.subr.mxu0 0.0
    %2810 = vmatpush1.xpose.msra.mxu0 0.0
    %2811 = vmatprep.subr.mxu0 0.0
    %2812 = vmatpush1.xpose.msra.mxu0 0.0
    %2813 = vmatprep.subr.mxu0 0.0
    %2814 = vmatpush1.xpose.msra.mxu0 0.0
    %2815 = vmatprep.subr.mxu0 0.0
    %2816 = vmatpush1.xpose.msra.mxu0 0.0
    %2817 = vmatprep.subr.mxu0 0.0
    %2818 = vmatpush1.xpose.msra.mxu0 0.0
    %2819 = vmatprep.subr.mxu0 0.0
    %2820 = vmatpush1.xpose.msra.mxu0 0.0
    %2821 = vmatprep.subr.mxu0 0.0
    %2822 = vmatpush1.xpose.msra.mxu0 0.0
    %2823 = vmatprep.subr.mxu0 0.0
    %2824 = vmatpush1.xpose.msra.mxu0 0.0
    %2825 = vmatprep.subr.mxu0 0.0
    %2826 = vmatpush1.xpose.msra.mxu0 0.0
    %2827 = vmatprep.subr.mxu0 0.0
    %2828 = vmatpush1.xpose.msra.mxu0 0.0
    %2829 = vmatprep.subr.mxu0 0.0
    %2830 = vmatpush1.xpose.msra.mxu0 0.0
    %2831 = vmatprep.subr.mxu0 0.0
    %2832 = vmatpush1.xpose.msra.mxu0 0.0
    %2833 = vmatprep.subr.mxu0 0.0
    %2834 = vmatpush1.xpose.msra.mxu0 0.0
    %2835 = vmatprep.subr.mxu0 0.0
    %2836 = vmatpush1.xpose.msra.mxu0 0.0
    %2837 = vmatprep.subr.mxu0 0.0
    %2838 = vmatpush1.xpose.msra.mxu0 0.0
    %2839 = vmatprep.subr.mxu0 0.0
    %2840 = vmatpush1.xpose.msra.mxu0 0.0
    %2841 = vmatprep.mubr.f32.mxu0 0.0
    %2842 = vmatmul.mubr.f32.gmra.mrb[0].mxu0 %v2771
    %v2843 = vpop.f32.mrb[0].mxu0
    %v2844 = vadd.f32 0.0, %v2843
    %v2845 = vpop.f32.mrb[0].mxu0
    %2846 = vdwg.mxu0
    %v2847 = vsel %vm2514, %v2762, -inf
    %2848 = vmax.xlane.f32.xlu0 %v2847
    %v2849 = vpop.xlane.xlu0 %2848
    %v2850 = vsel %vm2514, %v2844, -inf
    %2851 = vmax.xlane.f32.xlu0 %v2850
    %v2852 = vpop.xlane.xlu0 %2851
    %v2853 = vsub.f32 %v2762, %v2849
    %v2854 = vsub.f32 %v2844, %v2852
    %v2855 = vmul.f32 %v2853, 1.442695
    %v2856 = vpow.pop %v2855
    %v2857 = vmul.f32 %v2854, 1.442695
    %v2858 = vpow.pop %v2857
    %v2859 = vsel %vm2514, %v2856, 0.0
    %2860 = vadd.xlane.f32.xlu0 %v2859
    %v2861 = vpop.xlane.xlu0 %2860
    %v2862 = vsel %vm2514, %v2858, 0.0
    %2863 = vadd.xlane.f32.xlu0 %v2862
    %v2864 = vpop.xlane.xlu0 %2863
    %v2865 = vrcp.pop %v2861
    %v2866 = vrcp.pop %v2864
    %v2867 = vmul.f32 %v2856, %v2865
    %v2868 = vmul.f32 %v2858, %v2866
    %2871 = vrot.lane.b32.xlu0 %v2332, 120
    %v2872 = vpop.permute.xlu0 %2871
    %2873 = vrot.lane.b32.xlu0 %v2337, 120
    %v2874 = vpop.permute.xlu0 %2873
    %v2878 = vsel %vm2514, %v2867, 0
    %2880 = vmatprep.subr.mxu0 0.0
    %2881 = vmatpush1.msra.mxu0 %v2872
    %2882 = vmatprep.subr.mxu0 0.0
    %2883 = vmatpush1.msra.mxu0 %v2874
    %2884 = vmatprep.subr.mxu0 0.0
    %2885 = vmatpush1.msra.mxu0 0.0
    %2886 = vmatprep.subr.mxu0 0.0
    %2887 = vmatpush1.msra.mxu0 0.0
    %2888 = vmatprep.subr.mxu0 0.0
    %2889 = vmatpush1.msra.mxu0 0.0
    %2890 = vmatprep.subr.mxu0 0.0
    %2891 = vmatpush1.msra.mxu0 0.0
    %2892 = vmatprep.subr.mxu0 0.0
    %2893 = vmatpush1.msra.mxu0 0.0
    %2894 = vmatprep.subr.mxu0 0.0
    %2895 = vmatpush1.msra.mxu0 0.0
    %2896 = vmatprep.subr.mxu0 0.0
    %2897 = vmatpush1.msra.mxu0 0.0
    %2898 = vmatprep.subr.mxu0 0.0
    %2899 = vmatpush1.msra.mxu0 0.0
    %2900 = vmatprep.subr.mxu0 0.0
    %2901 = vmatpush1.msra.mxu0 0.0
    %2902 = vmatprep.subr.mxu0 0.0
    %2903 = vmatpush1.msra.mxu0 0.0
    %2904 = vmatprep.subr.mxu0 0.0
    %2905 = vmatpush1.msra.mxu0 0.0
    %2906 = vmatprep.subr.mxu0 0.0
    %2907 = vmatpush1.msra.mxu0 0.0
    %2908 = vmatprep.subr.mxu0 0.0
    %2909 = vmatpush1.msra.mxu0 0.0
    %2910 = vmatprep.subr.mxu0 0.0
    %2911 = vmatpush1.msra.mxu0 0.0
    %2912 = vmatprep.subr.mxu0 0.0
    %2913 = vmatpush1.msra.mxu0 0.0
    %2914 = vmatprep.subr.mxu0 0.0
    %2915 = vmatpush1.msra.mxu0 0.0
    %2916 = vmatprep.subr.mxu0 0.0
    %2917 = vmatpush1.msra.mxu0 0.0
    %2918 = vmatprep.subr.mxu0 0.0
    %2919 = vmatpush1.msra.mxu0 0.0
    %2920 = vmatprep.subr.mxu0 0.0
    %2921 = vmatpush1.msra.mxu0 0.0
    %2922 = vmatprep.subr.mxu0 0.0
    %2923 = vmatpush1.msra.mxu0 0.0
    %2924 = vmatprep.subr.mxu0 0.0
    %2925 = vmatpush1.msra.mxu0 0.0
    %2926 = vmatprep.subr.mxu0 0.0
    %2927 = vmatpush1.msra.mxu0 0.0
    %2928 = vmatprep.subr.mxu0 0.0
    %2929 = vmatpush1.msra.mxu0 0.0
    %2930 = vmatprep.subr.mxu0 0.0
    %2931 = vmatpush1.msra.mxu0 0.0
    %2932 = vmatprep.subr.mxu0 0.0
    %2933 = vmatpush1.msra.mxu0 0.0
    %2934 = vmatprep.subr.mxu0 0.0
    %2935 = vmatpush1.msra.mxu0 0.0
    %2936 = vmatprep.subr.mxu0 0.0
    %2937 = vmatpush1.msra.mxu0 0.0
    %2938 = vmatprep.subr.mxu0 0.0
    %2939 = vmatpush1.msra.mxu0 0.0
    %2940 = vmatprep.subr.mxu0 0.0
    %2941 = vmatpush1.msra.mxu0 0.0
    %2942 = vmatprep.subr.mxu0 0.0
    %2943 = vmatpush1.msra.mxu0 0.0
    %2944 = vmatprep.mubr.f32.mxu0 0.0
    %2945 = vmatmul.mubr.f32.gmra.mrb[0].mxu0 %v2878
    %v2946 = vpop.f32.mrb[0].mxu0
    %v2947 = vadd.f32 0.0, %v2946
    %v2948 = vpop.f32.mrb[0].mxu0
    %2949 = vdwg.mxu0
    %2952 = vrot.lane.b32.xlu0 %v2342, 120
    %v2953 = vpop.permute.xlu0 %2952
    %2954 = vrot.lane.b32.xlu0 %v2347, 120
    %v2955 = vpop.permute.xlu0 %2954
    %v2959 = vsel %vm2514, %v2868, 0
    %2961 = vmatprep.subr.mxu0 0.0
    %2962 = vmatpush1.msra.mxu0 %v2953
    %2963 = vmatprep.subr.mxu0 0.0
    %2964 = vmatpush1.msra.mxu0 %v2955
    %2965 = vmatprep.subr.mxu0 0.0
    %2966 = vmatpush1.msra.mxu0 0.0
    %2967 = vmatprep.subr.mxu0 0.0
    %2968 = vmatpush1.msra.mxu0 0.0
    %2969 = vmatprep.subr.mxu0 0.0
    %2970 = vmatpush1.msra.mxu0 0.0
    %2971 = vmatprep.subr.mxu0 0.0
    %2972 = vmatpush1.msra.mxu0 0.0
    %2973 = vmatprep.subr.mxu0 0.0
    %2974 = vmatpush1.msra.mxu0 0.0
    %2975 = vmatprep.subr.mxu0 0.0
    %2976 = vmatpush1.msra.mxu0 0.0
    %2977 = vmatprep.subr.mxu0 0.0
    %2978 = vmatpush1.msra.mxu0 0.0
    %2979 = vmatprep.subr.mxu0 0.0
    %2980 = vmatpush1.msra.mxu0 0.0
    %2981 = vmatprep.subr.mxu0 0.0
    %2982 = vmatpush1.msra.mxu0 0.0
    %2983 = vmatprep.subr.mxu0 0.0
    %2984 = vmatpush1.msra.mxu0 0.0
    %2985 = vmatprep.subr.mxu0 0.0
    %2986 = vmatpush1.msra.mxu0 0.0
    %2987 = vmatprep.subr.mxu0 0.0
    %2988 = vmatpush1.msra.mxu0 0.0
    %2989 = vmatprep.subr.mxu0 0.0
    %2990 = vmatpush1.msra.mxu0 0.0
    %2991 = vmatprep.subr.mxu0 0.0
    %2992 = vmatpush1.msra.mxu0 0.0
    %2993 = vmatprep.subr.mxu0 0.0
    %2994 = vmatpush1.msra.mxu0 0.0
    %2995 = vmatprep.subr.mxu0 0.0
    %2996 = vmatpush1.msra.mxu0 0.0
    %2997 = vmatprep.subr.mxu0 0.0
    %2998 = vmatpush1.msra.mxu0 0.0
    %2999 = vmatprep.subr.mxu0 0.0
    %3000 = vmatpush1.msra.mxu0 0.0
    %3001 = vmatprep.subr.mxu0 0.0
    %3002 = vmatpush1.msra.mxu0 0.0
    %3003 = vmatprep.subr.mxu0 0.0
    %3004 = vmatpush1.msra.mxu0 0.0
    %3005 = vmatprep.subr.mxu0 0.0
    %3006 = vmatpush1.msra.mxu0 0.0
    %3007 = vmatprep.subr.mxu0 0.0
    %3008 = vmatpush1.msra.mxu0 0.0
    %3009 = vmatprep.subr.mxu0 0.0
    %3010 = vmatpush1.msra.mxu0 0.0
    %3011 = vmatprep.subr.mxu0 0.0
    %3012 = vmatpush1.msra.mxu0 0.0
    %3013 = vmatprep.subr.mxu0 0.0
    %3014 = vmatpush1.msra.mxu0 0.0
    %3015 = vmatprep.subr.mxu0 0.0
    %3016 = vmatpush1.msra.mxu0 0.0
    %3017 = vmatprep.subr.mxu0 0.0
    %3018 = vmatpush1.msra.mxu0 0.0
    %3019 = vmatprep.subr.mxu0 0.0
    %3020 = vmatpush1.msra.mxu0 0.0
    %3021 = vmatprep.subr.mxu0 0.0
    %3022 = vmatpush1.msra.mxu0 0.0
    %3023 = vmatprep.subr.mxu0 0.0
    %3024 = vmatpush1.msra.mxu0 0.0
    %3025 = vmatprep.mubr.f32.mxu0 0.0
    %3026 = vmatmul.mubr.f32.gmra.mrb[0].mxu0 %v2959
    %v3027 = vpop.f32.mrb[0].mxu0
    %v3028 = vadd.f32 0.0, %v3027
    %v3029 = vpop.f32.mrb[0].mxu0
    %3030 = vdwg.mxu0
    %v3032 = vsel %vm356, %v2947, 0
    %v3035 = vsel %vm356, %v3028, 0
    %3037 = vmatprep.subr.mxu0 0.0
    %3038 = vmatpush1.msra.mxu0 %v2351
    %3039 = vmatprep.subr.mxu0 0.0
    %3040 = vmatpush1.msra.mxu0 0.0
    %3041 = vmatprep.subr.mxu0 0.0
    %3042 = vmatpush1.msra.mxu0 0.0
    %3043 = vmatprep.subr.mxu0 0.0
    %3044 = vmatpush1.msra.mxu0 0.0
    %3045 = vmatprep.subr.mxu0 0.0
    %3046 = vmatpush1.msra.mxu0 0.0
    %3047 = vmatprep.subr.mxu0 0.0
    %3048 = vmatpush1.msra.mxu0 0.0
    %3049 = vmatprep.subr.mxu0 0.0
    %3050 = vmatpush1.msra.mxu0 0.0
    %3051 = vmatprep.subr.mxu0 0.0
    %3052 = vmatpush1.msra.mxu0 0.0
    %3053 = vmatprep.subr.mxu0 0.0
    %3054 = vmatpush1.msra.mxu0 0.0
    %3055 = vmatprep.subr.mxu0 0.0
    %3056 = vmatpush1.msra.mxu0 0.0
    %3057 = vmatprep.subr.mxu0 0.0
    %3058 = vmatpush1.msra.mxu0 0.0
    %3059 = vmatprep.subr.mxu0 0.0
    %3060 = vmatpush1.msra.mxu0 0.0
    %3061 = vmatprep.subr.mxu0 0.0
    %3062 = vmatpush1.msra.mxu0 0.0
    %3063 = vmatprep.subr.mxu0 0.0
    %3064 = vmatpush1.msra.mxu0 0.0
    %3065 = vmatprep.subr.mxu0 0.0
    %3066 = vmatpush1.msra.mxu0 0.0
    %3067 = vmatprep.subr.mxu0 0.0
    %3068 = vmatpush1.msra.mxu0 0.0
    %3069 = vmatprep.subr.mxu0 0.0
    %3070 = vmatpush1.msra.mxu0 0.0
    %3071 = vmatprep.subr.mxu0 0.0
    %3072 = vmatpush1.msra.mxu0 0.0
    %3073 = vmatprep.subr.mxu0 0.0
    %3074 = vmatpush1.msra.mxu0 0.0
    %3075 = vmatprep.subr.mxu0 0.0
    %3076 = vmatpush1.msra.mxu0 0.0
    %3077 = vmatprep.subr.mxu0 0.0
    %3078 = vmatpush1.msra.mxu0 0.0
    %3079 = vmatprep.subr.mxu0 0.0
    %3080 = vmatpush1.msra.mxu0 0.0
    %3081 = vmatprep.subr.mxu0 0.0
    %3082 = vmatpush1.msra.mxu0 0.0
    %3083 = vmatprep.subr.mxu0 0.0
    %3084 = vmatpush1.msra.mxu0 0.0
    %3085 = vmatprep.subr.mxu0 0.0
    %3086 = vmatpush1.msra.mxu0 0.0
    %3087 = vmatprep.subr.mxu0 0.0
    %3088 = vmatpush1.msra.mxu0 0.0
    %3089 = vmatprep.subr.mxu0 0.0
    %3090 = vmatpush1.msra.mxu0 0.0
    %3091 = vmatprep.subr.mxu0 0.0
    %3092 = vmatpush1.msra.mxu0 0.0
    %3093 = vmatprep.subr.mxu0 0.0
    %3094 = vmatpush1.msra.mxu0 0.0
    %3095 = vmatprep.subr.mxu0 0.0
    %3096 = vmatpush1.msra.mxu0 0.0
    %3097 = vmatprep.subr.mxu0 0.0
    %3098 = vmatpush1.msra.mxu0 0.0
    %3099 = vmatprep.subr.mxu0 0.0
    %3100 = vmatpush1.msra.mxu0 0.0
    %3101 = vmatprep.mubr.f32.mxu0 0.0
    %3102 = vmatmul.mubr.f32.gmra.mrb[0].mxu0 %v3032
    %v3103 = vpop.f32.mrb[0].mxu0
    %v3104 = vadd.f32 0.0, %v3103
    %v3105 = vpop.f32.mrb[0].mxu0
    %3106 = vmatprep.mubr.f32.mxu0 0.0
    %3107 = vmatmul.mubr.f32.gmra.mrb[0].mxu0 %v3035
    %v3108 = vpop.f32.mrb[0].mxu0
    %v3109 = vadd.f32 0.0, %v3108
    %v3110 = vpop.f32.mrb[0].mxu0
    %3111 = vdwg.mxu0
    %v3113 = vsel %vm356, %v2607, 0
    %v3116 = vsel %vm356, %v2680, 0
    %3118 = vmatprep.subr.mxu0 0.0
    %3119 = vmatpush1.msra.mxu0 %v2350
    %3120 = vmatprep.subr.mxu0 0.0
    %3121 = vmatpush1.msra.mxu0 0.0
    %3122 = vmatprep.subr.mxu0 0.0
    %3123 = vmatpush1.msra.mxu0 0.0
    %3124 = vmatprep.subr.mxu0 0.0
    %3125 = vmatpush1.msra.mxu0 0.0
    %3126 = vmatprep.subr.mxu0 0.0
    %3127 = vmatpush1.msra.mxu0 0.0
    %3128 = vmatprep.subr.mxu0 0.0
    %3129 = vmatpush1.msra.mxu0 0.0
    %3130 = vmatprep.subr.mxu0 0.0
    %3131 = vmatpush1.msra.mxu0 0.0
    %3132 = vmatprep.subr.mxu0 0.0
    %3133 = vmatpush1.msra.mxu0 0.0
    %3134 = vmatprep.subr.mxu0 0.0
    %3135 = vmatpush1.msra.mxu0 0.0
    %3136 = vmatprep.subr.mxu0 0.0
    %3137 = vmatpush1.msra.mxu0 0.0
    %3138 = vmatprep.subr.mxu0 0.0
    %3139 = vmatpush1.msra.mxu0 0.0
    %3140 = vmatprep.subr.mxu0 0.0
    %3141 = vmatpush1.msra.mxu0 0.0
    %3142 = vmatprep.subr.mxu0 0.0
    %3143 = vmatpush1.msra.mxu0 0.0
    %3144 = vmatprep.subr.mxu0 0.0
    %3145 = vmatpush1.msra.mxu0 0.0
    %3146 = vmatprep.subr.mxu0 0.0
    %3147 = vmatpush1.msra.mxu0 0.0
    %3148 = vmatprep.subr.mxu0 0.0
    %3149 = vmatpush1.msra.mxu0 0.0
    %3150 = vmatprep.subr.mxu0 0.0
    %3151 = vmatpush1.msra.mxu0 0.0
    %3152 = vmatprep.subr.mxu0 0.0
    %3153 = vmatpush1.msra.mxu0 0.0
    %3154 = vmatprep.subr.mxu0 0.0
    %3155 = vmatpush1.msra.mxu0 0.0
    %3156 = vmatprep.subr.mxu0 0.0
    %3157 = vmatpush1.msra.mxu0 0.0
    %3158 = vmatprep.subr.mxu0 0.0
    %3159 = vmatpush1.msra.mxu0 0.0
    %3160 = vmatprep.subr.mxu0 0.0
    %3161 = vmatpush1.msra.mxu0 0.0
    %3162 = vmatprep.subr.mxu0 0.0
    %3163 = vmatpush1.msra.mxu0 0.0
    %3164 = vmatprep.subr.mxu0 0.0
    %3165 = vmatpush1.msra.mxu0 0.0
    %3166 = vmatprep.subr.mxu0 0.0
    %3167 = vmatpush1.msra.mxu0 0.0
    %3168 = vmatprep.subr.mxu0 0.0
    %3169 = vmatpush1.msra.mxu0 0.0
    %3170 = vmatprep.subr.mxu0 0.0
    %3171 = vmatpush1.msra.mxu0 0.0
    %3172 = vmatprep.subr.mxu0 0.0
    %3173 = vmatpush1.msra.mxu0 0.0
    %3174 = vmatprep.subr.mxu0 0.0
    %3175 = vmatpush1.msra.mxu0 0.0
    %3176 = vmatprep.subr.mxu0 0.0
    %3177 = vmatpush1.msra.mxu0 0.0
    %3178 = vmatprep.subr.mxu0 0.0
    %3179 = vmatpush1.msra.mxu0 0.0
    %3180 = vmatprep.subr.mxu0 0.0
    %3181 = vmatpush1.msra.mxu0 0.0
    %3182 = vmatprep.mubr.f32.mxu0 0.0
    %3183 = vmatmul.mubr.f32.gmra.mrb[0].mxu0 %v3113
    %v3184 = vpop.f32.mrb[0].mxu0
    %v3185 = vadd.f32 %v3104, %v3184
    %v3186 = vpop.f32.mrb[0].mxu0
    %3187 = vmatprep.mubr.f32.mxu0 0.0
    %3188 = vmatmul.mubr.f32.gmra.mrb[0].mxu0 %v3116
    %v3189 = vpop.f32.mrb[0].mxu0
    %v3190 = vadd.f32 %v3109, %v3189
    %v3191 = vpop.f32.mrb[0].mxu0
    %3192 = vdwg.mxu0
    %3193 = vrot.lane.b32.xlu0 %v2354, 112
    %v3194 = vpop.permute.xlu0 %3193
    %3195 = vrot.lane.b32.xlu0 %v2227, 112
    %v3196 = vpop.permute.xlu0 %3195
    %3197 = vrot.lane.b32.xlu0 %v2232, 112
    %v3198 = vpop.permute.xlu0 %3197
    %v3199 = vsel %vm356, %v3194, 0
    %v3201 = vsel %vm356, %v3196, 0
    %v3203 = vsel %vm356, %v3198, 0
    %3205 = vmatprep.subr.mxu0 0.0
    %3206 = vmatpush1.xpose.msra.mxu0 %v3201
    %3207 = vmatprep.subr.mxu0 0.0
    %3208 = vmatpush1.xpose.msra.mxu0 %v3203
    %3209 = vmatprep.subr.mxu0 0.0
    %3210 = vmatpush1.xpose.msra.mxu0 0.0
    %3211 = vmatprep.subr.mxu0 0.0
    %3212 = vmatpush1.xpose.msra.mxu0 0.0
    %3213 = vmatprep.subr.mxu0 0.0
    %3214 = vmatpush1.xpose.msra.mxu0 0.0
    %3215 = vmatprep.subr.mxu0 0.0
    %3216 = vmatpush1.xpose.msra.mxu0 0.0
    %3217 = vmatprep.subr.mxu0 0.0
    %3218 = vmatpush1.xpose.msra.mxu0 0.0
    %3219 = vmatprep.subr.mxu0 0.0
    %3220 = vmatpush1.xpose.msra.mxu0 0.0
    %3221 = vmatprep.subr.mxu0 0.0
    %3222 = vmatpush1.xpose.msra.mxu0 0.0
    %3223 = vmatprep.subr.mxu0 0.0
    %3224 = vmatpush1.xpose.msra.mxu0 0.0
    %3225 = vmatprep.subr.mxu0 0.0
    %3226 = vmatpush1.xpose.msra.mxu0 0.0
    %3227 = vmatprep.subr.mxu0 0.0
    %3228 = vmatpush1.xpose.msra.mxu0 0.0
    %3229 = vmatprep.subr.mxu0 0.0
    %3230 = vmatpush1.xpose.msra.mxu0 0.0
    %3231 = vmatprep.subr.mxu0 0.0
    %3232 = vmatpush1.xpose.msra.mxu0 0.0
    %3233 = vmatprep.subr.mxu0 0.0
    %3234 = vmatpush1.xpose.msra.mxu0 0.0
    %3235 = vmatprep.subr.mxu0 0.0
    %3236 = vmatpush1.xpose.msra.mxu0 0.0
    %3237 = vmatprep.subr.mxu0 0.0
    %3238 = vmatpush1.xpose.msra.mxu0 0.0
    %3239 = vmatprep.subr.mxu0 0.0
    %3240 = vmatpush1.xpose.msra.mxu0 0.0
    %3241 = vmatprep.subr.mxu0 0.0
    %3242 = vmatpush1.xpose.msra.mxu0 0.0
    %3243 = vmatprep.subr.mxu0 0.0
    %3244 = vmatpush1.xpose.msra.mxu0 0.0
    %3245 = vmatprep.subr.mxu0 0.0
    %3246 = vmatpush1.xpose.msra.mxu0 0.0
    %3247 = vmatprep.subr.mxu0 0.0
    %3248 = vmatpush1.xpose.msra.mxu0 0.0
    %3249 = vmatprep.subr.mxu0 0.0
    %3250 = vmatpush1.xpose.msra.mxu0 0.0
    %3251 = vmatprep.subr.mxu0 0.0
    %3252 = vmatpush1.xpose.msra.mxu0 0.0
    %3253 = vmatprep.subr.mxu0 0.0
    %3254 = vmatpush1.xpose.msra.mxu0 0.0
    %3255 = vmatprep.subr.mxu0 0.0
    %3256 = vmatpush1.xpose.msra.mxu0 0.0
    %3257 = vmatprep.subr.mxu0 0.0
    %3258 = vmatpush1.xpose.msra.mxu0 0.0
    %3259 = vmatprep.subr.mxu0 0.0
    %3260 = vmatpush1.xpose.msra.mxu0 0.0
    %3261 = vmatprep.subr.mxu0 0.0
    %3262 = vmatpush1.xpose.msra.mxu0 0.0
    %3263 = vmatprep.subr.mxu0 0.0
    %3264 = vmatpush1.xpose.msra.mxu0 0.0
    %3265 = vmatprep.subr.mxu0 0.0
    %3266 = vmatpush1.xpose.msra.mxu0 0.0
    %3267 = vmatprep.subr.mxu0 0.0
    %3268 = vmatpush1.xpose.msra.mxu0 0.0
    %3269 = vmatprep.mubr.f32.mxu0 0.0
    %3270 = vmatmul.mubr.f32.gmra.mrb[0].mxu0 %v3199
    %v3271 = vpop.f32.mrb[0].mxu0
    %v3272 = vadd.f32 0.0, %v3271
    %v3273 = vpop.f32.mrb[0].mxu0
    %3274 = vdwg.mxu0
    %3275 = vrot.lane.b32.xlu0 %v2355, 112
    %v3276 = vpop.permute.xlu0 %3275
    %3277 = vrot.lane.b32.xlu0 %v2237, 112
    %v3278 = vpop.permute.xlu0 %3277
    %3279 = vrot.lane.b32.xlu0 %v2242, 112
    %v3280 = vpop.permute.xlu0 %3279
    %v3281 = vsel %vm356, %v3276, 0
    %v3283 = vsel %vm356, %v3278, 0
    %v3285 = vsel %vm356, %v3280, 0
    %3287 = vmatprep.subr.mxu0 0.0
    %3288 = vmatpush1.xpose.msra.mxu0 %v3283
    %3289 = vmatprep.subr.mxu0 0.0
    %3290 = vmatpush1.xpose.msra.mxu0 %v3285
    %3291 = vmatprep.subr.mxu0 0.0
    %3292 = vmatpush1.xpose.msra.mxu0 0.0
    %3293 = vmatprep.subr.mxu0 0.0
    %3294 = vmatpush1.xpose.msra.mxu0 0.0
    %3295 = vmatprep.subr.mxu0 0.0
    %3296 = vmatpush1.xpose.msra.mxu0 0.0
    %3297 = vmatprep.subr.mxu0 0.0
    %3298 = vmatpush1.xpose.msra.mxu0 0.0
    %3299 = vmatprep.subr.mxu0 0.0
    %3300 = vmatpush1.xpose.msra.mxu0 0.0
    %3301 = vmatprep.subr.mxu0 0.0
    %3302 = vmatpush1.xpose.msra.mxu0 0.0
    %3303 = vmatprep.subr.mxu0 0.0
    %3304 = vmatpush1.xpose.msra.mxu0 0.0
    %3305 = vmatprep.subr.mxu0 0.0
    %3306 = vmatpush1.xpose.msra.mxu0 0.0
    %3307 = vmatprep.subr.mxu0 0.0
    %3308 = vmatpush1.xpose.msra.mxu0 0.0
    %3309 = vmatprep.subr.mxu0 0.0
    %3310 = vmatpush1.xpose.msra.mxu0 0.0
    %3311 = vmatprep.subr.mxu0 0.0
    %3312 = vmatpush1.xpose.msra.mxu0 0.0
    %3313 = vmatprep.subr.mxu0 0.0
    %3314 = vmatpush1.xpose.msra.mxu0 0.0
    %3315 = vmatprep.subr.mxu0 0.0
    %3316 = vmatpush1.xpose.msra.mxu0 0.0
    %3317 = vmatprep.subr.mxu0 0.0
    %3318 = vmatpush1.xpose.msra.mxu0 0.0
    %3319 = vmatprep.subr.mxu0 0.0
    %3320 = vmatpush1.xpose.msra.mxu0 0.0
    %3321 = vmatprep.subr.mxu0 0.0
    %3322 = vmatpush1.xpose.msra.mxu0 0.0
    %3323 = vmatprep.subr.mxu0 0.0
    %3324 = vmatpush1.xpose.msra.mxu0 0.0
    %3325 = vmatprep.subr.mxu0 0.0
    %3326 = vmatpush1.xpose.msra.mxu0 0.0
    %3327 = vmatprep.subr.mxu0 0.0
    %3328 = vmatpush1.xpose.msra.mxu0 0.0
    %3329 = vmatprep.subr.mxu0 0.0
    %3330 = vmatpush1.xpose.msra.mxu0 0.0
    %3331 = vmatprep.subr.mxu0 0.0
    %3332 = vmatpush1.xpose.msra.mxu0 0.0
    %3333 = vmatprep.subr.mxu0 0.0
    %3334 = vmatpush1.xpose.msra.mxu0 0.0
    %3335 = vmatprep.subr.mxu0 0.0
    %3336 = vmatpush1.xpose.msra.mxu0 0.0
    %3337 = vmatprep.subr.mxu0 0.0
    %3338 = vmatpush1.xpose.msra.mxu0 0.0
    %3339 = vmatprep.subr.mxu0 0.0
    %3340 = vmatpush1.xpose.msra.mxu0 0.0
    %3341 = vmatprep.subr.mxu0 0.0
    %3342 = vmatpush1.xpose.msra.mxu0 0.0
    %3343 = vmatprep.subr.mxu0 0.0
    %3344 = vmatpush1.xpose.msra.mxu0 0.0
    %3345 = vmatprep.subr.mxu0 0.0
    %3346 = vmatpush1.xpose.msra.mxu0 0.0
    %3347 = vmatprep.subr.mxu0 0.0
    %3348 = vmatpush1.xpose.msra.mxu0 0.0
    %3349 = vmatprep.subr.mxu0 0.0
    %3350 = vmatpush1.xpose.msra.mxu0 0.0
    %3351 = vmatprep.mubr.f32.mxu0 0.0
    %3352 = vmatmul.mubr.f32.gmra.mrb[0].mxu0 %v3281
    %v3353 = vpop.f32.mrb[0].mxu0
    %v3354 = vadd.f32 0.0, %v3353
    %v3355 = vpop.f32.mrb[0].mxu0
    %3356 = vdwg.mxu0
    %v3357 = vsel %vm2514, %v3272, -inf
    %3358 = vmax.xlane.f32.xlu0 %v3357
    %v3359 = vpop.xlane.xlu0 %3358
    %v3360 = vsel %vm2514, %v3354, -inf
    %3361 = vmax.xlane.f32.xlu0 %v3360
    %v3362 = vpop.xlane.xlu0 %3361
    %v3363 = vsub.f32 %v3272, %v3359
    %v3364 = vsub.f32 %v3354, %v3362
    %v3365 = vmul.f32 %v3363, 1.442695
    %v3366 = vpow.pop %v3365
    %v3367 = vmul.f32 %v3364, 1.442695
    %v3368 = vpow.pop %v3367
    %v3369 = vsel %vm2514, %v3366, 0.0
    %3370 = vadd.xlane.f32.xlu0 %v3369
    %v3371 = vpop.xlane.xlu0 %3370
    %v3372 = vsel %vm2514, %v3368, 0.0
    %3373 = vadd.xlane.f32.xlu0 %v3372
    %v3374 = vpop.xlane.xlu0 %3373
    %v3375 = vrcp.pop %v3371
    %v3376 = vrcp.pop %v3374
    %v3377 = vmul.f32 %v3366, %v3375
    %v3378 = vmul.f32 %v3368, %v3376
    %3379 = vrot.lane.b32.xlu0 %v2332, 112
    %v3380 = vpop.permute.xlu0 %3379
    %3381 = vrot.lane.b32.xlu0 %v2337, 112
    %v3382 = vpop.permute.xlu0 %3381
    %v3386 = vsel %vm2514, %v3377, 0
    %3388 = vmatprep.subr.mxu0 0.0
    %3389 = vmatpush1.msra.mxu0 %v3380
    %3390 = vmatprep.subr.mxu0 0.0
    %3391 = vmatpush1.msra.mxu0 %v3382
    %3392 = vmatprep.subr.mxu0 0.0
    %3393 = vmatpush1.msra.mxu0 0.0
    %3394 = vmatprep.subr.mxu0 0.0
    %3395 = vmatpush1.msra.mxu0 0.0
    %3396 = vmatprep.subr.mxu0 0.0
    %3397 = vmatpush1.msra.mxu0 0.0
    %3398 = vmatprep.subr.mxu0 0.0
    %3399 = vmatpush1.msra.mxu0 0.0
    %3400 = vmatprep.subr.mxu0 0.0
    %3401 = vmatpush1.msra.mxu0 0.0
    %3402 = vmatprep.subr.mxu0 0.0
    %3403 = vmatpush1.msra.mxu0 0.0
    %3404 = vmatprep.subr.mxu0 0.0
    %3405 = vmatpush1.msra.mxu0 0.0
    %3406 = vmatprep.subr.mxu0 0.0
    %3407 = vmatpush1.msra.mxu0 0.0
    %3408 = vmatprep.subr.mxu0 0.0
    %3409 = vmatpush1.msra.mxu0 0.0
    %3410 = vmatprep.subr.mxu0 0.0
    %3411 = vmatpush1.msra.mxu0 0.0
    %3412 = vmatprep.subr.mxu0 0.0
    %3413 = vmatpush1.msra.mxu0 0.0
    %3414 = vmatprep.subr.mxu0 0.0
    %3415 = vmatpush1.msra.mxu0 0.0
    %3416 = vmatprep.subr.mxu0 0.0
    %3417 = vmatpush1.msra.mxu0 0.0
    %3418 = vmatprep.subr.mxu0 0.0
    %3419 = vmatpush1.msra.mxu0 0.0
    %3420 = vmatprep.subr.mxu0 0.0
    %3421 = vmatpush1.msra.mxu0 0.0
    %3422 = vmatprep.subr.mxu0 0.0
    %3423 = vmatpush1.msra.mxu0 0.0
    %3424 = vmatprep.subr.mxu0 0.0
    %3425 = vmatpush1.msra.mxu0 0.0
    %3426 = vmatprep.subr.mxu0 0.0
    %3427 = vmatpush1.msra.mxu0 0.0
    %3428 = vmatprep.subr.mxu0 0.0
    %3429 = vmatpush1.msra.mxu0 0.0
    %3430 = vmatprep.subr.mxu0 0.0
    %3431 = vmatpush1.msra.mxu0 0.0
    %3432 = vmatprep.subr.mxu0 0.0
    %3433 = vmatpush1.msra.mxu0 0.0
    %3434 = vmatprep.subr.mxu0 0.0
    %3435 = vmatpush1.msra.mxu0 0.0
    %3436 = vmatprep.subr.mxu0 0.0
    %3437 = vmatpush1.msra.mxu0 0.0
    %3438 = vmatprep.subr.mxu0 0.0
    %3439 = vmatpush1.msra.mxu0 0.0
    %3440 = vmatprep.subr.mxu0 0.0
    %3441 = vmatpush1.msra.mxu0 0.0
    %3442 = vmatprep.subr.mxu0 0.0
    %3443 = vmatpush1.msra.mxu0 0.0
    %3444 = vmatprep.subr.mxu0 0.0
    %3445 = vmatpush1.msra.mxu0 0.0
    %3446 = vmatprep.subr.mxu0 0.0
    %3447 = vmatpush1.msra.mxu0 0.0
    %3448 = vmatprep.subr.mxu0 0.0
    %3449 = vmatpush1.msra.mxu0 0.0
    %3450 = vmatprep.subr.mxu0 0.0
    %3451 = vmatpush1.msra.mxu0 0.0
    %3452 = vmatprep.mubr.f32.mxu0 0.0
    %3453 = vmatmul.mubr.f32.gmra.mrb[0].mxu0 %v3386
    %v3454 = vpop.f32.mrb[0].mxu0
    %v3455 = vadd.f32 0.0, %v3454
    %v3456 = vpop.f32.mrb[0].mxu0
    %3457 = vdwg.mxu0
    %3458 = vrot.lane.b32.xlu0 %v2342, 112
    %v3459 = vpop.permute.xlu0 %3458
    %3460 = vrot.lane.b32.xlu0 %v2347, 112
    %v3461 = vpop.permute.xlu0 %3460
    %v3465 = vsel %vm2514, %v3378, 0
    %3467 = vmatprep.subr.mxu0 0.0
    %3468 = vmatpush1.msra.mxu0 %v3459
    %3469 = vmatprep.subr.mxu0 0.0
    %3470 = vmatpush1.msra.mxu0 %v3461
    %3471 = vmatprep.subr.mxu0 0.0
    %3472 = vmatpush1.msra.mxu0 0.0
    %3473 = vmatprep.subr.mxu0 0.0
    %3474 = vmatpush1.msra.mxu0 0.0
    %3475 = vmatprep.subr.mxu0 0.0
    %3476 = vmatpush1.msra.mxu0 0.0
    %3477 = vmatprep.subr.mxu0 0.0
    %3478 = vmatpush1.msra.mxu0 0.0
    %3479 = vmatprep.subr.mxu0 0.0
    %3480 = vmatpush1.msra.mxu0 0.0
    %3481 = vmatprep.subr.mxu0 0.0
    %3482 = vmatpush1.msra.mxu0 0.0
    %3483 = vmatprep.subr.mxu0 0.0
    %3484 = vmatpush1.msra.mxu0 0.0
    %3485 = vmatprep.subr.mxu0 0.0
    %3486 = vmatpush1.msra.mxu0 0.0
    %3487 = vmatprep.subr.mxu0 0.0
    %3488 = vmatpush1.msra.mxu0 0.0
    %3489 = vmatprep.subr.mxu0 0.0
    %3490 = vmatpush1.msra.mxu0 0.0
    %3491 = vmatprep.subr.mxu0 0.0
    %3492 = vmatpush1.msra.mxu0 0.0
    %3493 = vmatprep.subr.mxu0 0.0
    %3494 = vmatpush1.msra.mxu0 0.0
    %3495 = vmatprep.subr.mxu0 0.0
    %3496 = vmatpush1.msra.mxu0 0.0
    %3497 = vmatprep.subr.mxu0 0.0
    %3498 = vmatpush1.msra.mxu0 0.0
    %3499 = vmatprep.subr.mxu0 0.0
    %3500 = vmatpush1.msra.mxu0 0.0
    %3501 = vmatprep.subr.mxu0 0.0
    %3502 = vmatpush1.msra.mxu0 0.0
    %3503 = vmatprep.subr.mxu0 0.0
    %3504 = vmatpush1.msra.mxu0 0.0
    %3505 = vmatprep.subr.mxu0 0.0
    %3506 = vmatpush1.msra.mxu0 0.0
    %3507 = vmatprep.subr.mxu0 0.0
    %3508 = vmatpush1.msra.mxu0 0.0
    %3509 = vmatprep.subr.mxu0 0.0
    %3510 = vmatpush1.msra.mxu0 0.0
    %3511 = vmatprep.subr.mxu0 0.0
    %3512 = vmatpush1.msra.mxu0 0.0
    %3513 = vmatprep.subr.mxu0 0.0
    %3514 = vmatpush1.msra.mxu0 0.0
    %3515 = vmatprep.subr.mxu0 0.0
    %3516 = vmatpush1.msra.mxu0 0.0
    %3517 = vmatprep.subr.mxu0 0.0
    %3518 = vmatpush1.msra.mxu0 0.0
    %3519 = vmatprep.subr.mxu0 0.0
    %3520 = vmatpush1.msra.mxu0 0.0
    %3521 = vmatprep.subr.mxu0 0.0
    %3522 = vmatpush1.msra.mxu0 0.0
    %3523 = vmatprep.subr.mxu0 0.0
    %3524 = vmatpush1.msra.mxu0 0.0
    %3525 = vmatprep.subr.mxu0 0.0
    %3526 = vmatpush1.msra.mxu0 0.0
    %3527 = vmatprep.subr.mxu0 0.0
    %3528 = vmatpush1.msra.mxu0 0.0
    %3529 = vmatprep.subr.mxu0 0.0
    %3530 = vmatpush1.msra.mxu0 0.0
    %3531 = vmatprep.mubr.f32.mxu0 0.0
    %3532 = vmatmul.mubr.f32.gmra.mrb[0].mxu0 %v3465
    %v3533 = vpop.f32.mrb[0].mxu0
    %v3534 = vadd.f32 0.0, %v3533
    %v3535 = vpop.f32.mrb[0].mxu0
    %3536 = vdwg.mxu0
    %v3538 = vsel %vm356, %v3455, 0
    %v3541 = vsel %vm356, %v3534, 0
    %3543 = vmatprep.subr.mxu0 0.0
    %3544 = vmatpush1.msra.mxu0 %v2352
    %3545 = vmatprep.subr.mxu0 0.0
    %3546 = vmatpush1.msra.mxu0 0.0
    %3547 = vmatprep.subr.mxu0 0.0
    %3548 = vmatpush1.msra.mxu0 0.0
    %3549 = vmatprep.subr.mxu0 0.0
    %3550 = vmatpush1.msra.mxu0 0.0
    %3551 = vmatprep.subr.mxu0 0.0
    %3552 = vmatpush1.msra.mxu0 0.0
    %3553 = vmatprep.subr.mxu0 0.0
    %3554 = vmatpush1.msra.mxu0 0.0
    %3555 = vmatprep.subr.mxu0 0.0
    %3556 = vmatpush1.msra.mxu0 0.0
    %3557 = vmatprep.subr.mxu0 0.0
    %3558 = vmatpush1.msra.mxu0 0.0
    %3559 = vmatprep.subr.mxu0 0.0
    %3560 = vmatpush1.msra.mxu0 0.0
    %3561 = vmatprep.subr.mxu0 0.0
    %3562 = vmatpush1.msra.mxu0 0.0
    %3563 = vmatprep.subr.mxu0 0.0
    %3564 = vmatpush1.msra.mxu0 0.0
    %3565 = vmatprep.subr.mxu0 0.0
    %3566 = vmatpush1.msra.mxu0 0.0
    %3567 = vmatprep.subr.mxu0 0.0
    %3568 = vmatpush1.msra.mxu0 0.0
    %3569 = vmatprep.subr.mxu0 0.0
    %3570 = vmatpush1.msra.mxu0 0.0
    %3571 = vmatprep.subr.mxu0 0.0
    %3572 = vmatpush1.msra.mxu0 0.0
    %3573 = vmatprep.subr.mxu0 0.0
    %3574 = vmatpush1.msra.mxu0 0.0
    %3575 = vmatprep.subr.mxu0 0.0
    %3576 = vmatpush1.msra.mxu0 0.0
    %3577 = vmatprep.subr.mxu0 0.0
    %3578 = vmatpush1.msra.mxu0 0.0
    %3579 = vmatprep.subr.mxu0 0.0
    %3580 = vmatpush1.msra.mxu0 0.0
    %3581 = vmatprep.subr.mxu0 0.0
    %3582 = vmatpush1.msra.mxu0 0.0
    %3583 = vmatprep.subr.mxu0 0.0
    %3584 = vmatpush1.msra.mxu0 0.0
    %3585 = vmatprep.subr.mxu0 0.0
    %3586 = vmatpush1.msra.mxu0 0.0
    %3587 = vmatprep.subr.mxu0 0.0
    %3588 = vmatpush1.msra.mxu0 0.0
    %3589 = vmatprep.subr.mxu0 0.0
    %3590 = vmatpush1.msra.mxu0 0.0
    %3591 = vmatprep.subr.mxu0 0.0
    %3592 = vmatpush1.msra.mxu0 0.0
    %3593 = vmatprep.subr.mxu0 0.0
    %3594 = vmatpush1.msra.mxu0 0.0
    %3595 = vmatprep.subr.mxu0 0.0
    %3596 = vmatpush1.msra.mxu0 0.0
    %3597 = vmatprep.subr.mxu0 0.0
    %3598 = vmatpush1.msra.mxu0 0.0
    %3599 = vmatprep.subr.mxu0 0.0
    %3600 = vmatpush1.msra.mxu0 0.0
    %3601 = vmatprep.subr.mxu0 0.0
    %3602 = vmatpush1.msra.mxu0 0.0
    %3603 = vmatprep.subr.mxu0 0.0
    %3604 = vmatpush1.msra.mxu0 0.0
    %3605 = vmatprep.subr.mxu0 0.0
    %3606 = vmatpush1.msra.mxu0 0.0
    %3607 = vmatprep.mubr.f32.mxu0 0.0
    %3608 = vmatmul.mubr.f32.gmra.mrb[0].mxu0 %v3538
    %v3609 = vpop.f32.mrb[0].mxu0
    %v3610 = vadd.f32 0.0, %v3609
    %v3611 = vpop.f32.mrb[0].mxu0
    %3612 = vmatprep.mubr.f32.mxu0 0.0
    %3613 = vmatmul.mubr.f32.gmra.mrb[0].mxu0 %v3541
    %v3614 = vpop.f32.mrb[0].mxu0
    %v3615 = vadd.f32 0.0, %v3614
    %v3616 = vpop.f32.mrb[0].mxu0
    %3617 = vdwg.mxu0
    %v3618 = vadd.f32 %v3185, %v3610
    %v3619 = vadd.f32 %v3190, %v3615
    %3620 = vrot.lane.b32.xlu0 %v2354, 104
    %v3621 = vpop.permute.xlu0 %3620
    %3622 = vrot.lane.b32.xlu0 %v2227, 104
    %v3623 = vpop.permute.xlu0 %3622
    %3624 = vrot.lane.b32.xlu0 %v2232, 104
    %v3625 = vpop.permute.xlu0 %3624
    %v3626 = vsel %vm356, %v3621, 0
    %v3628 = vsel %vm356, %v3623, 0
    %v3630 = vsel %vm356, %v3625, 0
    %3632 = vmatprep.subr.mxu0 0.0
    %3633 = vmatpush1.xpose.msra.mxu0 %v3628
    %3634 = vmatprep.subr.mxu0 0.0
    %3635 = vmatpush1.xpose.msra.mxu0 %v3630
    %3636 = vmatprep.subr.mxu0 0.0
    %3637 = vmatpush1.xpose.msra.mxu0 0.0
    %3638 = vmatprep.subr.mxu0 0.0
    %3639 = vmatpush1.xpose.msra.mxu0 0.0
    %3640 = vmatprep.subr.mxu0 0.0
    %3641 = vmatpush1.xpose.msra.mxu0 0.0
    %3642 = vmatprep.subr.mxu0 0.0
    %3643 = vmatpush1.xpose.msra.mxu0 0.0
    %3644 = vmatprep.subr.mxu0 0.0
    %3645 = vmatpush1.xpose.msra.mxu0 0.0
    %3646 = vmatprep.subr.mxu0 0.0
    %3647 = vmatpush1.xpose.msra.mxu0 0.0
    %3648 = vmatprep.subr.mxu0 0.0
    %3649 = vmatpush1.xpose.msra.mxu0 0.0
    %3650 = vmatprep.subr.mxu0 0.0
    %3651 = vmatpush1.xpose.msra.mxu0 0.0
    %3652 = vmatprep.subr.mxu0 0.0
    %3653 = vmatpush1.xpose.msra.mxu0 0.0
    %3654 = vmatprep.subr.mxu0 0.0
    %3655 = vmatpush1.xpose.msra.mxu0 0.0
    %3656 = vmatprep.subr.mxu0 0.0
    %3657 = vmatpush1.xpose.msra.mxu0 0.0
    %3658 = vmatprep.subr.mxu0 0.0
    %3659 = vmatpush1.xpose.msra.mxu0 0.0
    %3660 = vmatprep.subr.mxu0 0.0
    %3661 = vmatpush1.xpose.msra.mxu0 0.0
    %3662 = vmatprep.subr.mxu0 0.0
    %3663 = vmatpush1.xpose.msra.mxu0 0.0
    %3664 = vmatprep.subr.mxu0 0.0
    %3665 = vmatpush1.xpose.msra.mxu0 0.0
    %3666 = vmatprep.subr.mxu0 0.0
    %3667 = vmatpush1.xpose.msra.mxu0 0.0
    %3668 = vmatprep.subr.mxu0 0.0
    %3669 = vmatpush1.xpose.msra.mxu0 0.0
    %3670 = vmatprep.subr.mxu0 0.0
    %3671 = vmatpush1.xpose.msra.mxu0 0.0
    %3672 = vmatprep.subr.mxu0 0.0
    %3673 = vmatpush1.xpose.msra.mxu0 0.0
    %3674 = vmatprep.subr.mxu0 0.0
    %3675 = vmatpush1.xpose.msra.mxu0 0.0
    %3676 = vmatprep.subr.mxu0 0.0
    %3677 = vmatpush1.xpose.msra.mxu0 0.0
    %3678 = vmatprep.subr.mxu0 0.0
    %3679 = vmatpush1.xpose.msra.mxu0 0.0
    %3680 = vmatprep.subr.mxu0 0.0
    %3681 = vmatpush1.xpose.msra.mxu0 0.0
    %3682 = vmatprep.subr.mxu0 0.0
    %3683 = vmatpush1.xpose.msra.mxu0 0.0
    %3684 = vmatprep.subr.mxu0 0.0
    %3685 = vmatpush1.xpose.msra.mxu0 0.0
    %3686 = vmatprep.subr.mxu0 0.0
    %3687 = vmatpush1.xpose.msra.mxu0 0.0
    %3688 = vmatprep.subr.mxu0 0.0
    %3689 = vmatpush1.xpose.msra.mxu0 0.0
    %3690 = vmatprep.subr.mxu0 0.0
    %3691 = vmatpush1.xpose.msra.mxu0 0.0
    %3692 = vmatprep.subr.mxu0 0.0
    %3693 = vmatpush1.xpose.msra.mxu0 0.0
    %3694 = vmatprep.subr.mxu0 0.0
    %3695 = vmatpush1.xpose.msra.mxu0 0.0
    %3696 = vmatprep.mubr.f32.mxu0 0.0
    %3697 = vmatmul.mubr.f32.gmra.mrb[0].mxu0 %v3626
    %v3698 = vpop.f32.mrb[0].mxu0
    %v3699 = vadd.f32 0.0, %v3698
    %v3700 = vpop.f32.mrb[0].mxu0
    %3701 = vdwg.mxu0
    %3702 = vrot.lane.b32.xlu0 %v2355, 104
    %v3703 = vpop.permute.xlu0 %3702
    %3704 = vrot.lane.b32.xlu0 %v2237, 104
    %v3705 = vpop.permute.xlu0 %3704
    %3706 = vrot.lane.b32.xlu0 %v2242, 104
    %v3707 = vpop.permute.xlu0 %3706
    %v3708 = vsel %vm356, %v3703, 0
    %v3710 = vsel %vm356, %v3705, 0
    %v3712 = vsel %vm356, %v3707, 0
    %3714 = vmatprep.subr.mxu0 0.0
    %3715 = vmatpush1.xpose.msra.mxu0 %v3710
    %3716 = vmatprep.subr.mxu0 0.0
    %3717 = vmatpush1.xpose.msra.mxu0 %v3712
    %3718 = vmatprep.subr.mxu0 0.0
    %3719 = vmatpush1.xpose.msra.mxu0 0.0
    %3720 = vmatprep.subr.mxu0 0.0
    %3721 = vmatpush1.xpose.msra.mxu0 0.0
    %3722 = vmatprep.subr.mxu0 0.0
    %3723 = vmatpush1.xpose.msra.mxu0 0.0
    %3724 = vmatprep.subr.mxu0 0.0
    %3725 = vmatpush1.xpose.msra.mxu0 0.0
    %3726 = vmatprep.subr.mxu0 0.0
    %3727 = vmatpush1.xpose.msra.mxu0 0.0
    %3728 = vmatprep.subr.mxu0 0.0
    %3729 = vmatpush1.xpose.msra.mxu0 0.0
    %3730 = vmatprep.subr.mxu0 0.0
    %3731 = vmatpush1.xpose.msra.mxu0 0.0
    %3732 = vmatprep.subr.mxu0 0.0
    %3733 = vmatpush1.xpose.msra.mxu0 0.0
    %3734 = vmatprep.subr.mxu0 0.0
    %3735 = vmatpush1.xpose.msra.mxu0 0.0
    %3736 = vmatprep.subr.mxu0 0.0
    %3737 = vmatpush1.xpose.msra.mxu0 0.0
    %3738 = vmatprep.subr.mxu0 0.0
    %3739 = vmatpush1.xpose.msra.mxu0 0.0
    %3740 = vmatprep.subr.mxu0 0.0
    %3741 = vmatpush1.xpose.msra.mxu0 0.0
    %3742 = vmatprep.subr.mxu0 0.0
    %3743 = vmatpush1.xpose.msra.mxu0 0.0
    %3744 = vmatprep.subr.mxu0 0.0
    %3745 = vmatpush1.xpose.msra.mxu0 0.0
    %3746 = vmatprep.subr.mxu0 0.0
    %3747 = vmatpush1.xpose.msra.mxu0 0.0
    %3748 = vmatprep.subr.mxu0 0.0
    %3749 = vmatpush1.xpose.msra.mxu0 0.0
    %3750 = vmatprep.subr.mxu0 0.0
    %3751 = vmatpush1.xpose.msra.mxu0 0.0
    %3752 = vmatprep.subr.mxu0 0.0
    %3753 = vmatpush1.xpose.msra.mxu0 0.0
    %3754 = vmatprep.subr.mxu0 0.0
    %3755 = vmatpush1.xpose.msra.mxu0 0.0
    %3756 = vmatprep.subr.mxu0 0.0
    %3757 = vmatpush1.xpose.msra.mxu0 0.0
    %3758 = vmatprep.subr.mxu0 0.0
    %3759 = vmatpush1.xpose.msra.mxu0 0.0
    %3760 = vmatprep.subr.mxu0 0.0
    %3761 = vmatpush1.xpose.msra.mxu0 0.0
    %3762 = vmatprep.subr.mxu0 0.0
    %3763 = vmatpush1.xpose.msra.mxu0 0.0
    %3764 = vmatprep.subr.mxu0 0.0
    %3765 = vmatpush1.xpose.msra.mxu0 0.0
    %3766 = vmatprep.subr.mxu0 0.0
    %3767 = vmatpush1.xpose.msra.mxu0 0.0
    %3768 = vmatprep.subr.mxu0 0.0
    %3769 = vmatpush1.xpose.msra.mxu0 0.0
    %3770 = vmatprep.subr.mxu0 0.0
    %3771 = vmatpush1.xpose.msra.mxu0 0.0
    %3772 = vmatprep.subr.mxu0 0.0
    %3773 = vmatpush1.xpose.msra.mxu0 0.0
    %3774 = vmatprep.subr.mxu0 0.0
    %3775 = vmatpush1.xpose.msra.mxu0 0.0
    %3776 = vmatprep.subr.mxu0 0.0
    %3777 = vmatpush1.xpose.msra.mxu0 0.0
    %3778 = vmatprep.mubr.f32.mxu0 0.0
    %3779 = vmatmul.mubr.f32.gmra.mrb[0].mxu0 %v3708
    %v3780 = vpop.f32.mrb[0].mxu0
    %v3781 = vadd.f32 0.0, %v3780
    %v3782 = vpop.f32.mrb[0].mxu0
    %3783 = vdwg.mxu0
    %v3784 = vsel %vm2514, %v3699, -inf
    %3785 = vmax.xlane.f32.xlu0 %v3784
    %v3786 = vpop.xlane.xlu0 %3785
    %v3787 = vsel %vm2514, %v3781, -inf
    %3788 = vmax.xlane.f32.xlu0 %v3787
    %v3789 = vpop.xlane.xlu0 %3788
    %v3790 = vsub.f32 %v3699, %v3786
    %v3791 = vsub.f32 %v3781, %v3789
    %v3792 = vmul.f32 %v3790, 1.442695
    %v3793 = vpow.pop %v3792
    %v3794 = vmul.f32 %v3791, 1.442695
    %v3795 = vpow.pop %v3794
    %v3796 = vsel %vm2514, %v3793, 0.0
    %3797 = vadd.xlane.f32.xlu0 %v3796
    %v3798 = vpop.xlane.xlu0 %3797
    %v3799 = vsel %vm2514, %v3795, 0.0
    %3800 = vadd.xlane.f32.xlu0 %v3799
    %v3801 = vpop.xlane.xlu0 %3800
    %v3802 = vrcp.pop %v3798
    %v3803 = vrcp.pop %v3801
    %v3804 = vmul.f32 %v3793, %v3802
    %v3805 = vmul.f32 %v3795, %v3803
    %3806 = vrot.lane.b32.xlu0 %v2332, 104
    %v3807 = vpop.permute.xlu0 %3806
    %3808 = vrot.lane.b32.xlu0 %v2337, 104
    %v3809 = vpop.permute.xlu0 %3808
    %v3813 = vsel %vm2514, %v3804, 0
    %3815 = vmatprep.subr.mxu0 0.0
    %3816 = vmatpush1.msra.mxu0 %v3807
    %3817 = vmatprep.subr.mxu0 0.0
    %3818 = vmatpush1.msra.mxu0 %v3809
    %3819 = vmatprep.subr.mxu0 0.0
    %3820 = vmatpush1.msra.mxu0 0.0
    %3821 = vmatprep.subr.mxu0 0.0
    %3822 = vmatpush1.msra.mxu0 0.0
    %3823 = vmatprep.subr.mxu0 0.0
    %3824 = vmatpush1.msra.mxu0 0.0
    %3825 = vmatprep.subr.mxu0 0.0
    %3826 = vmatpush1.msra.mxu0 0.0
    %3827 = vmatprep.subr.mxu0 0.0
    %3828 = vmatpush1.msra.mxu0 0.0
    %3829 = vmatprep.subr.mxu0 0.0
    %3830 = vmatpush1.msra.mxu0 0.0
    %3831 = vmatprep.subr.mxu0 0.0
    %3832 = vmatpush1.msra.mxu0 0.0
    %3833 = vmatprep.subr.mxu0 0.0
    %3834 = vmatpush1.msra.mxu0 0.0
    %3835 = vmatprep.subr.mxu0 0.0
    %3836 = vmatpush1.msra.mxu0 0.0
    %3837 = vmatprep.subr.mxu0 0.0
    %3838 = vmatpush1.msra.mxu0 0.0
    %3839 = vmatprep.subr.mxu0 0.0
    %3840 = vmatpush1.msra.mxu0 0.0
    %3841 = vmatprep.subr.mxu0 0.0
    %3842 = vmatpush1.msra.mxu0 0.0
    %3843 = vmatprep.subr.mxu0 0.0
    %3844 = vmatpush1.msra.mxu0 0.0
    %3845 = vmatprep.subr.mxu0 0.0
    %3846 = vmatpush1.msra.mxu0 0.0
    %3847 = vmatprep.subr.mxu0 0.0
    %3848 = vmatpush1.msra.mxu0 0.0
    %3849 = vmatprep.subr.mxu0 0.0
    %3850 = vmatpush1.msra.mxu0 0.0
    %3851 = vmatprep.subr.mxu0 0.0
    %3852 = vmatpush1.msra.mxu0 0.0
    %3853 = vmatprep.subr.mxu0 0.0
    %3854 = vmatpush1.msra.mxu0 0.0
    %3855 = vmatprep.subr.mxu0 0.0
    %3856 = vmatpush1.msra.mxu0 0.0
    %3857 = vmatprep.subr.mxu0 0.0
    %3858 = vmatpush1.msra.mxu0 0.0
    %3859 = vmatprep.subr.mxu0 0.0
    %3860 = vmatpush1.msra.mxu0 0.0
    %3861 = vmatprep.subr.mxu0 0.0
    %3862 = vmatpush1.msra.mxu0 0.0
    %3863 = vmatprep.subr.mxu0 0.0
    %3864 = vmatpush1.msra.mxu0 0.0
    %3865 = vmatprep.subr.mxu0 0.0
    %3866 = vmatpush1.msra.mxu0 0.0
    %3867 = vmatprep.subr.mxu0 0.0
    %3868 = vmatpush1.msra.mxu0 0.0
    %3869 = vmatprep.subr.mxu0 0.0
    %3870 = vmatpush1.msra.mxu0 0.0
    %3871 = vmatprep.subr.mxu0 0.0
    %3872 = vmatpush1.msra.mxu0 0.0
    %3873 = vmatprep.subr.mxu0 0.0
    %3874 = vmatpush1.msra.mxu0 0.0
    %3875 = vmatprep.subr.mxu0 0.0
    %3876 = vmatpush1.msra.mxu0 0.0
    %3877 = vmatprep.subr.mxu0 0.0
    %3878 = vmatpush1.msra.mxu0 0.0
    %3879 = vmatprep.mubr.f32.mxu0 0.0
    %3880 = vmatmul.mubr.f32.gmra.mrb[0].mxu0 %v3813
    %v3881 = vpop.f32.mrb[0].mxu0
    %v3882 = vadd.f32 0.0, %v3881
    %v3883 = vpop.f32.mrb[0].mxu0
    %3884 = vdwg.mxu0
    %3885 = vrot.lane.b32.xlu0 %v2342, 104
    %v3886 = vpop.permute.xlu0 %3885
    %3887 = vrot.lane.b32.xlu0 %v2347, 104
    %v3888 = vpop.permute.xlu0 %3887
    %v3892 = vsel %vm2514, %v3805, 0
    %3894 = vmatprep.subr.mxu0 0.0
    %3895 = vmatpush1.msra.mxu0 %v3886
    %3896 = vmatprep.subr.mxu0 0.0
    %3897 = vmatpush1.msra.mxu0 %v3888
    %3898 = vmatprep.subr.mxu0 0.0
    %3899 = vmatpush1.msra.mxu0 0.0
    %3900 = vmatprep.subr.mxu0 0.0
    %3901 = vmatpush1.msra.mxu0 0.0
    %3902 = vmatprep.subr.mxu0 0.0
    %3903 = vmatpush1.msra.mxu0 0.0
    %3904 = vmatprep.subr.mxu0 0.0
    %3905 = vmatpush1.msra.mxu0 0.0
    %3906 = vmatprep.subr.mxu0 0.0
    %3907 = vmatpush1.msra.mxu0 0.0
    %3908 = vmatprep.subr.mxu0 0.0
    %3909 = vmatpush1.msra.mxu0 0.0
    %3910 = vmatprep.subr.mxu0 0.0
    %3911 = vmatpush1.msra.mxu0 0.0
    %3912 = vmatprep.subr.mxu0 0.0
    %3913 = vmatpush1.msra.mxu0 0.0
    %3914 = vmatprep.subr.mxu0 0.0
    %3915 = vmatpush1.msra.mxu0 0.0
    %3916 = vmatprep.subr.mxu0 0.0
    %3917 = vmatpush1.msra.mxu0 0.0
    %3918 = vmatprep.subr.mxu0 0.0
    %3919 = vmatpush1.msra.mxu0 0.0
    %3920 = vmatprep.subr.mxu0 0.0
    %3921 = vmatpush1.msra.mxu0 0.0
    %3922 = vmatprep.subr.mxu0 0.0
    %3923 = vmatpush1.msra.mxu0 0.0
    %3924 = vmatprep.subr.mxu0 0.0
    %3925 = vmatpush1.msra.mxu0 0.0
    %3926 = vmatprep.subr.mxu0 0.0
    %3927 = vmatpush1.msra.mxu0 0.0
    %3928 = vmatprep.subr.mxu0 0.0
    %3929 = vmatpush1.msra.mxu0 0.0
    %3930 = vmatprep.subr.mxu0 0.0
    %3931 = vmatpush1.msra.mxu0 0.0
    %3932 = vmatprep.subr.mxu0 0.0
    %3933 = vmatpush1.msra.mxu0 0.0
    %3934 = vmatprep.subr.mxu0 0.0
    %3935 = vmatpush1.msra.mxu0 0.0
    %3936 = vmatprep.subr.mxu0 0.0
    %3937 = vmatpush1.msra.mxu0 0.0
    %3938 = vmatprep.subr.mxu0 0.0
    %3939 = vmatpush1.msra.mxu0 0.0
    %3940 = vmatprep.subr.mxu0 0.0
    %3941 = vmatpush1.msra.mxu0 0.0
    %3942 = vmatprep.subr.mxu0 0.0
    %3943 = vmatpush1.msra.mxu0 0.0
    %3944 = vmatprep.subr.mxu0 0.0
    %3945 = vmatpush1.msra.mxu0 0.0
    %3946 = vmatprep.subr.mxu0 0.0
    %3947 = vmatpush1.msra.mxu0 0.0
    %3948 = vmatprep.subr.mxu0 0.0
    %3949 = vmatpush1.msra.mxu0 0.0
    %3950 = vmatprep.subr.mxu0 0.0
    %3951 = vmatpush1.msra.mxu0 0.0
    %3952 = vmatprep.subr.mxu0 0.0
    %3953 = vmatpush1.msra.mxu0 0.0
    %3954 = vmatprep.subr.mxu0 0.0
    %3955 = vmatpush1.msra.mxu0 0.0
    %3956 = vmatprep.subr.mxu0 0.0
    %3957 = vmatpush1.msra.mxu0 0.0
    %3958 = vmatprep.mubr.f32.mxu0 0.0
    %3959 = vmatmul.mubr.f32.gmra.mrb[0].mxu0 %v3892
    %v3960 = vpop.f32.mrb[0].mxu0
    %v3961 = vadd.f32 0.0, %v3960
    %v3962 = vpop.f32.mrb[0].mxu0
    %3963 = vdwg.mxu0
    %v3965 = vsel %vm356, %v3882, 0
    %v3968 = vsel %vm356, %v3961, 0
    %3970 = vmatprep.subr.mxu0 0.0
    %3971 = vmatpush1.msra.mxu0 %v2353
    %3972 = vmatprep.subr.mxu0 0.0
    %3973 = vmatpush1.msra.mxu0 0.0
    %3974 = vmatprep.subr.mxu0 0.0
    %3975 = vmatpush1.msra.mxu0 0.0
    %3976 = vmatprep.subr.mxu0 0.0
    %3977 = vmatpush1.msra.mxu0 0.0
    %3978 = vmatprep.subr.mxu0 0.0
    %3979 = vmatpush1.msra.mxu0 0.0
    %3980 = vmatprep.subr.mxu0 0.0
    %3981 = vmatpush1.msra.mxu0 0.0
    %3982 = vmatprep.subr.mxu0 0.0
    %3983 = vmatpush1.msra.mxu0 0.0
    %3984 = vmatprep.subr.mxu0 0.0
    %3985 = vmatpush1.msra.mxu0 0.0
    %3986 = vmatprep.subr.mxu0 0.0
    %3987 = vmatpush1.msra.mxu0 0.0
    %3988 = vmatprep.subr.mxu0 0.0
    %3989 = vmatpush1.msra.mxu0 0.0
    %3990 = vmatprep.subr.mxu0 0.0
    %3991 = vmatpush1.msra.mxu0 0.0
    %3992 = vmatprep.subr.mxu0 0.0
    %3993 = vmatpush1.msra.mxu0 0.0
    %3994 = vmatprep.subr.mxu0 0.0
    %3995 = vmatpush1.msra.mxu0 0.0
    %3996 = vmatprep.subr.mxu0 0.0
    %3997 = vmatpush1.msra.mxu0 0.0
    %3998 = vmatprep.subr.mxu0 0.0
    %3999 = vmatpush1.msra.mxu0 0.0
    %4000 = vmatprep.subr.mxu0 0.0
    %4001 = vmatpush1.msra.mxu0 0.0
    %4002 = vmatprep.subr.mxu0 0.0
    %4003 = vmatpush1.msra.mxu0 0.0
    %4004 = vmatprep.subr.mxu0 0.0
    %4005 = vmatpush1.msra.mxu0 0.0
    %4006 = vmatprep.subr.mxu0 0.0
    %4007 = vmatpush1.msra.mxu0 0.0
    %4008 = vmatprep.subr.mxu0 0.0
    %4009 = vmatpush1.msra.mxu0 0.0
    %4010 = vmatprep.subr.mxu0 0.0
    %4011 = vmatpush1.msra.mxu0 0.0
    %4012 = vmatprep.subr.mxu0 0.0
    %4013 = vmatpush1.msra.mxu0 0.0
    %4014 = vmatprep.subr.mxu0 0.0
    %4015 = vmatpush1.msra.mxu0 0.0
    %4016 = vmatprep.subr.mxu0 0.0
    %4017 = vmatpush1.msra.mxu0 0.0
    %4018 = vmatprep.subr.mxu0 0.0
    %4019 = vmatpush1.msra.mxu0 0.0
    %4020 = vmatprep.subr.mxu0 0.0
    %4021 = vmatpush1.msra.mxu0 0.0
    %4022 = vmatprep.subr.mxu0 0.0
    %4023 = vmatpush1.msra.mxu0 0.0
    %4024 = vmatprep.subr.mxu0 0.0
    %4025 = vmatpush1.msra.mxu0 0.0
    %4026 = vmatprep.subr.mxu0 0.0
    %4027 = vmatpush1.msra.mxu0 0.0
    %4028 = vmatprep.subr.mxu0 0.0
    %4029 = vmatpush1.msra.mxu0 0.0
    %4030 = vmatprep.subr.mxu0 0.0
    %4031 = vmatpush1.msra.mxu0 0.0
    %4032 = vmatprep.subr.mxu0 0.0
    %4033 = vmatpush1.msra.mxu0 0.0
    %4034 = vmatprep.mubr.f32.mxu0 0.0
    %4035 = vmatmul.mubr.f32.gmra.mrb[0].mxu0 %v3965
    %v4036 = vpop.f32.mrb[0].mxu0
    %v4037 = vadd.f32 0.0, %v4036
    %v4038 = vpop.f32.mrb[0].mxu0
    %4039 = vmatprep.mubr.f32.mxu0 0.0
    %4040 = vmatmul.mubr.f32.gmra.mrb[0].mxu0 %v3968
    %v4041 = vpop.f32.mrb[0].mxu0
    %v4042 = vadd.f32 0.0, %v4041
    %v4043 = vpop.f32.mrb[0].mxu0
    %4044 = vdwg.mxu0
    %v4045 = vadd.f32 %v3618, %v4037
    %v4046 = vadd.f32 %v3619, %v4042
    %v4047 = vlaneseq
    %v4048 = vshrl.u32 %v4047, 7
    %v4049 = vsub.s32 5, %v4048
    %v4050 = vrot.slane %v161, %v4049
    %v4051 = vadd.f32 %v4045, %v4050
    %v4052 = vadd.f32 %v4046, %v4050
    %v4053 = vadd.f32 %v2043, %v4051
    %v4054 = vadd.f32 %v2044, %v4052
    %v4055 = vsel %vm176, %v4053, 0.0
    %4056 = vadd.xlane.f32.xlu0 %v4055
    %v4057 = vpop.xlane.xlu0 %4056
    %v4058 = vsel %vm176, %v4054, 0.0
    %4059 = vadd.xlane.f32.xlu0 %v4058
    %v4060 = vpop.xlane.xlu0 %4059
    %v4061 = vmul.f32 %v4057, %v2012
    %v4062 = vmul.f32 %v4060, %v2012
    %v4063 = vsub.f32 %v4053, %v4061
    %v4064 = vsub.f32 %v4054, %v4062
    %v4065 = vmul.f32 %v4063, %v4063
    %v4066 = vmul.f32 %v4064, %v4064
    %v4067 = vsel %vm176, %v4065, 0.0
    %4068 = vadd.xlane.f32.xlu0 %v4067
    %v4069 = vpop.xlane.xlu0 %4068
    %v4070 = vsel %vm176, %v4066, 0.0
    %4071 = vadd.xlane.f32.xlu0 %v4070
    %v4072 = vpop.xlane.xlu0 %4071
    %v4073 = vmul.f32 %v4069, %v2012
    %v4074 = vmul.f32 %v4072, %v2012
    %v4075 = vadd.f32 %v4073, 1e-05
    %v4076 = vadd.f32 %v4074, 1e-05
    %v4077 = vrsqrt.pop %v4075
    %v4078 = vrsqrt.pop %v4076
    %v4079 = vmul.f32 %v4063, %v4077
    %v4080 = vmul.f32 %v4064, %v4078
    %v4081 = vlaneseq
    %v4082 = vshrl.u32 %v4081, 7
    %v4083 = vsub.s32 1, %v4082
    %v4084 = vrot.slane %v162, %v4083
    %v4085 = vmul.f32 %v4079, %v4084
    %v4086 = vmul.f32 %v4080, %v4084
    %v4087 = vlaneseq
    %v4088 = vshrl.u32 %v4087, 7
    %v4089 = vsub.s32 2, %v4088
    %v4090 = vrot.slane %v162, %v4089
    %v4091 = vadd.f32 %v4085, %v4090
    %v4092 = vadd.f32 %v4086, %v4090
    %v4093 = vld [vmem:[#allocation13] sm:$0xff]
    %v4094 = vld [vmem:[#allocation13 + $0x8] sm:$0xff]
    %v4095 = vld [vmem:[#allocation13 + $0x10] sm:$0xff]
    %v4096 = vld [vmem:[#allocation13 + $0x18] sm:$0xff]
    %v4097 = vld [vmem:[%s14] sm:$0x1]
    %v4099 = vlaneseq
    %v4100 = vshrl.u32 %v4099, 7
    %v4101 = vsub.s32 0, %v4100
    %v4102 = vrot.slane %v4097, %v4101
    %v4105 = vsel %vm176, %v4091, 0
    %v4108 = vsel %vm176, %v4092, 0
    %4110 = vmatprep.subr.mxu0 0.0
    %4111 = vmatpush1.msra.mxu0 %v4093
    %4112 = vmatprep.subr.mxu0 0.0
    %4113 = vmatpush1.msra.mxu0 %v4094
    %4114 = vmatprep.subr.mxu0 0.0
    %4115 = vmatpush1.msra.mxu0 %v4095
    %4116 = vmatprep.subr.mxu0 0.0
    %4117 = vmatpush1.msra.mxu0 %v4096
    %4118 = vmatprep.subr.mxu0 0.0
    %4119 = vmatpush1.msra.mxu0 0.0
    %4120 = vmatprep.subr.mxu0 0.0
    %4121 = vmatpush1.msra.mxu0 0.0
    %4122 = vmatprep.subr.mxu0 0.0
    %4123 = vmatpush1.msra.mxu0 0.0
    %4124 = vmatprep.subr.mxu0 0.0
    %4125 = vmatpush1.msra.mxu0 0.0
    %4126 = vmatprep.subr.mxu0 0.0
    %4127 = vmatpush1.msra.mxu0 0.0
    %4128 = vmatprep.subr.mxu0 0.0
    %4129 = vmatpush1.msra.mxu0 0.0
    %4130 = vmatprep.subr.mxu0 0.0
    %4131 = vmatpush1.msra.mxu0 0.0
    %4132 = vmatprep.subr.mxu0 0.0
    %4133 = vmatpush1.msra.mxu0 0.0
    %4134 = vmatprep.subr.mxu0 0.0
    %4135 = vmatpush1.msra.mxu0 0.0
    %4136 = vmatprep.subr.mxu0 0.0
    %4137 = vmatpush1.msra.mxu0 0.0
    %4138 = vmatprep.subr.mxu0 0.0
    %4139 = vmatpush1.msra.mxu0 0.0
    %4140 = vmatprep.subr.mxu0 0.0
    %4141 = vmatpush1.msra.mxu0 0.0
    %4142 = vmatprep.subr.mxu0 0.0
    %4143 = vmatpush1.msra.mxu0 0.0
    %4144 = vmatprep.subr.mxu0 0.0
    %4145 = vmatpush1.msra.mxu0 0.0
    %4146 = vmatprep.subr.mxu0 0.0
    %4147 = vmatpush1.msra.mxu0 0.0
    %4148 = vmatprep.subr.mxu0 0.0
    %4149 = vmatpush1.msra.mxu0 0.0
    %4150 = vmatprep.subr.mxu0 0.0
    %4151 = vmatpush1.msra.mxu0 0.0
    %4152 = vmatprep.subr.mxu0 0.0
    %4153 = vmatpush1.msra.mxu0 0.0
    %4154 = vmatprep.subr.mxu0 0.0
    %4155 = vmatpush1.msra.mxu0 0.0
    %4156 = vmatprep.subr.mxu0 0.0
    %4157 = vmatpush1.msra.mxu0 0.0
    %4158 = vmatprep.subr.mxu0 0.0
    %4159 = vmatpush1.msra.mxu0 0.0
    %4160 = vmatprep.subr.mxu0 0.0
    %4161 = vmatpush1.msra.mxu0 0.0
    %4162 = vmatprep.subr.mxu0 0.0
    %4163 = vmatpush1.msra.mxu0 0.0
    %4164 = vmatprep.subr.mxu0 0.0
    %4165 = vmatpush1.msra.mxu0 0.0
    %4166 = vmatprep.subr.mxu0 0.0
    %4167 = vmatpush1.msra.mxu0 0.0
    %4168 = vmatprep.subr.mxu0 0.0
    %4169 = vmatpush1.msra.mxu0 0.0
    %4170 = vmatprep.subr.mxu0 0.0
    %4171 = vmatpush1.msra.mxu0 0.0
    %4172 = vmatprep.subr.mxu0 0.0
    %4173 = vmatpush1.msra.mxu0 0.0
    %4174 = vmatprep.mubr.f32.mxu0 0.0
    %4175 = vmatmul.mubr.f32.gmra.mrb[0].mxu0 %v4105
    %v4176 = vpop.f32.mrb[0].mxu0
    %v4177 = vadd.f32 %v4102, %v4176
    %v4178 = vpop.f32.mrb[0].mxu0
    %4179 = vmatprep.mubr.f32.mxu0 0.0
    %4180 = vmatmul.mubr.f32.gmra.mrb[0].mxu0 %v4108
    %v4181 = vpop.f32.mrb[0].mxu0
    %v4182 = vadd.f32 %v4102, %v4181
    %v4183 = vpop.f32.mrb[0].mxu0
    %4184 = vdwg.mxu0
    %v4185 = vmax.f32 %v4177, 0.0
    %v4186 = vmax.f32 %v4182, 0.0
    %v4187 = vld [vmem:[%s12] sm:$0xff]
    %v4188 = vld [vmem:[%s12 + $0x8] sm:$0xff]
    %v4189 = vld [vmem:[%s12 + $0x10] sm:$0xff]
    %v4190 = vld [vmem:[%s12 + $0x18] sm:$0xff]
    %v4191 = vld [vmem:[%s12 + $0x20] sm:$0xff]
    %v4192 = vld [vmem:[%s12 + $0x28] sm:$0xff]
    %v4193 = vld [vmem:[%s12 + $0x30] sm:$0xff]
    %v4194 = vld [vmem:[%s12 + $0x38] sm:$0xff]
    %v4195 = vld [vmem:[%s12 + $0x40] sm:$0xff]
    %v4196 = vld [vmem:[%s12 + $0x48] sm:$0xff]
    %v4197 = vld [vmem:[%s12 + $0x50] sm:$0xff]
    %v4198 = vld [vmem:[%s12 + $0x58] sm:$0xff]
    %v4199 = vld [vmem:[%s12 + $0x60] sm:$0xff]
    %v4200 = vld [vmem:[%s12 + $0x68] sm:$0xff]
    %v4201 = vld [vmem:[%s12 + $0x70] sm:$0xff]
    %v4202 = vld [vmem:[%s12 + $0x78] sm:$0xff]
    %v4203 = vlaneseq
    %v4204 = vshrl.u32 %v4203, 7
    %v4205 = vsub.s32 6, %v4204
    %v4206 = vrot.slane %v161, %v4205
    %4207 = vmatprep.subr.mxu0 0.0
    %4208 = vmatpush1.msra.mxu0 %v4187
    %4209 = vmatprep.subr.mxu0 0.0
    %4210 = vmatpush1.msra.mxu0 %v4188
    %4211 = vmatprep.subr.mxu0 0.0
    %4212 = vmatpush1.msra.mxu0 %v4189
    %4213 = vmatprep.subr.mxu0 0.0
    %4214 = vmatpush1.msra.mxu0 %v4190
    %4215 = vmatprep.subr.mxu0 0.0
    %4216 = vmatpush1.msra.mxu0 %v4191
    %4217 = vmatprep.subr.mxu0 0.0
    %4218 = vmatpush1.msra.mxu0 %v4192
    %4219 = vmatprep.subr.mxu0 0.0
    %4220 = vmatpush1.msra.mxu0 %v4193
    %4221 = vmatprep.subr.mxu0 0.0
    %4222 = vmatpush1.msra.mxu0 %v4194
    %4223 = vmatprep.subr.mxu0 0.0
    %4224 = vmatpush1.msra.mxu0 %v4195
    %4225 = vmatprep.subr.mxu0 0.0
    %4226 = vmatpush1.msra.mxu0 %v4196
    %4227 = vmatprep.subr.mxu0 0.0
    %4228 = vmatpush1.msra.mxu0 %v4197
    %4229 = vmatprep.subr.mxu0 0.0
    %4230 = vmatpush1.msra.mxu0 %v4198
    %4231 = vmatprep.subr.mxu0 0.0
    %4232 = vmatpush1.msra.mxu0 %v4199
    %4233 = vmatprep.subr.mxu0 0.0
    %4234 = vmatpush1.msra.mxu0 %v4200
    %4235 = vmatprep.subr.mxu0 0.0
    %4236 = vmatpush1.msra.mxu0 %v4201
    %4237 = vmatprep.subr.mxu0 0.0
    %4238 = vmatpush1.msra.mxu0 %v4202
    %4239 = vmatprep.subr.mxu0 0.0
    %4240 = vmatpush1.msra.mxu0 0.0
    %4241 = vmatprep.subr.mxu0 0.0
    %4242 = vmatpush1.msra.mxu0 0.0
    %4243 = vmatprep.subr.mxu0 0.0
    %4244 = vmatpush1.msra.mxu0 0.0
    %4245 = vmatprep.subr.mxu0 0.0
    %4246 = vmatpush1.msra.mxu0 0.0
    %4247 = vmatprep.subr.mxu0 0.0
    %4248 = vmatpush1.msra.mxu0 0.0
    %4249 = vmatprep.subr.mxu0 0.0
    %4250 = vmatpush1.msra.mxu0 0.0
    %4251 = vmatprep.subr.mxu0 0.0
    %4252 = vmatpush1.msra.mxu0 0.0
    %4253 = vmatprep.subr.mxu0 0.0
    %4254 = vmatpush1.msra.mxu0 0.0
    %4255 = vmatprep.subr.mxu0 0.0
    %4256 = vmatpush1.msra.mxu0 0.0
    %4257 = vmatprep.subr.mxu0 0.0
    %4258 = vmatpush1.msra.mxu0 0.0
    %4259 = vmatprep.subr.mxu0 0.0
    %4260 = vmatpush1.msra.mxu0 0.0
    %4261 = vmatprep.subr.mxu0 0.0
    %4262 = vmatpush1.msra.mxu0 0.0
    %4263 = vmatprep.subr.mxu0 0.0
    %4264 = vmatpush1.msra.mxu0 0.0
    %4265 = vmatprep.subr.mxu0 0.0
    %4266 = vmatpush1.msra.mxu0 0.0
    %4267 = vmatprep.subr.mxu0 0.0
    %4268 = vmatpush1.msra.mxu0 0.0
    %4269 = vmatprep.subr.mxu0 0.0
    %4270 = vmatpush1.msra.mxu0 0.0
    %4271 = vmatprep.mubr.f32.mxu0 0.0
    %4272 = vmatmul.mubr.f32.gmra.mrb[0].mxu0 %v4185
    %v4273 = vpop.f32.mrb[0].mxu0
    %v4274 = vadd.f32 %v4206, %v4273
    %v4275 = vpop.f32.mrb[0].mxu0
    %4276 = vmatprep.mubr.f32.mxu0 0.0
    %4277 = vmatmul.mubr.f32.gmra.mrb[0].mxu0 %v4186
    %v4278 = vpop.f32.mrb[0].mxu0
    %v4279 = vadd.f32 %v4206, %v4278
    %v4280 = vpop.f32.mrb[0].mxu0
    %4281 = vdwg.mxu0
    %v4282 = vadd.f32 %v4091, %v4274
    %v4283 = vadd.f32 %v4092, %v4279
    %v4284 = vsel %vm176, %v4282, 0.0
    %4285 = vadd.xlane.f32.xlu0 %v4284
    %v4286 = vpop.xlane.xlu0 %4285
    %v4287 = vsel %vm176, %v4283, 0.0
    %4288 = vadd.xlane.f32.xlu0 %v4287
    %v4289 = vpop.xlane.xlu0 %4288
    %v4290 = vmul.f32 %v4286, %v2012
    %v4291 = vmul.f32 %v4289, %v2012
    %v4292 = vsub.f32 %v4282, %v4290
    %v4293 = vsub.f32 %v4283, %v4291
    %v4294 = vmul.f32 %v4292, %v4292
    %v4295 = vmul.f32 %v4293, %v4293
    %v4296 = vsel %vm176, %v4294, 0.0
    %4297 = vadd.xlane.f32.xlu0 %v4296
    %v4298 = vpop.xlane.xlu0 %4297
    %v4299 = vsel %vm176, %v4295, 0.0
    %4300 = vadd.xlane.f32.xlu0 %v4299
    %v4301 = vpop.xlane.xlu0 %4300
    %v4302 = vmul.f32 %v4298, %v2012
    %v4303 = vmul.f32 %v4301, %v2012
    %v4304 = vadd.f32 %v4302, 1e-05
    %v4305 = vadd.f32 %v4303, 1e-05
    %v4306 = vrsqrt.pop %v4304
    %v4307 = vrsqrt.pop %v4305
    %v4308 = vmul.f32 %v4292, %v4306
    %v4309 = vmul.f32 %v4293, %v4307
    %v4310 = vlaneseq
    %v4311 = vshrl.u32 %v4310, 7
    %v4312 = vsub.s32 3, %v4311
    %v4313 = vrot.slane %v162, %v4312
    %v4314 = vmul.f32 %v4308, %v4313
    %v4315 = vmul.f32 %v4309, %v4313
    %v4316 = vlaneseq
    %v4317 = vshrl.u32 %v4316, 7
    %v4318 = vsub.s32 4, %v4317
    %v4319 = vrot.slane %v162, %v4318
    %v4320 = vadd.f32 %v4314, %v4319
    %v4321 = vadd.f32 %v4315, %v4319
    %4322 = vst.msk [vmem:[#allocation14] sm:$0xff] %vm176, %v4320
    %4323 = vst.msk [vmem:[#allocation14 + $0x8] sm:$0xff] %vm176, %v4321
    // Predicated region
    $region94: #{tpu_custom_call.1} parent=1 // pred_check
      _
    $region95: #{tpu_custom_call.1} parent=1 // pred_check_branch
      %4325 = sbr.rel (0) target = $region97
    $region96: #{tpu_custom_call.1} parent=1 // pred_region
      %s4327 = ssub.s32 256, 256
      %4328 = vsyncadd [#allocation4], %s4327
      %s4329 = sshll.u32 [#allocation14], 4
      %s4330 = int_to_ptr.vmem [resolvable:$true] %s4329
      %4335 = dma.vmem_to_hbm [thread:$0]  %s4330, 256, %s16, [#allocation4], 128, 128, 8
    $region97: #{tpu_custom_call.1} parent=1 // pred_fallthru
      _
    // Predicated region
    $region98: #{tpu_custom_call.1} parent=1 // pred_check
      _
    $region99: #{tpu_custom_call.1} parent=1 // pred_check_branch
      %4337 = sbr.rel (0) target = $region101
    $region100: #{tpu_custom_call.1} parent=1 // pred_region
      %4338 = dma.done [#allocation4], 256
    $region101: #{tpu_custom_call.1} parent=1 // pred_fallthru
      _
    %4339 = vsyncpa [#allocation3], 1
    %4340 = vsyncpa [#allocation6], 1
    %4341 = vsyncpa [#allocation9], 1
    %4342 = vsyncpa [#allocation12], 1
    %4343 = vsyncpa [#allocation4], 1

</llo_original>
